<compile_context>
chip_gen: v7x
topology: tpu7x:2x2x1
jax: 0.10.0
libtpu: 0.0.40
codegen_flags: <defaults>
</compile_context>

<pallas_src>
import jax
import jax.numpy as jnp
from jax.experimental import pallas as pl
from jax.experimental.pallas import tpu as pltpu


def _round_up(n, m):
    return ((n + m - 1) // m) * m


def rnn_md_gru_forward(x, params):
    """x: (T, B, I) float32. Returns (out (T, B, O), rnn_activity (T, B, H))."""
    T, B, I = x.shape
    H = params["w_hh"].shape[0]
    O = params["w_fc"].shape[1]

    B_pad = _round_up(B, 8)      # sublane width
    H_pad = _round_up(H, 128)    # lane width
    O_pad = _round_up(O, 128)
    TB = T * B_pad

    w_ih, w_hh = params["w_ih"], params["w_hh"]      # (I, 3H), (H, 3H)
    b_ih, b_hh = params["b_ih"], params["b_hh"]      # (3H,)
    w_fc, b_fc = params["w_fc"], params["b_fc"]      # (H, O), (O,)

    def pad2(a, r, c):
        return jnp.pad(a, ((0, r - a.shape[0]), (0, c - a.shape[1])))

    # Per-gate split (PyTorch GRU packing order [r, z, n]) + lane padding.
    wir = pad2(w_ih[:, 0:H], I, H_pad)
    wiz = pad2(w_ih[:, H:2 * H], I, H_pad)
    win = pad2(w_ih[:, 2 * H:3 * H], I, H_pad)
    whr = pad2(w_hh[:, 0:H], H_pad, H_pad)
    whz = pad2(w_hh[:, H:2 * H], H_pad, H_pad)
    whn = pad2(w_hh[:, 2 * H:3 * H], H_pad, H_pad)

    # r/z biases combined; n keeps b_ih_n in the projection, b_hh_n in-loop.
    br = pad2((b_ih[0:H] + b_hh[0:H]).reshape(1, H), 1, H_pad)
    bz = pad2((b_ih[H:2 * H] + b_hh[H:2 * H]).reshape(1, H), 1, H_pad)
    bn_i = pad2(b_ih[2 * H:3 * H].reshape(1, H), 1, H_pad)
    bn_h = pad2(b_hh[2 * H:3 * H].reshape(1, H), 1, H_pad)

    wfc = pad2(w_fc, H_pad, O_pad)
    bfc = pad2(b_fc.reshape(1, O), 1, O_pad)

    # Fold time into rows and pad batch to 8 sublanes: (T*B_pad, I).
    x_p = jnp.pad(x, ((0, 0), (0, B_pad - B), (0, 0))).reshape(TB, I)

    def kernel(x_ref, wir_ref, wiz_ref, win_ref,
               whr_ref, whz_ref, whn_ref,
               br_ref, bz_ref, bni_ref, bnh_ref,
               wfc_ref, bfc_ref,
               out_ref, act_ref,
               gir_s, giz_s, gin_s):
        # --- one-shot input projection over all (t, b) rows, biases folded ---
        x_all = x_ref[...]
        gir_s[...] = (jnp.dot(x_all, wir_ref[...],
                              preferred_element_type=jnp.float32) + br_ref[...])
        giz_s[...] = (jnp.dot(x_all, wiz_ref[...],
                              preferred_element_type=jnp.float32) + bz_ref[...])
        gin_s[...] = (jnp.dot(x_all, win_ref[...],
                              preferred_element_type=jnp.float32) + bni_ref[...])

        # Hoisted broadcast of the n-gate hidden bias.
        bnh = jnp.broadcast_to(bnh_ref[...], (B_pad, H_pad))

        # --- serial GRU recurrence (only h @ W_hh stays in the loop) ---
        def step(t, h):
            row = pl.multiple_of(t * B_pad, B_pad)
            gh_r = jnp.dot(h, whr_ref[...], preferred_element_type=jnp.float32)
            gh_z = jnp.dot(h, whz_ref[...], preferred_element_type=jnp.float32)
            hn = jnp.dot(h, whn_ref[...], preferred_element_type=jnp.float32) + bnh
            r = jax.nn.sigmoid(gir_s[pl.ds(row, B_pad), :] + gh_r)
            z = jax.nn.sigmoid(giz_s[pl.ds(row, B_pad), :] + gh_z)
            n = jnp.tanh(gin_s[pl.ds(row, B_pad), :] + r * hn)
            h_new = (1.0 - z) * n + z * h
            act_ref[pl.ds(row, B_pad), :] = h_new   # full (8,128) unmasked tile
            return h_new

        h0 = jnp.zeros((B_pad, H_pad), jnp.float32)
        jax.lax.fori_loop(0, T, step, h0, unroll=True)

        # TODO(synk): nn.Dropout(p=0.05) is identity in eval mode; train-mode
        # random masking is not reproduced here.

        # --- one-shot output Linear over all (t, b) rows, single store ---
        out_ref[...] = (jnp.dot(act_ref[...], wfc_ref[...],
                                preferred_element_type=jnp.float32) + bfc_ref[...])

    full2 = lambda i: (0, 0)
    out_p, act_p = pl.pallas_call(
        kernel,
        out_shape=(jax.ShapeDtypeStruct((TB, O_pad), jnp.float32),
                   jax.ShapeDtypeStruct((TB, H_pad), jnp.float32)),
        grid=(1,),
        in_specs=[
            pl.BlockSpec((TB, I), full2),
            pl.BlockSpec((I, H_pad), full2),
            pl.BlockSpec((I, H_pad), full2),
            pl.BlockSpec((I, H_pad), full2),
            pl.BlockSpec((H_pad, H_pad), full2),
            pl.BlockSpec((H_pad, H_pad), full2),
            pl.BlockSpec((H_pad, H_pad), full2),
            pl.BlockSpec((1, H_pad), full2),
            pl.BlockSpec((1, H_pad), full2),
            pl.BlockSpec((1, H_pad), full2),
            pl.BlockSpec((1, H_pad), full2),
            pl.BlockSpec((H_pad, O_pad), full2),
            pl.BlockSpec((1, O_pad), full2),
        ],
        out_specs=(pl.BlockSpec((TB, O_pad), full2),
                   pl.BlockSpec((TB, H_pad), full2)),
        scratch_shapes=[
            pltpu.VMEM((TB, H_pad), jnp.float32),
            pltpu.VMEM((TB, H_pad), jnp.float32),
            pltpu.VMEM((TB, H_pad), jnp.float32),
        ],
        compiler_params=pltpu.CompilerParams(
            dimension_semantics=("arbitrary",)),
    )(x_p, wir, wiz, win, whr, whz, whn, br, bz, bn_i, bn_h, wfc, bfc)

    out = out_p.reshape(T, B_pad, O_pad)[:, :B, :O]
    act = act_p.reshape(T, B_pad, H_pad)[:, :B, :H]
    return out, act


def _reference_forward(x, params):
    """Pure-JAX reference (lax.scan) matching nn.GRU semantics."""
    T, B, I = x.shape
    H = params["w_hh"].shape[0]
    wih_T, whh_T = params["w_ih"], params["w_hh"]
    bih, bhh = params["b_ih"], params["b_hh"]

    def step(h, x_t):
        gi = x_t @ wih_T + bih
        gh = h @ whh_T + bhh
        i_r, i_z, i_n = gi[:, :H], gi[:, H:2 * H], gi[:, 2 * H:]
        h_r, h_z, h_n = gh[:, :H], gh[:, H:2 * H], gh[:, 2 * H:]
        r = jax.nn.sigmoid(i_r + h_r)
        z = jax.nn.sigmoid(i_z + h_z)
        n = jnp.tanh(i_n + r * h_n)
        h_new = (1.0 - z) * n + z * h
        return h_new, h_new

    h0 = jnp.zeros((B, H), jnp.float32)
    _, act = jax.lax.scan(step, h0, x)
    out = act @ params["w_fc"] + params["b_fc"]
    return out, act


def _init_params(key, input_size, hidden_size, output_size):
    """Deterministic init, PyTorch-style uniform(-1/sqrt(H), 1/sqrt(H))."""
    ks = jax.random.split(key, 8)
    kH = 1.0 / jnp.sqrt(hidden_size)
    u = lambda k, shape, s: jax.random.uniform(k, shape, jnp.float32, -s, s)
    return {
        # stored pre-transposed: (I, 3H), (H, 3H), (H, O)
        "w_ih": u(ks[0], (input_size, 3 * hidden_size), kH),
        "w_hh": u(ks[1], (hidden_size, 3 * hidden_size), kH),
        "b_ih": u(ks[2], (3 * hidden_size,), kH),
        "b_hh": u(ks[3], (3 * hidden_size,), kH),
        "w_fc": u(ks[4], (hidden_size, output_size), kH),
        "b_fc": u(ks[5], (output_size,), kH),
    }


if __name__ == "__main__":
    # config: input_size=16, hidden_size=32, output_size=16; seq=8, batch=4
    T, B, I, H, O = 8, 4, 16, 32, 16

    key = jax.random.PRNGKey(0)
    k_x, k_p = jax.random.split(key)
    x = jax.random.normal(k_x, (T, B, I), jnp.float32)
    params = _init_params(k_p, I, H, O)
    # sub_id is unused by the PyTorch forward; omitted.

    out, act = rnn_md_gru_forward(x, params)
    out = jax.block_until_ready(out)
    act = jax.block_until_ready(act)

    ref_out, ref_act = _reference_forward(x, params)
    assert out.shape == (T, B, O) and act.shape == (T, B, H)
    assert jnp.allclose(out, ref_out, rtol=1e-4, atol=1e-4)
    assert jnp.allclose(act, ref_act, rtol=1e-4, atol=1e-4)

    print("KERNEL_OK")
</pallas_src>

<mosaic_0001>
module attributes {stable_mosaic.version = 11 : i64} {
  func.func @kernel(%arg0: i32, %arg1: memref<64x16xf32, #tpu.memory_space<vmem>>, %arg2: memref<16x128xf32, #tpu.memory_space<vmem>>, %arg3: memref<16x128xf32, #tpu.memory_space<vmem>>, %arg4: memref<16x128xf32, #tpu.memory_space<vmem>>, %arg5: memref<128x128xf32, #tpu.memory_space<vmem>>, %arg6: memref<128x128xf32, #tpu.memory_space<vmem>>, %arg7: memref<128x128xf32, #tpu.memory_space<vmem>>, %arg8: memref<1x128xf32, #tpu.memory_space<vmem>>, %arg9: memref<1x128xf32, #tpu.memory_space<vmem>>, %arg10: memref<1x128xf32, #tpu.memory_space<vmem>>, %arg11: memref<1x128xf32, #tpu.memory_space<vmem>>, %arg12: memref<128x128xf32, #tpu.memory_space<vmem>>, %arg13: memref<1x128xf32, #tpu.memory_space<vmem>>, %arg14: memref<64x128xf32, #tpu.memory_space<vmem>>, %arg15: memref<64x128xf32, #tpu.memory_space<vmem>>, %arg16: memref<64x128xf32, #tpu.memory_space<vmem>>, %arg17: memref<64x128xf32, #tpu.memory_space<vmem>>, %arg18: memref<64x128xf32, #tpu.memory_space<vmem>>) attributes {dimension_semantics = [#tpu.dimension_semantics<arbitrary>], iteration_bounds = array<i64: 1>, scalar_prefetch = 0 : i64, scratch_operands = 3 : i64, tpu.core_type = #tpu.core_type<tc>, window_params = [{pipeline_mode = #tpu.pipeline_mode<synchronous>, transform_indices = @transform_0, window_bounds = array<i64: 64, 16>}, {pipeline_mode = #tpu.pipeline_mode<synchronous>, transform_indices = @transform_1, window_bounds = array<i64: 16, 128>}, {pipeline_mode = #tpu.pipeline_mode<synchronous>, transform_indices = @transform_2, window_bounds = array<i64: 16, 128>}, {pipeline_mode = #tpu.pipeline_mode<synchronous>, transform_indices = @transform_3, window_bounds = array<i64: 16, 128>}, {pipeline_mode = #tpu.pipeline_mode<synchronous>, transform_indices = @transform_4, window_bounds = array<i64: 128, 128>}, {pipeline_mode = #tpu.pipeline_mode<synchronous>, transform_indices = @transform_5, window_bounds = array<i64: 128, 128>}, {pipeline_mode = #tpu.pipeline_mode<synchronous>, transform_indices = @transform_6, window_bounds = array<i64: 128, 128>}, {pipeline_mode = #tpu.pipeline_mode<synchronous>, transform_indices = @transform_7, window_bounds = array<i64: 1, 128>}, {pipeline_mode = #tpu.pipeline_mode<synchronous>, transform_indices = @transform_8, window_bounds = array<i64: 1, 128>}, {pipeline_mode = #tpu.pipeline_mode<synchronous>, transform_indices = @transform_9, window_bounds = array<i64: 1, 128>}, {pipeline_mode = #tpu.pipeline_mode<synchronous>, transform_indices = @transform_10, window_bounds = array<i64: 1, 128>}, {pipeline_mode = #tpu.pipeline_mode<synchronous>, transform_indices = @transform_11, window_bounds = array<i64: 128, 128>}, {pipeline_mode = #tpu.pipeline_mode<synchronous>, transform_indices = @transform_12, window_bounds = array<i64: 1, 128>}, {pipeline_mode = #tpu.pipeline_mode<synchronous>, transform_indices = @transform_13, window_bounds = array<i64: 64, 128>}, {pipeline_mode = #tpu.pipeline_mode<synchronous>, transform_indices = @transform_14, window_bounds = array<i64: 64, 128>}]} {
    %c0 = arith.constant 0 : index
    %c0_0 = arith.constant 0 : index
    %0 = vector.load %arg1[%c0, %c0_0] : memref<64x16xf32, #tpu.memory_space<vmem>>, vector<64x16xf32>
    %c0_1 = arith.constant 0 : index
    %c0_2 = arith.constant 0 : index
    %1 = vector.load %arg2[%c0_1, %c0_2] : memref<16x128xf32, #tpu.memory_space<vmem>>, vector<16x128xf32>
    %cst = arith.constant dense<0.000000e+00> : vector<64x128xf32>
    %2 = tpu.matmul %0, %1, %cst {dimension_numbers = #tpu.dot_dimension_numbers<[1], [0], [0], [1], [0, 0, 1, 1], [], []>} : vector<64x16xf32>, vector<16x128xf32>, vector<64x128xf32> -> vector<64x128xf32>
    %c0_3 = arith.constant 0 : index
    %c0_4 = arith.constant 0 : index
    %3 = vector.load %arg8[%c0_3, %c0_4] : memref<1x128xf32, #tpu.memory_space<vmem>>, vector<1x128xf32>
    %4 = vector.broadcast %3 : vector<1x128xf32> to vector<64x128xf32>
    %5 = arith.addf %2, %4 : vector<64x128xf32>
    %c0_5 = arith.constant 0 : index
    %c0_6 = arith.constant 0 : index
    %6 = vector.load %arg16[%c0_5, %c0_6] : memref<64x128xf32, #tpu.memory_space<vmem>>, vector<64x128xf32>
    tpu.vector_store %arg16[%c0_5, %c0_6], %5 {strides = array<i32>} : memref<64x128xf32, #tpu.memory_space<vmem>>, vector<64x128xf32>,
    %c0_7 = arith.constant 0 : index
    %c0_8 = arith.constant 0 : index
    %7 = vector.load %arg3[%c0_7, %c0_8] : memref<16x128xf32, #tpu.memory_space<vmem>>, vector<16x128xf32>
    %cst_9 = arith.constant dense<0.000000e+00> : vector<64x128xf32>
    %8 = tpu.matmul %0, %7, %cst_9 {dimension_numbers = #tpu.dot_dimension_numbers<[1], [0], [0], [1], [0, 0, 1, 1], [], []>} : vector<64x16xf32>, vector<16x128xf32>, vector<64x128xf32> -> vector<64x128xf32>
    %c0_10 = arith.constant 0 : index
    %c0_11 = arith.constant 0 : index
    %9 = vector.load %arg9[%c0_10, %c0_11] : memref<1x128xf32, #tpu.memory_space<vmem>>, vector<1x128xf32>
    %10 = vector.broadcast %9 : vector<1x128xf32> to vector<64x128xf32>
    %11 = arith.addf %8, %10 : vector<64x128xf32>
    %c0_12 = arith.constant 0 : index
    %c0_13 = arith.constant 0 : index
    %12 = vector.load %arg17[%c0_12, %c0_13] : memref<64x128xf32, #tpu.memory_space<vmem>>, vector<64x128xf32>
    tpu.vector_store %arg17[%c0_12, %c0_13], %11 {strides = array<i32>} : memref<64x128xf32, #tpu.memory_space<vmem>>, vector<64x128xf32>,
    %c0_14 = arith.constant 0 : index
    %c0_15 = arith.constant 0 : index
    %13 = vector.load %arg4[%c0_14, %c0_15] : memref<16x128xf32, #tpu.memory_space<vmem>>, vector<16x128xf32>
    %cst_16 = arith.constant dense<0.000000e+00> : vector<64x128xf32>
    %14 = tpu.matmul %0, %13, %cst_16 {dimension_numbers = #tpu.dot_dimension_numbers<[1], [0], [0], [1], [0, 0, 1, 1], [], []>} : vector<64x16xf32>, vector<16x128xf32>, vector<64x128xf32> -> vector<64x128xf32>
    %c0_17 = arith.constant 0 : index
    %c0_18 = arith.constant 0 : index
    %15 = vector.load %arg10[%c0_17, %c0_18] : memref<1x128xf32, #tpu.memory_space<vmem>>, vector<1x128xf32>
    %16 = vector.broadcast %15 : vector<1x128xf32> to vector<64x128xf32>
    %17 = arith.addf %14, %16 : vector<64x128xf32>
    %c0_19 = arith.constant 0 : index
    %c0_20 = arith.constant 0 : index
    %18 = vector.load %arg18[%c0_19, %c0_20] : memref<64x128xf32, #tpu.memory_space<vmem>>, vector<64x128xf32>
    tpu.vector_store %arg18[%c0_19, %c0_20], %17 {strides = array<i32>} : memref<64x128xf32, #tpu.memory_space<vmem>>, vector<64x128xf32>,
    %c0_21 = arith.constant 0 : index
    %c0_22 = arith.constant 0 : index
    %19 = vector.load %arg11[%c0_21, %c0_22] : memref<1x128xf32, #tpu.memory_space<vmem>>, vector<1x128xf32>
    %20 = vector.shape_cast %19 : vector<1x128xf32> to vector<1x128xf32>
    %21 = vector.broadcast %20 : vector<1x128xf32> to vector<8x128xf32>
    %cst_23 = arith.constant 0.000000e+00 : f32
    %22 = vector.broadcast %cst_23 : f32 to vector<8x128xf32>
    %c0_i32 = arith.constant 0 : i32
    %c8_i32 = arith.constant 8 : i32
    %23 = arith.muli %c0_i32, %c8_i32 : i32
    %24 = tpu.assume_multiple %23, 8 : i32
    %c0_24 = arith.constant 0 : index
    %c0_25 = arith.constant 0 : index
    %25 = vector.load %arg5[%c0_24, %c0_25] : memref<128x128xf32, #tpu.memory_space<vmem>>, vector<128x128xf32>
    %cst_26 = arith.constant dense<0.000000e+00> : vector<8x128xf32>
    %26 = tpu.matmul %22, %25, %cst_26 {dimension_numbers = #tpu.dot_dimension_numbers<[1], [0], [0], [1], [0, 0, 1, 1], [], []>} : vector<8x128xf32>, vector<128x128xf32>, vector<8x128xf32> -> vector<8x128xf32>
    %c0_27 = arith.constant 0 : index
    %c0_28 = arith.constant 0 : index
    %27 = vector.load %arg6[%c0_27, %c0_28] : memref<128x128xf32, #tpu.memory_space<vmem>>, vector<128x128xf32>
    %cst_29 = arith.constant dense<0.000000e+00> : vector<8x128xf32>
    %28 = tpu.matmul %22, %27, %cst_29 {dimension_numbers = #tpu.dot_dimension_numbers<[1], [0], [0], [1], [0, 0, 1, 1], [], []>} : vector<8x128xf32>, vector<128x128xf32>, vector<8x128xf32> -> vector<8x128xf32>
    %c0_30 = arith.constant 0 : index
    %c0_31 = arith.constant 0 : index
    %29 = vector.load %arg7[%c0_30, %c0_31] : memref<128x128xf32, #tpu.memory_space<vmem>>, vector<128x128xf32>
    %cst_32 = arith.constant dense<0.000000e+00> : vector<8x128xf32>
    %30 = tpu.matmul %22, %29, %cst_32 {dimension_numbers = #tpu.dot_dimension_numbers<[1], [0], [0], [1], [0, 0, 1, 1], [], []>} : vector<8x128xf32>, vector<128x128xf32>, vector<8x128xf32> -> vector<8x128xf32>
    %31 = arith.addf %30, %21 : vector<8x128xf32>
    %32 = arith.index_cast %24 : i32 to index
    %c0_33 = arith.constant 0 : index
    %33 = vector.load %arg16[%32, %c0_33] : memref<64x128xf32, #tpu.memory_space<vmem>>, vector<8x128xf32>
    %34 = arith.addf %33, %26 : vector<8x128xf32>
    %35 = arith.negf %34 : vector<8x128xf32>
    %36 = math.exp %35 : vector<8x128xf32>
    %cst_34 = arith.constant 1.000000e+00 : f32
    %37 = vector.broadcast %cst_34 : f32 to vector<8x128xf32>
    %38 = arith.addf %37, %36 : vector<8x128xf32>
    %39 = arith.divf %37, %38 : vector<8x128xf32>
    %40 = arith.index_cast %24 : i32 to index
    %c0_35 = arith.constant 0 : index
    %41 = vector.load %arg17[%40, %c0_35] : memref<64x128xf32, #tpu.memory_space<vmem>>, vector<8x128xf32>
    %42 = arith.addf %41, %28 : vector<8x128xf32>
    %43 = arith.negf %42 : vector<8x128xf32>
    %44 = math.exp %43 : vector<8x128xf32>
    %cst_36 = arith.constant 1.000000e+00 : f32
    %45 = vector.broadcast %cst_36 : f32 to vector<8x128xf32>
    %46 = arith.addf %45, %44 : vector<8x128xf32>
    %47 = arith.divf %45, %46 : vector<8x128xf32>
    %48 = arith.index_cast %24 : i32 to index
    %c0_37 = arith.constant 0 : index
    %49 = vector.load %arg18[%48, %c0_37] : memref<64x128xf32, #tpu.memory_space<vmem>>, vector<8x128xf32>
    %50 = arith.mulf %39, %31 : vector<8x128xf32>
    %51 = arith.addf %49, %50 : vector<8x128xf32>
    %52 = math.tanh %51 : vector<8x128xf32>
    %cst_38 = arith.constant 1.000000e+00 : f32
    %53 = vector.broadcast %cst_38 : f32 to vector<8x128xf32>
    %54 = arith.subf %53, %47 : vector<8x128xf32>
    %55 = arith.mulf %54, %52 : vector<8x128xf32>
    %56 = arith.mulf %47, %22 : vector<8x128xf32>
    %57 = arith.addf %55, %56 : vector<8x128xf32>
    %58 = arith.index_cast %24 : i32 to index
    %c0_39 = arith.constant 0 : index
    %59 = vector.load %arg15[%58, %c0_39] : memref<64x128xf32, #tpu.memory_space<vmem>>, vector<8x128xf32>
    tpu.vector_store %arg15[%58, %c0_39], %57 {strides = array<i32>} : memref<64x128xf32, #tpu.memory_space<vmem>>, vector<8x128xf32>,
    %c1_i32 = arith.constant 1 : i32
    %c8_i32_40 = arith.constant 8 : i32
    %60 = arith.muli %c1_i32, %c8_i32_40 : i32
    %61 = tpu.assume_multiple %60, 8 : i32
    %c0_41 = arith.constant 0 : index
    %c0_42 = arith.constant 0 : index
    %62 = vector.load %arg5[%c0_41, %c0_42] : memref<128x128xf32, #tpu.memory_space<vmem>>, vector<128x128xf32>
    %cst_43 = arith.constant dense<0.000000e+00> : vector<8x128xf32>
    %63 = tpu.matmul %57, %62, %cst_43 {dimension_numbers = #tpu.dot_dimension_numbers<[1], [0], [0], [1], [0, 0, 1, 1], [], []>} : vector<8x128xf32>, vector<128x128xf32>, vector<8x128xf32> -> vector<8x128xf32>
    %c0_44 = arith.constant 0 : index
    %c0_45 = arith.constant 0 : index
    %64 = vector.load %arg6[%c0_44, %c0_45] : memref<128x128xf32, #tpu.memory_space<vmem>>, vector<128x128xf32>
    %cst_46 = arith.constant dense<0.000000e+00> : vector<8x128xf32>
    %65 = tpu.matmul %57, %64, %cst_46 {dimension_numbers = #tpu.dot_dimension_numbers<[1], [0], [0], [1], [0, 0, 1, 1], [], []>} : vector<8x128xf32>, vector<128x128xf32>, vector<8x128xf32> -> vector<8x128xf32>
    %c0_47 = arith.constant 0 : index
    %c0_48 = arith.constant 0 : index
    %66 = vector.load %arg7[%c0_47, %c0_48] : memref<128x128xf32, #tpu.memory_space<vmem>>, vector<128x128xf32>
    %cst_49 = arith.constant dense<0.000000e+00> : vector<8x128xf32>
    %67 = tpu.matmul %57, %66, %cst_49 {dimension_numbers = #tpu.dot_dimension_numbers<[1], [0], [0], [1], [0, 0, 1, 1], [], []>} : vector<8x128xf32>, vector<128x128xf32>, vector<8x128xf32> -> vector<8x128xf32>
    %68 = arith.addf %67, %21 : vector<8x128xf32>
    %69 = arith.index_cast %61 : i32 to index
    %c0_50 = arith.constant 0 : index
    %70 = vector.load %arg16[%69, %c0_50] : memref<64x128xf32, #tpu.memory_space<vmem>>, vector<8x128xf32>
    %71 = arith.addf %70, %63 : vector<8x128xf32>
    %72 = arith.negf %71 : vector<8x128xf32>
    %73 = math.exp %72 : vector<8x128xf32>
    %cst_51 = arith.constant 1.000000e+00 : f32
    %74 = vector.broadcast %cst_51 : f32 to vector<8x128xf32>
    %75 = arith.addf %74, %73 : vector<8x128xf32>
    %76 = arith.divf %74, %75 : vector<8x128xf32>
    %77 = arith.index_cast %61 : i32 to index
    %c0_52 = arith.constant 0 : index
    %78 = vector.load %arg17[%77, %c0_52] : memref<64x128xf32, #tpu.memory_space<vmem>>, vector<8x128xf32>
    %79 = arith.addf %78, %65 : vector<8x128xf32>
    %80 = arith.negf %79 : vector<8x128xf32>
    %81 = math.exp %80 : vector<8x128xf32>
    %cst_53 = arith.constant 1.000000e+00 : f32
    %82 = vector.broadcast %cst_53 : f32 to vector<8x128xf32>
    %83 = arith.addf %82, %81 : vector<8x128xf32>
    %84 = arith.divf %82, %83 : vector<8x128xf32>
    %85 = arith.index_cast %61 : i32 to index
    %c0_54 = arith.constant 0 : index
    %86 = vector.load %arg18[%85, %c0_54] : memref<64x128xf32, #tpu.memory_space<vmem>>, vector<8x128xf32>
    %87 = arith.mulf %76, %68 : vector<8x128xf32>
    %88 = arith.addf %86, %87 : vector<8x128xf32>
    %89 = math.tanh %88 : vector<8x128xf32>
    %cst_55 = arith.constant 1.000000e+00 : f32
    %90 = vector.broadcast %cst_55 : f32 to vector<8x128xf32>
    %91 = arith.subf %90, %84 : vector<8x128xf32>
    %92 = arith.mulf %91, %89 : vector<8x128xf32>
    %93 = arith.mulf %84, %57 : vector<8x128xf32>
    %94 = arith.addf %92, %93 : vector<8x128xf32>
    %95 = arith.index_cast %61 : i32 to index
    %c0_56 = arith.constant 0 : index
    %96 = vector.load %arg15[%95, %c0_56] : memref<64x128xf32, #tpu.memory_space<vmem>>, vector<8x128xf32>
    tpu.vector_store %arg15[%95, %c0_56], %94 {strides = array<i32>} : memref<64x128xf32, #tpu.memory_space<vmem>>, vector<8x128xf32>,
    %c2_i32 = arith.constant 2 : i32
    %c8_i32_57 = arith.constant 8 : i32
    %97 = arith.muli %c2_i32, %c8_i32_57 : i32
    %98 = tpu.assume_multiple %97, 8 : i32
    %c0_58 = arith.constant 0 : index
    %c0_59 = arith.constant 0 : index
    %99 = vector.load %arg5[%c0_58, %c0_59] : memref<128x128xf32, #tpu.memory_space<vmem>>, vector<128x128xf32>
    %cst_60 = arith.constant dense<0.000000e+00> : vector<8x128xf32>
    %100 = tpu.matmul %94, %99, %cst_60 {dimension_numbers = #tpu.dot_dimension_numbers<[1], [0], [0], [1], [0, 0, 1, 1], [], []>} : vector<8x128xf32>, vector<128x128xf32>, vector<8x128xf32> -> vector<8x128xf32>
    %c0_61 = arith.constant 0 : index
    %c0_62 = arith.constant 0 : index
    %101 = vector.load %arg6[%c0_61, %c0_62] : memref<128x128xf32, #tpu.memory_space<vmem>>, vector<128x128xf32>
    %cst_63 = arith.constant dense<0.000000e+00> : vector<8x128xf32>
    %102 = tpu.matmul %94, %101, %cst_63 {dimension_numbers = #tpu.dot_dimension_numbers<[1], [0], [0], [1], [0, 0, 1, 1], [], []>} : vector<8x128xf32>, vector<128x128xf32>, vector<8x128xf32> -> vector<8x128xf32>
    %c0_64 = arith.constant 0 : index
    %c0_65 = arith.constant 0 : index
    %103 = vector.load %arg7[%c0_64, %c0_65] : memref<128x128xf32, #tpu.memory_space<vmem>>, vector<128x128xf32>
    %cst_66 = arith.constant dense<0.000000e+00> : vector<8x128xf32>
    %104 = tpu.matmul %94, %103, %cst_66 {dimension_numbers = #tpu.dot_dimension_numbers<[1], [0], [0], [1], [0, 0, 1, 1], [], []>} : vector<8x128xf32>, vector<128x128xf32>, vector<8x128xf32> -> vector<8x128xf32>
    %105 = arith.addf %104, %21 : vector<8x128xf32>
    %106 = arith.index_cast %98 : i32 to index
    %c0_67 = arith.constant 0 : index
    %107 = vector.load %arg16[%106, %c0_67] : memref<64x128xf32, #tpu.memory_space<vmem>>, vector<8x128xf32>
    %108 = arith.addf %107, %100 : vector<8x128xf32>
    %109 = arith.negf %108 : vector<8x128xf32>
    %110 = math.exp %109 : vector<8x128xf32>
    %cst_68 = arith.constant 1.000000e+00 : f32
    %111 = vector.broadcast %cst_68 : f32 to vector<8x128xf32>
    %112 = arith.addf %111, %110 : vector<8x128xf32>
    %113 = arith.divf %111, %112 : vector<8x128xf32>
    %114 = arith.index_cast %98 : i32 to index
    %c0_69 = arith.constant 0 : index
    %115 = vector.load %arg17[%114, %c0_69] : memref<64x128xf32, #tpu.memory_space<vmem>>, vector<8x128xf32>
    %116 = arith.addf %115, %102 : vector<8x128xf32>
    %117 = arith.negf %116 : vector<8x128xf32>
    %118 = math.exp %117 : vector<8x128xf32>
    %cst_70 = arith.constant 1.000000e+00 : f32
    %119 = vector.broadcast %cst_70 : f32 to vector<8x128xf32>
    %120 = arith.addf %119, %118 : vector<8x128xf32>
    %121 = arith.divf %119, %120 : vector<8x128xf32>
    %122 = arith.index_cast %98 : i32 to index
    %c0_71 = arith.constant 0 : index
    %123 = vector.load %arg18[%122, %c0_71] : memref<64x128xf32, #tpu.memory_space<vmem>>, vector<8x128xf32>
    %124 = arith.mulf %113, %105 : vector<8x128xf32>
    %125 = arith.addf %123, %124 : vector<8x128xf32>
    %126 = math.tanh %125 : vector<8x128xf32>
    %cst_72 = arith.constant 1.000000e+00 : f32
    %127 = vector.broadcast %cst_72 : f32 to vector<8x128xf32>
    %128 = arith.subf %127, %121 : vector<8x128xf32>
    %129 = arith.mulf %128, %126 : vector<8x128xf32>
    %130 = arith.mulf %121, %94 : vector<8x128xf32>
    %131 = arith.addf %129, %130 : vector<8x128xf32>
    %132 = arith.index_cast %98 : i32 to index
    %c0_73 = arith.constant 0 : index
    %133 = vector.load %arg15[%132, %c0_73] : memref<64x128xf32, #tpu.memory_space<vmem>>, vector<8x128xf32>
    tpu.vector_store %arg15[%132, %c0_73], %131 {strides = array<i32>} : memref<64x128xf32, #tpu.memory_space<vmem>>, vector<8x128xf32>,
    %c3_i32 = arith.constant 3 : i32
    %c8_i32_74 = arith.constant 8 : i32
    %134 = arith.muli %c3_i32, %c8_i32_74 : i32
    %135 = tpu.assume_multiple %134, 8 : i32
    %c0_75 = arith.constant 0 : index
    %c0_76 = arith.constant 0 : index
    %136 = vector.load %arg5[%c0_75, %c0_76] : memref<128x128xf32, #tpu.memory_space<vmem>>, vector<128x128xf32>
    %cst_77 = arith.constant dense<0.000000e+00> : vector<8x128xf32>
    %137 = tpu.matmul %131, %136, %cst_77 {dimension_numbers = #tpu.dot_dimension_numbers<[1], [0], [0], [1], [0, 0, 1, 1], [], []>} : vector<8x128xf32>, vector<128x128xf32>, vector<8x128xf32> -> vector<8x128xf32>
    %c0_78 = arith.constant 0 : index
    %c0_79 = arith.constant 0 : index
    %138 = vector.load %arg6[%c0_78, %c0_79] : memref<128x128xf32, #tpu.memory_space<vmem>>, vector<128x128xf32>
    %cst_80 = arith.constant dense<0.000000e+00> : vector<8x128xf32>
    %139 = tpu.matmul %131, %138, %cst_80 {dimension_numbers = #tpu.dot_dimension_numbers<[1], [0], [0], [1], [0, 0, 1, 1], [], []>} : vector<8x128xf32>, vector<128x128xf32>, vector<8x128xf32> -> vector<8x128xf32>
    %c0_81 = arith.constant 0 : index
    %c0_82 = arith.constant 0 : index
    %140 = vector.load %arg7[%c0_81, %c0_82] : memref<128x128xf32, #tpu.memory_space<vmem>>, vector<128x128xf32>
    %cst_83 = arith.constant dense<0.000000e+00> : vector<8x128xf32>
    %141 = tpu.matmul %131, %140, %cst_83 {dimension_numbers = #tpu.dot_dimension_numbers<[1], [0], [0], [1], [0, 0, 1, 1], [], []>} : vector<8x128xf32>, vector<128x128xf32>, vector<8x128xf32> -> vector<8x128xf32>
    %142 = arith.addf %141, %21 : vector<8x128xf32>
    %143 = arith.index_cast %135 : i32 to index
    %c0_84 = arith.constant 0 : index
    %144 = vector.load %arg16[%143, %c0_84] : memref<64x128xf32, #tpu.memory_space<vmem>>, vector<8x128xf32>
    %145 = arith.addf %144, %137 : vector<8x128xf32>
    %146 = arith.negf %145 : vector<8x128xf32>
    %147 = math.exp %146 : vector<8x128xf32>
    %cst_85 = arith.constant 1.000000e+00 : f32
    %148 = vector.broadcast %cst_85 : f32 to vector<8x128xf32>
    %149 = arith.addf %148, %147 : vector<8x128xf32>
    %150 = arith.divf %148, %149 : vector<8x128xf32>
    %151 = arith.index_cast %135 : i32 to index
    %c0_86 = arith.constant 0 : index
    %152 = vector.load %arg17[%151, %c0_86] : memref<64x128xf32, #tpu.memory_space<vmem>>, vector<8x128xf32>
    %153 = arith.addf %152, %139 : vector<8x128xf32>
    %154 = arith.negf %153 : vector<8x128xf32>
    %155 = math.exp %154 : vector<8x128xf32>
    %cst_87 = arith.constant 1.000000e+00 : f32
    %156 = vector.broadcast %cst_87 : f32 to vector<8x128xf32>
    %157 = arith.addf %156, %155 : vector<8x128xf32>
    %158 = arith.divf %156, %157 : vector<8x128xf32>
    %159 = arith.index_cast %135 : i32 to index
    %c0_88 = arith.constant 0 : index
    %160 = vector.load %arg18[%159, %c0_88] : memref<64x128xf32, #tpu.memory_space<vmem>>, vector<8x128xf32>
    %161 = arith.mulf %150, %142 : vector<8x128xf32>
    %162 = arith.addf %160, %161 : vector<8x128xf32>
    %163 = math.tanh %162 : vector<8x128xf32>
    %cst_89 = arith.constant 1.000000e+00 : f32
    %164 = vector.broadcast %cst_89 : f32 to vector<8x128xf32>
    %165 = arith.subf %164, %158 : vector<8x128xf32>
    %166 = arith.mulf %165, %163 : vector<8x128xf32>
    %167 = arith.mulf %158, %131 : vector<8x128xf32>
    %168 = arith.addf %166, %167 : vector<8x128xf32>
    %169 = arith.index_cast %135 : i32 to index
    %c0_90 = arith.constant 0 : index
    %170 = vector.load %arg15[%169, %c0_90] : memref<64x128xf32, #tpu.memory_space<vmem>>, vector<8x128xf32>
    tpu.vector_store %arg15[%169, %c0_90], %168 {strides = array<i32>} : memref<64x128xf32, #tpu.memory_space<vmem>>, vector<8x128xf32>,
    %c4_i32 = arith.constant 4 : i32
    %c8_i32_91 = arith.constant 8 : i32
    %171 = arith.muli %c4_i32, %c8_i32_91 : i32
    %172 = tpu.assume_multiple %171, 8 : i32
    %c0_92 = arith.constant 0 : index
    %c0_93 = arith.constant 0 : index
    %173 = vector.load %arg5[%c0_92, %c0_93] : memref<128x128xf32, #tpu.memory_space<vmem>>, vector<128x128xf32>
    %cst_94 = arith.constant dense<0.000000e+00> : vector<8x128xf32>
    %174 = tpu.matmul %168, %173, %cst_94 {dimension_numbers = #tpu.dot_dimension_numbers<[1], [0], [0], [1], [0, 0, 1, 1], [], []>} : vector<8x128xf32>, vector<128x128xf32>, vector<8x128xf32> -> vector<8x128xf32>
    %c0_95 = arith.constant 0 : index
    %c0_96 = arith.constant 0 : index
    %175 = vector.load %arg6[%c0_95, %c0_96] : memref<128x128xf32, #tpu.memory_space<vmem>>, vector<128x128xf32>
    %cst_97 = arith.constant dense<0.000000e+00> : vector<8x128xf32>
    %176 = tpu.matmul %168, %175, %cst_97 {dimension_numbers = #tpu.dot_dimension_numbers<[1], [0], [0], [1], [0, 0, 1, 1], [], []>} : vector<8x128xf32>, vector<128x128xf32>, vector<8x128xf32> -> vector<8x128xf32>
    %c0_98 = arith.constant 0 : index
    %c0_99 = arith.constant 0 : index
    %177 = vector.load %arg7[%c0_98, %c0_99] : memref<128x128xf32, #tpu.memory_space<vmem>>, vector<128x128xf32>
    %cst_100 = arith.constant dense<0.000000e+00> : vector<8x128xf32>
    %178 = tpu.matmul %168, %177, %cst_100 {dimension_numbers = #tpu.dot_dimension_numbers<[1], [0], [0], [1], [0, 0, 1, 1], [], []>} : vector<8x128xf32>, vector<128x128xf32>, vector<8x128xf32> -> vector<8x128xf32>
    %179 = arith.addf %178, %21 : vector<8x128xf32>
    %180 = arith.index_cast %172 : i32 to index
    %c0_101 = arith.constant 0 : index
    %181 = vector.load %arg16[%180, %c0_101] : memref<64x128xf32, #tpu.memory_space<vmem>>, vector<8x128xf32>
    %182 = arith.addf %181, %174 : vector<8x128xf32>
    %183 = arith.negf %182 : vector<8x128xf32>
    %184 = math.exp %183 : vector<8x128xf32>
    %cst_102 = arith.constant 1.000000e+00 : f32
    %185 = vector.broadcast %cst_102 : f32 to vector<8x128xf32>
    %186 = arith.addf %185, %184 : vector<8x128xf32>
    %187 = arith.divf %185, %186 : vector<8x128xf32>
    %188 = arith.index_cast %172 : i32 to index
    %c0_103 = arith.constant 0 : index
    %189 = vector.load %arg17[%188, %c0_103] : memref<64x128xf32, #tpu.memory_space<vmem>>, vector<8x128xf32>
    %190 = arith.addf %189, %176 : vector<8x128xf32>
    %191 = arith.negf %190 : vector<8x128xf32>
    %192 = math.exp %191 : vector<8x128xf32>
    %cst_104 = arith.constant 1.000000e+00 : f32
    %193 = vector.broadcast %cst_104 : f32 to vector<8x128xf32>
    %194 = arith.addf %193, %192 : vector<8x128xf32>
    %195 = arith.divf %193, %194 : vector<8x128xf32>
    %196 = arith.index_cast %172 : i32 to index
    %c0_105 = arith.constant 0 : index
    %197 = vector.load %arg18[%196, %c0_105] : memref<64x128xf32, #tpu.memory_space<vmem>>, vector<8x128xf32>
    %198 = arith.mulf %187, %179 : vector<8x128xf32>
    %199 = arith.addf %197, %198 : vector<8x128xf32>
    %200 = math.tanh %199 : vector<8x128xf32>
    %cst_106 = arith.constant 1.000000e+00 : f32
    %201 = vector.broadcast %cst_106 : f32 to vector<8x128xf32>
    %202 = arith.subf %201, %195 : vector<8x128xf32>
    %203 = arith.mulf %202, %200 : vector<8x128xf32>
    %204 = arith.mulf %195, %168 : vector<8x128xf32>
    %205 = arith.addf %203, %204 : vector<8x128xf32>
    %206 = arith.index_cast %172 : i32 to index
    %c0_107 = arith.constant 0 : index
    %207 = vector.load %arg15[%206, %c0_107] : memref<64x128xf32, #tpu.memory_space<vmem>>, vector<8x128xf32>
    tpu.vector_store %arg15[%206, %c0_107], %205 {strides = array<i32>} : memref<64x128xf32, #tpu.memory_space<vmem>>, vector<8x128xf32>,
    %c5_i32 = arith.constant 5 : i32
    %c8_i32_108 = arith.constant 8 : i32
    %208 = arith.muli %c5_i32, %c8_i32_108 : i32
    %209 = tpu.assume_multiple %208, 8 : i32
    %c0_109 = arith.constant 0 : index
    %c0_110 = arith.constant 0 : index
    %210 = vector.load %arg5[%c0_109, %c0_110] : memref<128x128xf32, #tpu.memory_space<vmem>>, vector<128x128xf32>
    %cst_111 = arith.constant dense<0.000000e+00> : vector<8x128xf32>
    %211 = tpu.matmul %205, %210, %cst_111 {dimension_numbers = #tpu.dot_dimension_numbers<[1], [0], [0], [1], [0, 0, 1, 1], [], []>} : vector<8x128xf32>, vector<128x128xf32>, vector<8x128xf32> -> vector<8x128xf32>
    %c0_112 = arith.constant 0 : index
    %c0_113 = arith.constant 0 : index
    %212 = vector.load %arg6[%c0_112, %c0_113] : memref<128x128xf32, #tpu.memory_space<vmem>>, vector<128x128xf32>
    %cst_114 = arith.constant dense<0.000000e+00> : vector<8x128xf32>
    %213 = tpu.matmul %205, %212, %cst_114 {dimension_numbers = #tpu.dot_dimension_numbers<[1], [0], [0], [1], [0, 0, 1, 1], [], []>} : vector<8x128xf32>, vector<128x128xf32>, vector<8x128xf32> -> vector<8x128xf32>
    %c0_115 = arith.constant 0 : index
    %c0_116 = arith.constant 0 : index
    %214 = vector.load %arg7[%c0_115, %c0_116] : memref<128x128xf32, #tpu.memory_space<vmem>>, vector<128x128xf32>
    %cst_117 = arith.constant dense<0.000000e+00> : vector<8x128xf32>
    %215 = tpu.matmul %205, %214, %cst_117 {dimension_numbers = #tpu.dot_dimension_numbers<[1], [0], [0], [1], [0, 0, 1, 1], [], []>} : vector<8x128xf32>, vector<128x128xf32>, vector<8x128xf32> -> vector<8x128xf32>
    %216 = arith.addf %215, %21 : vector<8x128xf32>
    %217 = arith.index_cast %209 : i32 to index
    %c0_118 = arith.constant 0 : index
    %218 = vector.load %arg16[%217, %c0_118] : memref<64x128xf32, #tpu.memory_space<vmem>>, vector<8x128xf32>
    %219 = arith.addf %218, %211 : vector<8x128xf32>
    %220 = arith.negf %219 : vector<8x128xf32>
    %221 = math.exp %220 : vector<8x128xf32>
    %cst_119 = arith.constant 1.000000e+00 : f32
    %222 = vector.broadcast %cst_119 : f32 to vector<8x128xf32>
    %223 = arith.addf %222, %221 : vector<8x128xf32>
    %224 = arith.divf %222, %223 : vector<8x128xf32>
    %225 = arith.index_cast %209 : i32 to index
    %c0_120 = arith.constant 0 : index
    %226 = vector.load %arg17[%225, %c0_120] : memref<64x128xf32, #tpu.memory_space<vmem>>, vector<8x128xf32>
    %227 = arith.addf %226, %213 : vector<8x128xf32>
    %228 = arith.negf %227 : vector<8x128xf32>
    %229 = math.exp %228 : vector<8x128xf32>
    %cst_121 = arith.constant 1.000000e+00 : f32
    %230 = vector.broadcast %cst_121 : f32 to vector<8x128xf32>
    %231 = arith.addf %230, %229 : vector<8x128xf32>
    %232 = arith.divf %230, %231 : vector<8x128xf32>
    %233 = arith.index_cast %209 : i32 to index
    %c0_122 = arith.constant 0 : index
    %234 = vector.load %arg18[%233, %c0_122] : memref<64x128xf32, #tpu.memory_space<vmem>>, vector<8x128xf32>
    %235 = arith.mulf %224, %216 : vector<8x128xf32>
    %236 = arith.addf %234, %235 : vector<8x128xf32>
    %237 = math.tanh %236 : vector<8x128xf32>
    %cst_123 = arith.constant 1.000000e+00 : f32
    %238 = vector.broadcast %cst_123 : f32 to vector<8x128xf32>
    %239 = arith.subf %238, %232 : vector<8x128xf32>
    %240 = arith.mulf %239, %237 : vector<8x128xf32>
    %241 = arith.mulf %232, %205 : vector<8x128xf32>
    %242 = arith.addf %240, %241 : vector<8x128xf32>
    %243 = arith.index_cast %209 : i32 to index
    %c0_124 = arith.constant 0 : index
    %244 = vector.load %arg15[%243, %c0_124] : memref<64x128xf32, #tpu.memory_space<vmem>>, vector<8x128xf32>
    tpu.vector_store %arg15[%243, %c0_124], %242 {strides = array<i32>} : memref<64x128xf32, #tpu.memory_space<vmem>>, vector<8x128xf32>,
    %c6_i32 = arith.constant 6 : i32
    %c8_i32_125 = arith.constant 8 : i32
    %245 = arith.muli %c6_i32, %c8_i32_125 : i32
    %246 = tpu.assume_multiple %245, 8 : i32
    %c0_126 = arith.constant 0 : index
    %c0_127 = arith.constant 0 : index
    %247 = vector.load %arg5[%c0_126, %c0_127] : memref<128x128xf32, #tpu.memory_space<vmem>>, vector<128x128xf32>
    %cst_128 = arith.constant dense<0.000000e+00> : vector<8x128xf32>
    %248 = tpu.matmul %242, %247, %cst_128 {dimension_numbers = #tpu.dot_dimension_numbers<[1], [0], [0], [1], [0, 0, 1, 1], [], []>} : vector<8x128xf32>, vector<128x128xf32>, vector<8x128xf32> -> vector<8x128xf32>
    %c0_129 = arith.constant 0 : index
    %c0_130 = arith.constant 0 : index
    %249 = vector.load %arg6[%c0_129, %c0_130] : memref<128x128xf32, #tpu.memory_space<vmem>>, vector<128x128xf32>
    %cst_131 = arith.constant dense<0.000000e+00> : vector<8x128xf32>
    %250 = tpu.matmul %242, %249, %cst_131 {dimension_numbers = #tpu.dot_dimension_numbers<[1], [0], [0], [1], [0, 0, 1, 1], [], []>} : vector<8x128xf32>, vector<128x128xf32>, vector<8x128xf32> -> vector<8x128xf32>
    %c0_132 = arith.constant 0 : index
    %c0_133 = arith.constant 0 : index
    %251 = vector.load %arg7[%c0_132, %c0_133] : memref<128x128xf32, #tpu.memory_space<vmem>>, vector<128x128xf32>
    %cst_134 = arith.constant dense<0.000000e+00> : vector<8x128xf32>
    %252 = tpu.matmul %242, %251, %cst_134 {dimension_numbers = #tpu.dot_dimension_numbers<[1], [0], [0], [1], [0, 0, 1, 1], [], []>} : vector<8x128xf32>, vector<128x128xf32>, vector<8x128xf32> -> vector<8x128xf32>
    %253 = arith.addf %252, %21 : vector<8x128xf32>
    %254 = arith.index_cast %246 : i32 to index
    %c0_135 = arith.constant 0 : index
    %255 = vector.load %arg16[%254, %c0_135] : memref<64x128xf32, #tpu.memory_space<vmem>>, vector<8x128xf32>
    %256 = arith.addf %255, %248 : vector<8x128xf32>
    %257 = arith.negf %256 : vector<8x128xf32>
    %258 = math.exp %257 : vector<8x128xf32>
    %cst_136 = arith.constant 1.000000e+00 : f32
    %259 = vector.broadcast %cst_136 : f32 to vector<8x128xf32>
    %260 = arith.addf %259, %258 : vector<8x128xf32>
    %261 = arith.divf %259, %260 : vector<8x128xf32>
    %262 = arith.index_cast %246 : i32 to index
    %c0_137 = arith.constant 0 : index
    %263 = vector.load %arg17[%262, %c0_137] : memref<64x128xf32, #tpu.memory_space<vmem>>, vector<8x128xf32>
    %264 = arith.addf %263, %250 : vector<8x128xf32>
    %265 = arith.negf %264 : vector<8x128xf32>
    %266 = math.exp %265 : vector<8x128xf32>
    %cst_138 = arith.constant 1.000000e+00 : f32
    %267 = vector.broadcast %cst_138 : f32 to vector<8x128xf32>
    %268 = arith.addf %267, %266 : vector<8x128xf32>
    %269 = arith.divf %267, %268 : vector<8x128xf32>
    %270 = arith.index_cast %246 : i32 to index
    %c0_139 = arith.constant 0 : index
    %271 = vector.load %arg18[%270, %c0_139] : memref<64x128xf32, #tpu.memory_space<vmem>>, vector<8x128xf32>
    %272 = arith.mulf %261, %253 : vector<8x128xf32>
    %273 = arith.addf %271, %272 : vector<8x128xf32>
    %274 = math.tanh %273 : vector<8x128xf32>
    %cst_140 = arith.constant 1.000000e+00 : f32
    %275 = vector.broadcast %cst_140 : f32 to vector<8x128xf32>
    %276 = arith.subf %275, %269 : vector<8x128xf32>
    %277 = arith.mulf %276, %274 : vector<8x128xf32>
    %278 = arith.mulf %269, %242 : vector<8x128xf32>
    %279 = arith.addf %277, %278 : vector<8x128xf32>
    %280 = arith.index_cast %246 : i32 to index
    %c0_141 = arith.constant 0 : index
    %281 = vector.load %arg15[%280, %c0_141] : memref<64x128xf32, #tpu.memory_space<vmem>>, vector<8x128xf32>
    tpu.vector_store %arg15[%280, %c0_141], %279 {strides = array<i32>} : memref<64x128xf32, #tpu.memory_space<vmem>>, vector<8x128xf32>,
    %c7_i32 = arith.constant 7 : i32
    %c8_i32_142 = arith.constant 8 : i32
    %282 = arith.muli %c7_i32, %c8_i32_142 : i32
    %283 = tpu.assume_multiple %282, 8 : i32
    %c0_143 = arith.constant 0 : index
    %c0_144 = arith.constant 0 : index
    %284 = vector.load %arg5[%c0_143, %c0_144] : memref<128x128xf32, #tpu.memory_space<vmem>>, vector<128x128xf32>
    %cst_145 = arith.constant dense<0.000000e+00> : vector<8x128xf32>
    %285 = tpu.matmul %279, %284, %cst_145 {dimension_numbers = #tpu.dot_dimension_numbers<[1], [0], [0], [1], [0, 0, 1, 1], [], []>} : vector<8x128xf32>, vector<128x128xf32>, vector<8x128xf32> -> vector<8x128xf32>
    %c0_146 = arith.constant 0 : index
    %c0_147 = arith.constant 0 : index
    %286 = vector.load %arg6[%c0_146, %c0_147] : memref<128x128xf32, #tpu.memory_space<vmem>>, vector<128x128xf32>
    %cst_148 = arith.constant dense<0.000000e+00> : vector<8x128xf32>
    %287 = tpu.matmul %279, %286, %cst_148 {dimension_numbers = #tpu.dot_dimension_numbers<[1], [0], [0], [1], [0, 0, 1, 1], [], []>} : vector<8x128xf32>, vector<128x128xf32>, vector<8x128xf32> -> vector<8x128xf32>
    %c0_149 = arith.constant 0 : index
    %c0_150 = arith.constant 0 : index
    %288 = vector.load %arg7[%c0_149, %c0_150] : memref<128x128xf32, #tpu.memory_space<vmem>>, vector<128x128xf32>
    %cst_151 = arith.constant dense<0.000000e+00> : vector<8x128xf32>
    %289 = tpu.matmul %279, %288, %cst_151 {dimension_numbers = #tpu.dot_dimension_numbers<[1], [0], [0], [1], [0, 0, 1, 1], [], []>} : vector<8x128xf32>, vector<128x128xf32>, vector<8x128xf32> -> vector<8x128xf32>
    %290 = arith.addf %289, %21 : vector<8x128xf32>
    %291 = arith.index_cast %283 : i32 to index
    %c0_152 = arith.constant 0 : index
    %292 = vector.load %arg16[%291, %c0_152] : memref<64x128xf32, #tpu.memory_space<vmem>>, vector<8x128xf32>
    %293 = arith.addf %292, %285 : vector<8x128xf32>
    %294 = arith.negf %293 : vector<8x128xf32>
    %295 = math.exp %294 : vector<8x128xf32>
    %cst_153 = arith.constant 1.000000e+00 : f32
    %296 = vector.broadcast %cst_153 : f32 to vector<8x128xf32>
    %297 = arith.addf %296, %295 : vector<8x128xf32>
    %298 = arith.divf %296, %297 : vector<8x128xf32>
    %299 = arith.index_cast %283 : i32 to index
    %c0_154 = arith.constant 0 : index
    %300 = vector.load %arg17[%299, %c0_154] : memref<64x128xf32, #tpu.memory_space<vmem>>, vector<8x128xf32>
    %301 = arith.addf %300, %287 : vector<8x128xf32>
    %302 = arith.negf %301 : vector<8x128xf32>
    %303 = math.exp %302 : vector<8x128xf32>
    %cst_155 = arith.constant 1.000000e+00 : f32
    %304 = vector.broadcast %cst_155 : f32 to vector<8x128xf32>
    %305 = arith.addf %304, %303 : vector<8x128xf32>
    %306 = arith.divf %304, %305 : vector<8x128xf32>
    %307 = arith.index_cast %283 : i32 to index
    %c0_156 = arith.constant 0 : index
    %308 = vector.load %arg18[%307, %c0_156] : memref<64x128xf32, #tpu.memory_space<vmem>>, vector<8x128xf32>
    %309 = arith.mulf %298, %290 : vector<8x128xf32>
    %310 = arith.addf %308, %309 : vector<8x128xf32>
    %311 = math.tanh %310 : vector<8x128xf32>
    %cst_157 = arith.constant 1.000000e+00 : f32
    %312 = vector.broadcast %cst_157 : f32 to vector<8x128xf32>
    %313 = arith.subf %312, %306 : vector<8x128xf32>
    %314 = arith.mulf %313, %311 : vector<8x128xf32>
    %315 = arith.mulf %306, %279 : vector<8x128xf32>
    %316 = arith.addf %314, %315 : vector<8x128xf32>
    %317 = arith.index_cast %283 : i32 to index
    %c0_158 = arith.constant 0 : index
    %318 = vector.load %arg15[%317, %c0_158] : memref<64x128xf32, #tpu.memory_space<vmem>>, vector<8x128xf32>
    tpu.vector_store %arg15[%317, %c0_158], %316 {strides = array<i32>} : memref<64x128xf32, #tpu.memory_space<vmem>>, vector<8x128xf32>,
    %c8_i32_159 = arith.constant 8 : i32
    %c0_160 = arith.constant 0 : index
    %c0_161 = arith.constant 0 : index
    %319 = vector.load %arg15[%c0_160, %c0_161] : memref<64x128xf32, #tpu.memory_space<vmem>>, vector<64x128xf32>
    %c0_162 = arith.constant 0 : index
    %c0_163 = arith.constant 0 : index
    %320 = vector.load %arg12[%c0_162, %c0_163] : memref<128x128xf32, #tpu.memory_space<vmem>>, vector<128x128xf32>
    %cst_164 = arith.constant dense<0.000000e+00> : vector<64x128xf32>
    %321 = tpu.matmul %319, %320, %cst_164 {dimension_numbers = #tpu.dot_dimension_numbers<[1], [0], [0], [1], [0, 0, 1, 1], [], []>} : vector<64x128xf32>, vector<128x128xf32>, vector<64x128xf32> -> vector<64x128xf32>
    %c0_165 = arith.constant 0 : index
    %c0_166 = arith.constant 0 : index
    %322 = vector.load %arg13[%c0_165, %c0_166] : memref<1x128xf32, #tpu.memory_space<vmem>>, vector<1x128xf32>
    %323 = vector.broadcast %322 : vector<1x128xf32> to vector<64x128xf32>
    %324 = arith.addf %321, %323 : vector<64x128xf32>
    %c0_167 = arith.constant 0 : index
    %c0_168 = arith.constant 0 : index
    %325 = vector.load %arg14[%c0_167, %c0_168] : memref<64x128xf32, #tpu.memory_space<vmem>>, vector<64x128xf32>
    tpu.vector_store %arg14[%c0_167, %c0_168], %324 {strides = array<i32>} : memref<64x128xf32, #tpu.memory_space<vmem>>, vector<64x128xf32>,
    return
  }
  func.func @transform_0(%arg0: i32) -> (i32, i32) {
    %c0_i32 = arith.constant 0 : i32
    %c0_i32_0 = arith.constant 0 : i32
    %c0_i32_1 = arith.constant 0 : i32
    return %c0_i32, %c0_i32_0 : i32, i32
  }
  func.func @transform_1(%arg0: i32) -> (i32, i32) {
    %c0_i32 = arith.constant 0 : i32
    %c0_i32_0 = arith.constant 0 : i32
    %c0_i32_1 = arith.constant 0 : i32
    return %c0_i32, %c0_i32_0 : i32, i32
  }
  func.func @transform_2(%arg0: i32) -> (i32, i32) {
    %c0_i32 = arith.constant 0 : i32
    %c0_i32_0 = arith.constant 0 : i32
    %c0_i32_1 = arith.constant 0 : i32
    return %c0_i32, %c0_i32_0 : i32, i32
  }
  func.func @transform_3(%arg0: i32) -> (i32, i32) {
    %c0_i32 = arith.constant 0 : i32
    %c0_i32_0 = arith.constant 0 : i32
    %c0_i32_1 = arith.constant 0 : i32
    return %c0_i32, %c0_i32_0 : i32, i32
  }
  func.func @transform_4(%arg0: i32) -> (i32, i32) {
    %c0_i32 = arith.constant 0 : i32
    %c0_i32_0 = arith.constant 0 : i32
    %c0_i32_1 = arith.constant 0 : i32
    return %c0_i32, %c0_i32_0 : i32, i32
  }
  func.func @transform_5(%arg0: i32) -> (i32, i32) {
    %c0_i32 = arith.constant 0 : i32
    %c0_i32_0 = arith.constant 0 : i32
    %c0_i32_1 = arith.constant 0 : i32
    return %c0_i32, %c0_i32_0 : i32, i32
  }
  func.func @transform_6(%arg0: i32) -> (i32, i32) {
    %c0_i32 = arith.constant 0 : i32
    %c0_i32_0 = arith.constant 0 : i32
    %c0_i32_1 = arith.constant 0 : i32
    return %c0_i32, %c0_i32_0 : i32, i32
  }
  func.func @transform_7(%arg0: i32) -> (i32, i32) {
    %c0_i32 = arith.constant 0 : i32
    %c0_i32_0 = arith.constant 0 : i32
    %c0_i32_1 = arith.constant 0 : i32
    return %c0_i32, %c0_i32_0 : i32, i32
  }
  func.func @transform_8(%arg0: i32) -> (i32, i32) {
    %c0_i32 = arith.constant 0 : i32
    %c0_i32_0 = arith.constant 0 : i32
    %c0_i32_1 = arith.constant 0 : i32
    return %c0_i32, %c0_i32_0 : i32, i32
  }
  func.func @transform_9(%arg0: i32) -> (i32, i32) {
    %c0_i32 = arith.constant 0 : i32
    %c0_i32_0 = arith.constant 0 : i32
    %c0_i32_1 = arith.constant 0 : i32
    return %c0_i32, %c0_i32_0 : i32, i32
  }
  func.func @transform_10(%arg0: i32) -> (i32, i32) {
    %c0_i32 = arith.constant 0 : i32
    %c0_i32_0 = arith.constant 0 : i32
    %c0_i32_1 = arith.constant 0 : i32
    return %c0_i32, %c0_i32_0 : i32, i32
  }
  func.func @transform_11(%arg0: i32) -> (i32, i32) {
    %c0_i32 = arith.constant 0 : i32
    %c0_i32_0 = arith.constant 0 : i32
    %c0_i32_1 = arith.constant 0 : i32
    return %c0_i32, %c0_i32_0 : i32, i32
  }
  func.func @transform_12(%arg0: i32) -> (i32, i32) {
    %c0_i32 = arith.constant 0 : i32
    %c0_i32_0 = arith.constant 0 : i32
    %c0_i32_1 = arith.constant 0 : i32
    return %c0_i32, %c0_i32_0 : i32, i32
  }
  func.func @transform_13(%arg0: i32) -> (i32, i32) {
    %c0_i32 = arith.constant 0 : i32
    %c0_i32_0 = arith.constant 0 : i32
    %c0_i32_1 = arith.constant 0 : i32
    return %c0_i32, %c0_i32_0 : i32, i32
  }
  func.func @transform_14(%arg0: i32) -> (i32, i32) {
    %c0_i32 = arith.constant 0 : i32
    %c0_i32_0 = arith.constant 0 : i32
    %c0_i32_1 = arith.constant 0 : i32
    return %c0_i32, %c0_i32_0 : i32, i32
  }
}

</mosaic_0001>

<llo_original>
// kernel: tpu_custom_call.1
$region0: #{tpu_custom_call.1}
  #allocation0 [shape = 'u32[]', space=smem, size = 0x4, offset = 0x4, fixed_abs, tag = 'smem constant byte address 0x4 - core index']
  #allocation1 [shape = 'u32[144,128]{1,0:T(1,128)}', space=vmem, size = 0x12000, scoped, tag = 'internal scratch']
  #allocation2 [shape = 'f32[64,128]{1,0:T(8,128)}', space=vmem, size = 0x8000, scoped, tag = 'scratch operand']
  #allocation3 [shape = 'f32[64,128]{1,0:T(8,128)}', space=vmem, size = 0x8000, scoped, tag = 'scratch operand']
  #allocation4 [shape = 'f32[64,128]{1,0:T(8,128)}', space=vmem, size = 0x8000, scoped, tag = 'scratch operand']
  %s0 = inlined_call_operand.vmem [shape: f32[64,16], index: 0, kind: input, shape index: {}]
  %s1 = inlined_call_operand.vmem [shape: f32[16,128], index: 1, kind: input, shape index: {}]
  %s2 = inlined_call_operand.vmem [shape: f32[16,128], index: 2, kind: input, shape index: {}]
  %s3 = inlined_call_operand.vmem [shape: f32[16,128], index: 3, kind: input, shape index: {}]
  %s4 = inlined_call_operand.hbm [shape: f32[128,128], index: 4, kind: input, shape index: {}]
  %s5 = inlined_call_operand.hbm [shape: f32[128,128], index: 5, kind: input, shape index: {}]
  %s6 = inlined_call_operand.hbm [shape: f32[128,128], index: 6, kind: input, shape index: {}]
  %s7 = inlined_call_operand.vmem [shape: f32[1,128], index: 7, kind: input, shape index: {}]
  %s8 = inlined_call_operand.vmem [shape: f32[1,128], index: 8, kind: input, shape index: {}]
  %s9 = inlined_call_operand.vmem [shape: f32[1,128], index: 9, kind: input, shape index: {}]
  %s10 = inlined_call_operand.vmem [shape: f32[1,128], index: 10, kind: input, shape index: {}]
  %s11 = inlined_call_operand.hbm [shape: f32[128,128], index: 11, kind: input, shape index: {}]
  %s12 = inlined_call_operand.vmem [shape: f32[1,128], index: 12, kind: input, shape index: {}]
  %s13 = inlined_call_operand.hbm [shape: f32[64,128], index: 13, kind: output, shape index: {0}]
  %s14 = inlined_call_operand.hbm [shape: f32[64,128], index: 14, kind: output, shape index: {1}]
  %15 = xla_tuple %s13, %s14
  %s16 = sld [smem:[#allocation0]]
  $region86: #{tpu_custom_call.1} parent=0
    _
  %s18 = ssub.s32 1, %s16
  %s19 = scalar_select 0, %s18, %s16
  $region1: #{tpu_custom_call.1} parent=0
    #allocation5 [shape = 'u8[65536]{0}', space=vmem, size = 0x10000, scoped, tag = 'input window, operand 4, single buffered']
    #allocation6 [shape = 's32[1]{0}', space=sflag, size = 0x4, scoped, tag = 'scoped memory for tpu_custom_call.1']
    #allocation7 [shape = 's32[1]{0}', space=sflag, size = 0x4, scoped, tag = 'scoped memory for tpu_custom_call.1']
    #allocation8 [shape = 'u8[65536]{0}', space=vmem, size = 0x10000, scoped, tag = 'input window, operand 5, single buffered']
    #allocation9 [shape = 's32[1]{0}', space=sflag, size = 0x4, scoped, tag = 'scoped memory for tpu_custom_call.1']
    #allocation10 [shape = 'u8[65536]{0}', space=vmem, size = 0x10000, scoped, tag = 'input window, operand 6, single buffered']
    #allocation11 [shape = 'u8[65536]{0}', space=vmem, size = 0x10000, scoped, tag = 'input window, operand 11, single buffered']
    #allocation12 [shape = 's32[1]{0}', space=sflag, size = 0x4, scoped, tag = 'scoped memory for tpu_custom_call.1']
    #allocation13 [shape = 'u8[32768]{0}', space=vmem, size = 0x8000, scoped, tag = 'output window, operand 0, single buffered']
    #allocation14 [shape = 'u8[32768]{0}', space=vmem, size = 0x8000, scoped, tag = 'output window, operand 1, single buffered']
    #allocation15 [shape = 's32[1]{0}', space=sflag, size = 0x4, scoped, tag = 'scoped memory for tpu_custom_call.1']
    %20 = vsyncpa [#allocation6], 0
    %21 = vsyncpa [#allocation9], 0
    %22 = vsyncpa [#allocation12], 0
    %23 = vsyncpa [#allocation7], 0
    %24 = vsyncpa [#allocation15], 0
    // Predicated region
    $region2: #{tpu_custom_call.1} parent=1 // pred_check
      _
    $region3: #{tpu_custom_call.1} parent=1 // pred_check_branch
      %26 = sbr.rel (0) target = $region5
    $region4: #{tpu_custom_call.1} parent=1 // pred_region
      _
    $region5: #{tpu_custom_call.1} parent=1 // pred_fallthru
      _
    // Predicated region
    $region6: #{tpu_custom_call.1} parent=1 // pred_check
      _
    $region7: #{tpu_custom_call.1} parent=1 // pred_check_branch
      %28 = sbr.rel (0) target = $region9
    $region8: #{tpu_custom_call.1} parent=1 // pred_region
      _
    $region9: #{tpu_custom_call.1} parent=1 // pred_fallthru
      _
    // Predicated region
    $region10: #{tpu_custom_call.1} parent=1 // pred_check
      _
    $region11: #{tpu_custom_call.1} parent=1 // pred_check_branch
      %30 = sbr.rel (0) target = $region13
    $region12: #{tpu_custom_call.1} parent=1 // pred_region
      _
    $region13: #{tpu_custom_call.1} parent=1 // pred_fallthru
      _
    // Predicated region
    $region14: #{tpu_custom_call.1} parent=1 // pred_check
      _
    $region15: #{tpu_custom_call.1} parent=1 // pred_check_branch
      %32 = sbr.rel (0) target = $region17
    $region16: #{tpu_custom_call.1} parent=1 // pred_region
      _
    $region17: #{tpu_custom_call.1} parent=1 // pred_fallthru
      _
    // Predicated region
    $region18: #{tpu_custom_call.1} parent=1 // pred_check
      _
    $region19: #{tpu_custom_call.1} parent=1 // pred_check_branch
      %34 = sbr.rel (0) target = $region21
    $region20: #{tpu_custom_call.1} parent=1 // pred_region
      %s36 = ssub.s32 2048, 2048
      %37 = vsyncadd [#allocation6], %s36
      %s38 = sshll.u32 [#allocation5], 4
      %s39 = int_to_ptr.vmem [resolvable:$true] %s38
      %44 = dma.hbm_to_vmem [thread:$0]  %s4, 2048, %s39, [#allocation6], 128, 128, 8
    $region21: #{tpu_custom_call.1} parent=1 // pred_fallthru
      _
    // Predicated region
    $region22: #{tpu_custom_call.1} parent=1 // pred_check
      _
    $region23: #{tpu_custom_call.1} parent=1 // pred_check_branch
      %46 = sbr.rel (0) target = $region25
    $region24: #{tpu_custom_call.1} parent=1 // pred_region
      %s48 = ssub.s32 2048, 2048
      %49 = vsyncadd [#allocation9], %s48
      %s50 = sshll.u32 [#allocation8], 4
      %s51 = int_to_ptr.vmem [resolvable:$true] %s50
      %56 = dma.hbm_to_vmem [thread:$0]  %s5, 2048, %s51, [#allocation9], 128, 128, 8
    $region25: #{tpu_custom_call.1} parent=1 // pred_fallthru
      _
    // Predicated region
    $region26: #{tpu_custom_call.1} parent=1 // pred_check
      _
    $region27: #{tpu_custom_call.1} parent=1 // pred_check_branch
      %58 = sbr.rel (0) target = $region29
    $region28: #{tpu_custom_call.1} parent=1 // pred_region
      %s60 = ssub.s32 2048, 2048
      %61 = vsyncadd [#allocation9], %s60
      %s62 = sshll.u32 [#allocation10], 4
      %s63 = int_to_ptr.vmem [resolvable:$true] %s62
      %68 = dma.hbm_to_vmem [thread:$0]  %s6, 2048, %s63, [#allocation9], 128, 128, 8
    $region29: #{tpu_custom_call.1} parent=1 // pred_fallthru
      _
    // Predicated region
    $region30: #{tpu_custom_call.1} parent=1 // pred_check
      _
    $region31: #{tpu_custom_call.1} parent=1 // pred_check_branch
      %70 = sbr.rel (0) target = $region33
    $region32: #{tpu_custom_call.1} parent=1 // pred_region
      _
    $region33: #{tpu_custom_call.1} parent=1 // pred_fallthru
      _
    // Predicated region
    $region34: #{tpu_custom_call.1} parent=1 // pred_check
      _
    $region35: #{tpu_custom_call.1} parent=1 // pred_check_branch
      %72 = sbr.rel (0) target = $region37
    $region36: #{tpu_custom_call.1} parent=1 // pred_region
      _
    $region37: #{tpu_custom_call.1} parent=1 // pred_fallthru
      _
    // Predicated region
    $region38: #{tpu_custom_call.1} parent=1 // pred_check
      _
    $region39: #{tpu_custom_call.1} parent=1 // pred_check_branch
      %74 = sbr.rel (0) target = $region41
    $region40: #{tpu_custom_call.1} parent=1 // pred_region
      _
    $region41: #{tpu_custom_call.1} parent=1 // pred_fallthru
      _
    // Predicated region
    $region42: #{tpu_custom_call.1} parent=1 // pred_check
      _
    $region43: #{tpu_custom_call.1} parent=1 // pred_check_branch
      %76 = sbr.rel (0) target = $region45
    $region44: #{tpu_custom_call.1} parent=1 // pred_region
      _
    $region45: #{tpu_custom_call.1} parent=1 // pred_fallthru
      _
    // Predicated region
    $region46: #{tpu_custom_call.1} parent=1 // pred_check
      _
    $region47: #{tpu_custom_call.1} parent=1 // pred_check_branch
      %78 = sbr.rel (0) target = $region49
    $region48: #{tpu_custom_call.1} parent=1 // pred_region
      %s80 = ssub.s32 2048, 2048
      %81 = vsyncadd [#allocation12], %s80
      %s82 = sshll.u32 [#allocation11], 4
      %s83 = int_to_ptr.vmem [resolvable:$true] %s82
      %88 = dma.hbm_to_vmem [thread:$0]  %s11, 2048, %s83, [#allocation12], 128, 128, 8
    $region49: #{tpu_custom_call.1} parent=1 // pred_fallthru
      _
    // Predicated region
    $region50: #{tpu_custom_call.1} parent=1 // pred_check
      _
    $region51: #{tpu_custom_call.1} parent=1 // pred_check_branch
      %90 = sbr.rel (0) target = $region53
    $region52: #{tpu_custom_call.1} parent=1 // pred_region
      _
    $region53: #{tpu_custom_call.1} parent=1 // pred_fallthru
      _
    // Predicated region
    $region54: #{tpu_custom_call.1} parent=1 // pred_check
      _
    $region55: #{tpu_custom_call.1} parent=1 // pred_check_branch
      %92 = sbr.rel (0) target = $region57
    $region56: #{tpu_custom_call.1} parent=1 // pred_region
      %93 = dma.done [#allocation6], 2048
    $region57: #{tpu_custom_call.1} parent=1 // pred_fallthru
      _
    // Predicated region
    $region58: #{tpu_custom_call.1} parent=1 // pred_check
      _
    $region59: #{tpu_custom_call.1} parent=1 // pred_check_branch
      %95 = sbr.rel (0) target = $region61
    $region60: #{tpu_custom_call.1} parent=1 // pred_region
      %96 = dma.done [#allocation9], 2048
    $region61: #{tpu_custom_call.1} parent=1 // pred_fallthru
      _
    // Predicated region
    $region62: #{tpu_custom_call.1} parent=1 // pred_check
      _
    $region63: #{tpu_custom_call.1} parent=1 // pred_check_branch
      %98 = sbr.rel (0) target = $region65
    $region64: #{tpu_custom_call.1} parent=1 // pred_region
      %99 = dma.done [#allocation9], 2048
    $region65: #{tpu_custom_call.1} parent=1 // pred_fallthru
      _
    // Predicated region
    $region66: #{tpu_custom_call.1} parent=1 // pred_check
      _
    $region67: #{tpu_custom_call.1} parent=1 // pred_check_branch
      %101 = sbr.rel (0) target = $region69
    $region68: #{tpu_custom_call.1} parent=1 // pred_region
      %102 = dma.done [#allocation12], 2048
    $region69: #{tpu_custom_call.1} parent=1 // pred_fallthru
      _
    %v103 = vld [vmem:[%s0] sm:$0xff]
    %v104 = vld [vmem:[%s0 + $0x8] sm:$0xff]
    %v105 = vld [vmem:[%s0 + $0x10] sm:$0xff]
    %v106 = vld [vmem:[%s0 + $0x18] sm:$0xff]
    %v107 = vld [vmem:[%s0 + $0x20] sm:$0xff]
    %v108 = vld [vmem:[%s0 + $0x28] sm:$0xff]
    %v109 = vld [vmem:[%s0 + $0x30] sm:$0xff]
    %v110 = vld [vmem:[%s0 + $0x38] sm:$0xff]
    %v111 = vld [vmem:[%s1] sm:$0xff]
    %v112 = vld [vmem:[%s1 + $0x8] sm:$0xff]
    %v113 = vld [vmem:[%s7] sm:$0x1]
    %v115 = vlaneseq
    %v116 = vshrl.u32 %v115, 7
    %v117 = vsub.s32 0, %v116
    %v118 = vrot.slane %v113, %v117
    %vm120 = vcmask 130048
    %v122 = vsel %vm120, %v103, 0
    %v125 = vsel %vm120, %v104, 0
    %v128 = vsel %vm120, %v105, 0
    %v131 = vsel %vm120, %v106, 0
    %v134 = vsel %vm120, %v107, 0
    %v137 = vsel %vm120, %v108, 0
    %v140 = vsel %vm120, %v109, 0
    %v143 = vsel %vm120, %v110, 0
    %145 = vmatprep.subr.mxu0 0.0
    %146 = vmatpush1.msra.mxu0 %v111
    %147 = vmatprep.subr.mxu0 0.0
    %148 = vmatpush1.msra.mxu0 %v112
    %149 = vmatprep.subr.mxu0 0.0
    %150 = vmatpush1.msra.mxu0 0.0
    %151 = vmatprep.subr.mxu0 0.0
    %152 = vmatpush1.msra.mxu0 0.0
    %153 = vmatprep.subr.mxu0 0.0
    %154 = vmatpush1.msra.mxu0 0.0
    %155 = vmatprep.subr.mxu0 0.0
    %156 = vmatpush1.msra.mxu0 0.0
    %157 = vmatprep.subr.mxu0 0.0
    %158 = vmatpush1.msra.mxu0 0.0
    %159 = vmatprep.subr.mxu0 0.0
    %160 = vmatpush1.msra.mxu0 0.0
    %161 = vmatprep.subr.mxu0 0.0
    %162 = vmatpush1.msra.mxu0 0.0
    %163 = vmatprep.subr.mxu0 0.0
    %164 = vmatpush1.msra.mxu0 0.0
    %165 = vmatprep.subr.mxu0 0.0
    %166 = vmatpush1.msra.mxu0 0.0
    %167 = vmatprep.subr.mxu0 0.0
    %168 = vmatpush1.msra.mxu0 0.0
    %169 = vmatprep.subr.mxu0 0.0
    %170 = vmatpush1.msra.mxu0 0.0
    %171 = vmatprep.subr.mxu0 0.0
    %172 = vmatpush1.msra.mxu0 0.0
    %173 = vmatprep.subr.mxu0 0.0
    %174 = vmatpush1.msra.mxu0 0.0
    %175 = vmatprep.subr.mxu0 0.0
    %176 = vmatpush1.msra.mxu0 0.0
    %177 = vmatprep.subr.mxu0 0.0
    %178 = vmatpush1.msra.mxu0 0.0
    %179 = vmatprep.subr.mxu0 0.0
    %180 = vmatpush1.msra.mxu0 0.0
    %181 = vmatprep.subr.mxu0 0.0
    %182 = vmatpush1.msra.mxu0 0.0
    %183 = vmatprep.subr.mxu0 0.0
    %184 = vmatpush1.msra.mxu0 0.0
    %185 = vmatprep.subr.mxu0 0.0
    %186 = vmatpush1.msra.mxu0 0.0
    %187 = vmatprep.subr.mxu0 0.0
    %188 = vmatpush1.msra.mxu0 0.0
    %189 = vmatprep.subr.mxu0 0.0
    %190 = vmatpush1.msra.mxu0 0.0
    %191 = vmatprep.subr.mxu0 0.0
    %192 = vmatpush1.msra.mxu0 0.0
    %193 = vmatprep.subr.mxu0 0.0
    %194 = vmatpush1.msra.mxu0 0.0
    %195 = vmatprep.subr.mxu0 0.0
    %196 = vmatpush1.msra.mxu0 0.0
    %197 = vmatprep.subr.mxu0 0.0
    %198 = vmatpush1.msra.mxu0 0.0
    %199 = vmatprep.subr.mxu0 0.0
    %200 = vmatpush1.msra.mxu0 0.0
    %201 = vmatprep.subr.mxu0 0.0
    %202 = vmatpush1.msra.mxu0 0.0
    %203 = vmatprep.subr.mxu0 0.0
    %204 = vmatpush1.msra.mxu0 0.0
    %205 = vmatprep.subr.mxu0 0.0
    %206 = vmatpush1.msra.mxu0 0.0
    %207 = vmatprep.subr.mxu0 0.0
    %208 = vmatpush1.msra.mxu0 0.0
    %209 = vmatprep.mubr.f32.mxu0 0.0
    %210 = vmatmul.mubr.f32.gmra.mrb[0].mxu0 %v122
    %v211 = vpop.f32.mrb[0].mxu0
    %v212 = vadd.f32 %v118, %v211
    %v213 = vpop.f32.mrb[0].mxu0
    %214 = vmatprep.mubr.f32.mxu0 0.0
    %215 = vmatmul.mubr.f32.gmra.mrb[0].mxu0 %v125
    %v216 = vpop.f32.mrb[0].mxu0
    %v217 = vadd.f32 %v118, %v216
    %v218 = vpop.f32.mrb[0].mxu0
    %219 = vmatprep.mubr.f32.mxu0 0.0
    %220 = vmatmul.mubr.f32.gmra.mrb[0].mxu0 %v128
    %v221 = vpop.f32.mrb[0].mxu0
    %v222 = vadd.f32 %v118, %v221
    %v223 = vpop.f32.mrb[0].mxu0
    %224 = vmatprep.mubr.f32.mxu0 0.0
    %225 = vmatmul.mubr.f32.gmra.mrb[0].mxu0 %v131
    %v226 = vpop.f32.mrb[0].mxu0
    %v227 = vadd.f32 %v118, %v226
    %v228 = vpop.f32.mrb[0].mxu0
    %229 = vmatprep.mubr.f32.mxu0 0.0
    %230 = vmatmul.mubr.f32.gmra.mrb[0].mxu0 %v134
    %v231 = vpop.f32.mrb[0].mxu0
    %v232 = vadd.f32 %v118, %v231
    %v233 = vpop.f32.mrb[0].mxu0
    %234 = vmatprep.mubr.f32.mxu0 0.0
    %235 = vmatmul.mubr.f32.gmra.mrb[0].mxu0 %v137
    %v236 = vpop.f32.mrb[0].mxu0
    %v237 = vadd.f32 %v118, %v236
    %v238 = vpop.f32.mrb[0].mxu0
    %239 = vmatprep.mubr.f32.mxu0 0.0
    %240 = vmatmul.mubr.f32.gmra.mrb[0].mxu0 %v140
    %v241 = vpop.f32.mrb[0].mxu0
    %v242 = vadd.f32 %v118, %v241
    %v243 = vpop.f32.mrb[0].mxu0
    %244 = vmatprep.mubr.f32.mxu0 0.0
    %245 = vmatmul.mubr.f32.gmra.mrb[0].mxu0 %v143
    %v246 = vpop.f32.mrb[0].mxu0
    %v247 = vadd.f32 %v118, %v246
    %v248 = vpop.f32.mrb[0].mxu0
    %249 = vdwg.mxu0
    %250 = vst [vmem:[#allocation2] sm:$0xff] %v212
    %251 = vst [vmem:[#allocation2 + $0x8] sm:$0xff] %v217
    %252 = vst [vmem:[#allocation2 + $0x10] sm:$0xff] %v222
    %253 = vst [vmem:[#allocation2 + $0x18] sm:$0xff] %v227
    %254 = vst [vmem:[#allocation2 + $0x20] sm:$0xff] %v232
    %255 = vst [vmem:[#allocation2 + $0x28] sm:$0xff] %v237
    %256 = vst [vmem:[#allocation2 + $0x30] sm:$0xff] %v242
    %257 = vst [vmem:[#allocation2 + $0x38] sm:$0xff] %v247
    %v258 = vld [vmem:[%s2] sm:$0xff]
    %v259 = vld [vmem:[%s2 + $0x8] sm:$0xff]
    %v260 = vld [vmem:[%s8] sm:$0x1]
    %v262 = vlaneseq
    %v263 = vshrl.u32 %v262, 7
    %v264 = vsub.s32 0, %v263
    %v265 = vrot.slane %v260, %v264
    %267 = vmatprep.subr.mxu0 0.0
    %268 = vmatpush1.msra.mxu0 %v258
    %269 = vmatprep.subr.mxu0 0.0
    %270 = vmatpush1.msra.mxu0 %v259
    %271 = vmatprep.subr.mxu0 0.0
    %272 = vmatpush1.msra.mxu0 0.0
    %273 = vmatprep.subr.mxu0 0.0
    %274 = vmatpush1.msra.mxu0 0.0
    %275 = vmatprep.subr.mxu0 0.0
    %276 = vmatpush1.msra.mxu0 0.0
    %277 = vmatprep.subr.mxu0 0.0
    %278 = vmatpush1.msra.mxu0 0.0
    %279 = vmatprep.subr.mxu0 0.0
    %280 = vmatpush1.msra.mxu0 0.0
    %281 = vmatprep.subr.mxu0 0.0
    %282 = vmatpush1.msra.mxu0 0.0
    %283 = vmatprep.subr.mxu0 0.0
    %284 = vmatpush1.msra.mxu0 0.0
    %285 = vmatprep.subr.mxu0 0.0
    %286 = vmatpush1.msra.mxu0 0.0
    %287 = vmatprep.subr.mxu0 0.0
    %288 = vmatpush1.msra.mxu0 0.0
    %289 = vmatprep.subr.mxu0 0.0
    %290 = vmatpush1.msra.mxu0 0.0
    %291 = vmatprep.subr.mxu0 0.0
    %292 = vmatpush1.msra.mxu0 0.0
    %293 = vmatprep.subr.mxu0 0.0
    %294 = vmatpush1.msra.mxu0 0.0
    %295 = vmatprep.subr.mxu0 0.0
    %296 = vmatpush1.msra.mxu0 0.0
    %297 = vmatprep.subr.mxu0 0.0
    %298 = vmatpush1.msra.mxu0 0.0
    %299 = vmatprep.subr.mxu0 0.0
    %300 = vmatpush1.msra.mxu0 0.0
    %301 = vmatprep.subr.mxu0 0.0
    %302 = vmatpush1.msra.mxu0 0.0
    %303 = vmatprep.subr.mxu0 0.0
    %304 = vmatpush1.msra.mxu0 0.0
    %305 = vmatprep.subr.mxu0 0.0
    %306 = vmatpush1.msra.mxu0 0.0
    %307 = vmatprep.subr.mxu0 0.0
    %308 = vmatpush1.msra.mxu0 0.0
    %309 = vmatprep.subr.mxu0 0.0
    %310 = vmatpush1.msra.mxu0 0.0
    %311 = vmatprep.subr.mxu0 0.0
    %312 = vmatpush1.msra.mxu0 0.0
    %313 = vmatprep.subr.mxu0 0.0
    %314 = vmatpush1.msra.mxu0 0.0
    %315 = vmatprep.subr.mxu0 0.0
    %316 = vmatpush1.msra.mxu0 0.0
    %317 = vmatprep.subr.mxu0 0.0
    %318 = vmatpush1.msra.mxu0 0.0
    %319 = vmatprep.subr.mxu0 0.0
    %320 = vmatpush1.msra.mxu0 0.0
    %321 = vmatprep.subr.mxu0 0.0
    %322 = vmatpush1.msra.mxu0 0.0
    %323 = vmatprep.subr.mxu0 0.0
    %324 = vmatpush1.msra.mxu0 0.0
    %325 = vmatprep.subr.mxu0 0.0
    %326 = vmatpush1.msra.mxu0 0.0
    %327 = vmatprep.subr.mxu0 0.0
    %328 = vmatpush1.msra.mxu0 0.0
    %329 = vmatprep.subr.mxu0 0.0
    %330 = vmatpush1.msra.mxu0 0.0
    %331 = vmatprep.mubr.f32.mxu0 0.0
    %332 = vmatmul.mubr.f32.gmra.mrb[0].mxu0 %v122
    %v333 = vpop.f32.mrb[0].mxu0
    %v334 = vadd.f32 %v265, %v333
    %v335 = vpop.f32.mrb[0].mxu0
    %336 = vmatprep.mubr.f32.mxu0 0.0
    %337 = vmatmul.mubr.f32.gmra.mrb[0].mxu0 %v125
    %v338 = vpop.f32.mrb[0].mxu0
    %v339 = vadd.f32 %v265, %v338
    %v340 = vpop.f32.mrb[0].mxu0
    %341 = vmatprep.mubr.f32.mxu0 0.0
    %342 = vmatmul.mubr.f32.gmra.mrb[0].mxu0 %v128
    %v343 = vpop.f32.mrb[0].mxu0
    %v344 = vadd.f32 %v265, %v343
    %v345 = vpop.f32.mrb[0].mxu0
    %346 = vmatprep.mubr.f32.mxu0 0.0
    %347 = vmatmul.mubr.f32.gmra.mrb[0].mxu0 %v131
    %v348 = vpop.f32.mrb[0].mxu0
    %v349 = vadd.f32 %v265, %v348
    %v350 = vpop.f32.mrb[0].mxu0
    %351 = vmatprep.mubr.f32.mxu0 0.0
    %352 = vmatmul.mubr.f32.gmra.mrb[0].mxu0 %v134
    %v353 = vpop.f32.mrb[0].mxu0
    %v354 = vadd.f32 %v265, %v353
    %v355 = vpop.f32.mrb[0].mxu0
    %356 = vmatprep.mubr.f32.mxu0 0.0
    %357 = vmatmul.mubr.f32.gmra.mrb[0].mxu0 %v137
    %v358 = vpop.f32.mrb[0].mxu0
    %v359 = vadd.f32 %v265, %v358
    %v360 = vpop.f32.mrb[0].mxu0
    %361 = vmatprep.mubr.f32.mxu0 0.0
    %362 = vmatmul.mubr.f32.gmra.mrb[0].mxu0 %v140
    %v363 = vpop.f32.mrb[0].mxu0
    %v364 = vadd.f32 %v265, %v363
    %v365 = vpop.f32.mrb[0].mxu0
    %366 = vmatprep.mubr.f32.mxu0 0.0
    %367 = vmatmul.mubr.f32.gmra.mrb[0].mxu0 %v143
    %v368 = vpop.f32.mrb[0].mxu0
    %v369 = vadd.f32 %v265, %v368
    %v370 = vpop.f32.mrb[0].mxu0
    %371 = vdwg.mxu0
    %372 = vst [vmem:[#allocation3] sm:$0xff] %v334
    %373 = vst [vmem:[#allocation3 + $0x8] sm:$0xff] %v339
    %374 = vst [vmem:[#allocation3 + $0x10] sm:$0xff] %v344
    %375 = vst [vmem:[#allocation3 + $0x18] sm:$0xff] %v349
    %376 = vst [vmem:[#allocation3 + $0x20] sm:$0xff] %v354
    %377 = vst [vmem:[#allocation3 + $0x28] sm:$0xff] %v359
    %378 = vst [vmem:[#allocation3 + $0x30] sm:$0xff] %v364
    %379 = vst [vmem:[#allocation3 + $0x38] sm:$0xff] %v369
    %v380 = vld [vmem:[%s3] sm:$0xff]
    %v381 = vld [vmem:[%s3 + $0x8] sm:$0xff]
    %v382 = vld [vmem:[%s9] sm:$0x1]
    %v384 = vlaneseq
    %v385 = vshrl.u32 %v384, 7
    %v386 = vsub.s32 0, %v385
    %v387 = vrot.slane %v382, %v386
    %389 = vmatprep.subr.mxu0 0.0
    %390 = vmatpush1.msra.mxu0 %v380
    %391 = vmatprep.subr.mxu0 0.0
    %392 = vmatpush1.msra.mxu0 %v381
    %393 = vmatprep.subr.mxu0 0.0
    %394 = vmatpush1.msra.mxu0 0.0
    %395 = vmatprep.subr.mxu0 0.0
    %396 = vmatpush1.msra.mxu0 0.0
    %397 = vmatprep.subr.mxu0 0.0
    %398 = vmatpush1.msra.mxu0 0.0
    %399 = vmatprep.subr.mxu0 0.0
    %400 = vmatpush1.msra.mxu0 0.0
    %401 = vmatprep.subr.mxu0 0.0
    %402 = vmatpush1.msra.mxu0 0.0
    %403 = vmatprep.subr.mxu0 0.0
    %404 = vmatpush1.msra.mxu0 0.0
    %405 = vmatprep.subr.mxu0 0.0
    %406 = vmatpush1.msra.mxu0 0.0
    %407 = vmatprep.subr.mxu0 0.0
    %408 = vmatpush1.msra.mxu0 0.0
    %409 = vmatprep.subr.mxu0 0.0
    %410 = vmatpush1.msra.mxu0 0.0
    %411 = vmatprep.subr.mxu0 0.0
    %412 = vmatpush1.msra.mxu0 0.0
    %413 = vmatprep.subr.mxu0 0.0
    %414 = vmatpush1.msra.mxu0 0.0
    %415 = vmatprep.subr.mxu0 0.0
    %416 = vmatpush1.msra.mxu0 0.0
    %417 = vmatprep.subr.mxu0 0.0
    %418 = vmatpush1.msra.mxu0 0.0
    %419 = vmatprep.subr.mxu0 0.0
    %420 = vmatpush1.msra.mxu0 0.0
    %421 = vmatprep.subr.mxu0 0.0
    %422 = vmatpush1.msra.mxu0 0.0
    %423 = vmatprep.subr.mxu0 0.0
    %424 = vmatpush1.msra.mxu0 0.0
    %425 = vmatprep.subr.mxu0 0.0
    %426 = vmatpush1.msra.mxu0 0.0
    %427 = vmatprep.subr.mxu0 0.0
    %428 = vmatpush1.msra.mxu0 0.0
    %429 = vmatprep.subr.mxu0 0.0
    %430 = vmatpush1.msra.mxu0 0.0
    %431 = vmatprep.subr.mxu0 0.0
    %432 = vmatpush1.msra.mxu0 0.0
    %433 = vmatprep.subr.mxu0 0.0
    %434 = vmatpush1.msra.mxu0 0.0
    %435 = vmatprep.subr.mxu0 0.0
    %436 = vmatpush1.msra.mxu0 0.0
    %437 = vmatprep.subr.mxu0 0.0
    %438 = vmatpush1.msra.mxu0 0.0
    %439 = vmatprep.subr.mxu0 0.0
    %440 = vmatpush1.msra.mxu0 0.0
    %441 = vmatprep.subr.mxu0 0.0
    %442 = vmatpush1.msra.mxu0 0.0
    %443 = vmatprep.subr.mxu0 0.0
    %444 = vmatpush1.msra.mxu0 0.0
    %445 = vmatprep.subr.mxu0 0.0
    %446 = vmatpush1.msra.mxu0 0.0
    %447 = vmatprep.subr.mxu0 0.0
    %448 = vmatpush1.msra.mxu0 0.0
    %449 = vmatprep.subr.mxu0 0.0
    %450 = vmatpush1.msra.mxu0 0.0
    %451 = vmatprep.subr.mxu0 0.0
    %452 = vmatpush1.msra.mxu0 0.0
    %453 = vmatprep.mubr.f32.mxu0 0.0
    %454 = vmatmul.mubr.f32.gmra.mrb[0].mxu0 %v122
    %v455 = vpop.f32.mrb[0].mxu0
    %v456 = vadd.f32 %v387, %v455
    %v457 = vpop.f32.mrb[0].mxu0
    %458 = vmatprep.mubr.f32.mxu0 0.0
    %459 = vmatmul.mubr.f32.gmra.mrb[0].mxu0 %v125
    %v460 = vpop.f32.mrb[0].mxu0
    %v461 = vadd.f32 %v387, %v460
    %v462 = vpop.f32.mrb[0].mxu0
    %463 = vmatprep.mubr.f32.mxu0 0.0
    %464 = vmatmul.mubr.f32.gmra.mrb[0].mxu0 %v128
    %v465 = vpop.f32.mrb[0].mxu0
    %v466 = vadd.f32 %v387, %v465
    %v467 = vpop.f32.mrb[0].mxu0
    %468 = vmatprep.mubr.f32.mxu0 0.0
    %469 = vmatmul.mubr.f32.gmra.mrb[0].mxu0 %v131
    %v470 = vpop.f32.mrb[0].mxu0
    %v471 = vadd.f32 %v387, %v470
    %v472 = vpop.f32.mrb[0].mxu0
    %473 = vmatprep.mubr.f32.mxu0 0.0
    %474 = vmatmul.mubr.f32.gmra.mrb[0].mxu0 %v134
    %v475 = vpop.f32.mrb[0].mxu0
    %v476 = vadd.f32 %v387, %v475
    %v477 = vpop.f32.mrb[0].mxu0
    %478 = vmatprep.mubr.f32.mxu0 0.0
    %479 = vmatmul.mubr.f32.gmra.mrb[0].mxu0 %v137
    %v480 = vpop.f32.mrb[0].mxu0
    %v481 = vadd.f32 %v387, %v480
    %v482 = vpop.f32.mrb[0].mxu0
    %483 = vmatprep.mubr.f32.mxu0 0.0
    %484 = vmatmul.mubr.f32.gmra.mrb[0].mxu0 %v140
    %v485 = vpop.f32.mrb[0].mxu0
    %v486 = vadd.f32 %v387, %v485
    %v487 = vpop.f32.mrb[0].mxu0
    %488 = vmatprep.mubr.f32.mxu0 0.0
    %489 = vmatmul.mubr.f32.gmra.mrb[0].mxu0 %v143
    %v490 = vpop.f32.mrb[0].mxu0
    %v491 = vadd.f32 %v387, %v490
    %v492 = vpop.f32.mrb[0].mxu0
    %493 = vdwg.mxu0
    %494 = vst [vmem:[#allocation4] sm:$0xff] %v456
    %495 = vst [vmem:[#allocation4 + $0x8] sm:$0xff] %v461
    %496 = vst [vmem:[#allocation4 + $0x10] sm:$0xff] %v466
    %497 = vst [vmem:[#allocation4 + $0x18] sm:$0xff] %v471
    %498 = vst [vmem:[#allocation4 + $0x20] sm:$0xff] %v476
    %499 = vst [vmem:[#allocation4 + $0x28] sm:$0xff] %v481
    %500 = vst [vmem:[#allocation4 + $0x30] sm:$0xff] %v486
    %501 = vst [vmem:[#allocation4 + $0x38] sm:$0xff] %v491
    %v502 = vld [vmem:[%s10] sm:$0x1]
    %v504 = vlaneseq
    %v505 = vshrl.u32 %v504, 7
    %v506 = vsub.s32 0, %v505
    %v507 = vrot.slane %v502, %v506
    %v509 = vld [vmem:[#allocation5] sm:$0xff]
    %v510 = vld [vmem:[#allocation5 + $0x8] sm:$0xff]
    %v511 = vld [vmem:[#allocation5 + $0x10] sm:$0xff]
    %v512 = vld [vmem:[#allocation5 + $0x18] sm:$0xff]
    %v513 = vld [vmem:[#allocation5 + $0x20] sm:$0xff]
    %v514 = vld [vmem:[#allocation5 + $0x28] sm:$0xff]
    %v515 = vld [vmem:[#allocation5 + $0x30] sm:$0xff]
    %v516 = vld [vmem:[#allocation5 + $0x38] sm:$0xff]
    %v517 = vld [vmem:[#allocation5 + $0x40] sm:$0xff]
    %v518 = vld [vmem:[#allocation5 + $0x48] sm:$0xff]
    %v519 = vld [vmem:[#allocation5 + $0x50] sm:$0xff]
    %v520 = vld [vmem:[#allocation5 + $0x58] sm:$0xff]
    %v521 = vld [vmem:[#allocation5 + $0x60] sm:$0xff]
    %v522 = vld [vmem:[#allocation5 + $0x68] sm:$0xff]
    %v523 = vld [vmem:[#allocation5 + $0x70] sm:$0xff]
    %v524 = vld [vmem:[#allocation5 + $0x78] sm:$0xff]
    %525 = vmatprep.subr.mxu0 0.0
    %526 = vmatpush1.msra.mxu0 %v509
    %527 = vmatprep.subr.mxu0 0.0
    %528 = vmatpush1.msra.mxu0 %v510
    %529 = vmatprep.subr.mxu0 0.0
    %530 = vmatpush1.msra.mxu0 %v511
    %531 = vmatprep.subr.mxu0 0.0
    %532 = vmatpush1.msra.mxu0 %v512
    %533 = vmatprep.subr.mxu0 0.0
    %534 = vmatpush1.msra.mxu0 %v513
    %535 = vmatprep.subr.mxu0 0.0
    %536 = vmatpush1.msra.mxu0 %v514
    %537 = vmatprep.subr.mxu0 0.0
    %538 = vmatpush1.msra.mxu0 %v515
    %539 = vmatprep.subr.mxu0 0.0
    %540 = vmatpush1.msra.mxu0 %v516
    %541 = vmatprep.subr.mxu0 0.0
    %542 = vmatpush1.msra.mxu0 %v517
    %543 = vmatprep.subr.mxu0 0.0
    %544 = vmatpush1.msra.mxu0 %v518
    %545 = vmatprep.subr.mxu0 0.0
    %546 = vmatpush1.msra.mxu0 %v519
    %547 = vmatprep.subr.mxu0 0.0
    %548 = vmatpush1.msra.mxu0 %v520
    %549 = vmatprep.subr.mxu0 0.0
    %550 = vmatpush1.msra.mxu0 %v521
    %551 = vmatprep.subr.mxu0 0.0
    %552 = vmatpush1.msra.mxu0 %v522
    %553 = vmatprep.subr.mxu0 0.0
    %554 = vmatpush1.msra.mxu0 %v523
    %555 = vmatprep.subr.mxu0 0.0
    %556 = vmatpush1.msra.mxu0 %v524
    %557 = vmatprep.subr.mxu0 0.0
    %558 = vmatpush1.msra.mxu0 0.0
    %559 = vmatprep.subr.mxu0 0.0
    %560 = vmatpush1.msra.mxu0 0.0
    %561 = vmatprep.subr.mxu0 0.0
    %562 = vmatpush1.msra.mxu0 0.0
    %563 = vmatprep.subr.mxu0 0.0
    %564 = vmatpush1.msra.mxu0 0.0
    %565 = vmatprep.subr.mxu0 0.0
    %566 = vmatpush1.msra.mxu0 0.0
    %567 = vmatprep.subr.mxu0 0.0
    %568 = vmatpush1.msra.mxu0 0.0
    %569 = vmatprep.subr.mxu0 0.0
    %570 = vmatpush1.msra.mxu0 0.0
    %571 = vmatprep.subr.mxu0 0.0
    %572 = vmatpush1.msra.mxu0 0.0
    %573 = vmatprep.subr.mxu0 0.0
    %574 = vmatpush1.msra.mxu0 0.0
    %575 = vmatprep.subr.mxu0 0.0
    %576 = vmatpush1.msra.mxu0 0.0
    %577 = vmatprep.subr.mxu0 0.0
    %578 = vmatpush1.msra.mxu0 0.0
    %579 = vmatprep.subr.mxu0 0.0
    %580 = vmatpush1.msra.mxu0 0.0
    %581 = vmatprep.subr.mxu0 0.0
    %582 = vmatpush1.msra.mxu0 0.0
    %583 = vmatprep.subr.mxu0 0.0
    %584 = vmatpush1.msra.mxu0 0.0
    %585 = vmatprep.subr.mxu0 0.0
    %586 = vmatpush1.msra.mxu0 0.0
    %587 = vmatprep.subr.mxu0 0.0
    %588 = vmatpush1.msra.mxu0 0.0
    %589 = vmatprep.mubr.f32.mxu0 0.0
    %590 = vmatmul.mubr.f32.gmra.mrb[0].mxu0 0.0
    %v591 = vpop.f32.mrb[0].mxu0
    %v592 = vadd.f32 0.0, %v591
    %v593 = vpop.f32.mrb[0].mxu0
    %594 = vdwg.mxu0
    %v595 = vld [vmem:[#allocation8] sm:$0xff]
    %v596 = vld [vmem:[#allocation8 + $0x8] sm:$0xff]
    %v597 = vld [vmem:[#allocation8 + $0x10] sm:$0xff]
    %v598 = vld [vmem:[#allocation8 + $0x18] sm:$0xff]
    %v599 = vld [vmem:[#allocation8 + $0x20] sm:$0xff]
    %v600 = vld [vmem:[#allocation8 + $0x28] sm:$0xff]
    %v601 = vld [vmem:[#allocation8 + $0x30] sm:$0xff]
    %v602 = vld [vmem:[#allocation8 + $0x38] sm:$0xff]
    %v603 = vld [vmem:[#allocation8 + $0x40] sm:$0xff]
    %v604 = vld [vmem:[#allocation8 + $0x48] sm:$0xff]
    %v605 = vld [vmem:[#allocation8 + $0x50] sm:$0xff]
    %v606 = vld [vmem:[#allocation8 + $0x58] sm:$0xff]
    %v607 = vld [vmem:[#allocation8 + $0x60] sm:$0xff]
    %v608 = vld [vmem:[#allocation8 + $0x68] sm:$0xff]
    %v609 = vld [vmem:[#allocation8 + $0x70] sm:$0xff]
    %v610 = vld [vmem:[#allocation8 + $0x78] sm:$0xff]
    %611 = vmatprep.subr.mxu0 0.0
    %612 = vmatpush1.msra.mxu0 %v595
    %613 = vmatprep.subr.mxu0 0.0
    %614 = vmatpush1.msra.mxu0 %v596
    %615 = vmatprep.subr.mxu0 0.0
    %616 = vmatpush1.msra.mxu0 %v597
    %617 = vmatprep.subr.mxu0 0.0
    %618 = vmatpush1.msra.mxu0 %v598
    %619 = vmatprep.subr.mxu0 0.0
    %620 = vmatpush1.msra.mxu0 %v599
    %621 = vmatprep.subr.mxu0 0.0
    %622 = vmatpush1.msra.mxu0 %v600
    %623 = vmatprep.subr.mxu0 0.0
    %624 = vmatpush1.msra.mxu0 %v601
    %625 = vmatprep.subr.mxu0 0.0
    %626 = vmatpush1.msra.mxu0 %v602
    %627 = vmatprep.subr.mxu0 0.0
    %628 = vmatpush1.msra.mxu0 %v603
    %629 = vmatprep.subr.mxu0 0.0
    %630 = vmatpush1.msra.mxu0 %v604
    %631 = vmatprep.subr.mxu0 0.0
    %632 = vmatpush1.msra.mxu0 %v605
    %633 = vmatprep.subr.mxu0 0.0
    %634 = vmatpush1.msra.mxu0 %v606
    %635 = vmatprep.subr.mxu0 0.0
    %636 = vmatpush1.msra.mxu0 %v607
    %637 = vmatprep.subr.mxu0 0.0
    %638 = vmatpush1.msra.mxu0 %v608
    %639 = vmatprep.subr.mxu0 0.0
    %640 = vmatpush1.msra.mxu0 %v609
    %641 = vmatprep.subr.mxu0 0.0
    %642 = vmatpush1.msra.mxu0 %v610
    %643 = vmatprep.subr.mxu0 0.0
    %644 = vmatpush1.msra.mxu0 0.0
    %645 = vmatprep.subr.mxu0 0.0
    %646 = vmatpush1.msra.mxu0 0.0
    %647 = vmatprep.subr.mxu0 0.0
    %648 = vmatpush1.msra.mxu0 0.0
    %649 = vmatprep.subr.mxu0 0.0
    %650 = vmatpush1.msra.mxu0 0.0
    %651 = vmatprep.subr.mxu0 0.0
    %652 = vmatpush1.msra.mxu0 0.0
    %653 = vmatprep.subr.mxu0 0.0
    %654 = vmatpush1.msra.mxu0 0.0
    %655 = vmatprep.subr.mxu0 0.0
    %656 = vmatpush1.msra.mxu0 0.0
    %657 = vmatprep.subr.mxu0 0.0
    %658 = vmatpush1.msra.mxu0 0.0
    %659 = vmatprep.subr.mxu0 0.0
    %660 = vmatpush1.msra.mxu0 0.0
    %661 = vmatprep.subr.mxu0 0.0
    %662 = vmatpush1.msra.mxu0 0.0
    %663 = vmatprep.subr.mxu0 0.0
    %664 = vmatpush1.msra.mxu0 0.0
    %665 = vmatprep.subr.mxu0 0.0
    %666 = vmatpush1.msra.mxu0 0.0
    %667 = vmatprep.subr.mxu0 0.0
    %668 = vmatpush1.msra.mxu0 0.0
    %669 = vmatprep.subr.mxu0 0.0
    %670 = vmatpush1.msra.mxu0 0.0
    %671 = vmatprep.subr.mxu0 0.0
    %672 = vmatpush1.msra.mxu0 0.0
    %673 = vmatprep.subr.mxu0 0.0
    %674 = vmatpush1.msra.mxu0 0.0
    %675 = vmatprep.mubr.f32.mxu0 0.0
    %676 = vmatmul.mubr.f32.gmra.mrb[0].mxu0 0.0
    %v677 = vpop.f32.mrb[0].mxu0
    %v678 = vadd.f32 0.0, %v677
    %v679 = vpop.f32.mrb[0].mxu0
    %680 = vdwg.mxu0
    %v681 = vld [vmem:[#allocation10] sm:$0xff]
    %v682 = vld [vmem:[#allocation10 + $0x8] sm:$0xff]
    %v683 = vld [vmem:[#allocation10 + $0x10] sm:$0xff]
    %v684 = vld [vmem:[#allocation10 + $0x18] sm:$0xff]
    %v685 = vld [vmem:[#allocation10 + $0x20] sm:$0xff]
    %v686 = vld [vmem:[#allocation10 + $0x28] sm:$0xff]
    %v687 = vld [vmem:[#allocation10 + $0x30] sm:$0xff]
    %v688 = vld [vmem:[#allocation10 + $0x38] sm:$0xff]
    %v689 = vld [vmem:[#allocation10 + $0x40] sm:$0xff]
    %v690 = vld [vmem:[#allocation10 + $0x48] sm:$0xff]
    %v691 = vld [vmem:[#allocation10 + $0x50] sm:$0xff]
    %v692 = vld [vmem:[#allocation10 + $0x58] sm:$0xff]
    %v693 = vld [vmem:[#allocation10 + $0x60] sm:$0xff]
    %v694 = vld [vmem:[#allocation10 + $0x68] sm:$0xff]
    %v695 = vld [vmem:[#allocation10 + $0x70] sm:$0xff]
    %v696 = vld [vmem:[#allocation10 + $0x78] sm:$0xff]
    %697 = vmatprep.subr.mxu0 0.0
    %698 = vmatpush1.msra.mxu0 %v681
    %699 = vmatprep.subr.mxu0 0.0
    %700 = vmatpush1.msra.mxu0 %v682
    %701 = vmatprep.subr.mxu0 0.0
    %702 = vmatpush1.msra.mxu0 %v683
    %703 = vmatprep.subr.mxu0 0.0
    %704 = vmatpush1.msra.mxu0 %v684
    %705 = vmatprep.subr.mxu0 0.0
    %706 = vmatpush1.msra.mxu0 %v685
    %707 = vmatprep.subr.mxu0 0.0
    %708 = vmatpush1.msra.mxu0 %v686
    %709 = vmatprep.subr.mxu0 0.0
    %710 = vmatpush1.msra.mxu0 %v687
    %711 = vmatprep.subr.mxu0 0.0
    %712 = vmatpush1.msra.mxu0 %v688
    %713 = vmatprep.subr.mxu0 0.0
    %714 = vmatpush1.msra.mxu0 %v689
    %715 = vmatprep.subr.mxu0 0.0
    %716 = vmatpush1.msra.mxu0 %v690
    %717 = vmatprep.subr.mxu0 0.0
    %718 = vmatpush1.msra.mxu0 %v691
    %719 = vmatprep.subr.mxu0 0.0
    %720 = vmatpush1.msra.mxu0 %v692
    %721 = vmatprep.subr.mxu0 0.0
    %722 = vmatpush1.msra.mxu0 %v693
    %723 = vmatprep.subr.mxu0 0.0
    %724 = vmatpush1.msra.mxu0 %v694
    %725 = vmatprep.subr.mxu0 0.0
    %726 = vmatpush1.msra.mxu0 %v695
    %727 = vmatprep.subr.mxu0 0.0
    %728 = vmatpush1.msra.mxu0 %v696
    %729 = vmatprep.subr.mxu0 0.0
    %730 = vmatpush1.msra.mxu0 0.0
    %731 = vmatprep.subr.mxu0 0.0
    %732 = vmatpush1.msra.mxu0 0.0
    %733 = vmatprep.subr.mxu0 0.0
    %734 = vmatpush1.msra.mxu0 0.0
    %735 = vmatprep.subr.mxu0 0.0
    %736 = vmatpush1.msra.mxu0 0.0
    %737 = vmatprep.subr.mxu0 0.0
    %738 = vmatpush1.msra.mxu0 0.0
    %739 = vmatprep.subr.mxu0 0.0
    %740 = vmatpush1.msra.mxu0 0.0
    %741 = vmatprep.subr.mxu0 0.0
    %742 = vmatpush1.msra.mxu0 0.0
    %743 = vmatprep.subr.mxu0 0.0
    %744 = vmatpush1.msra.mxu0 0.0
    %745 = vmatprep.subr.mxu0 0.0
    %746 = vmatpush1.msra.mxu0 0.0
    %747 = vmatprep.subr.mxu0 0.0
    %748 = vmatpush1.msra.mxu0 0.0
    %749 = vmatprep.subr.mxu0 0.0
    %750 = vmatpush1.msra.mxu0 0.0
    %751 = vmatprep.subr.mxu0 0.0
    %752 = vmatpush1.msra.mxu0 0.0
    %753 = vmatprep.subr.mxu0 0.0
    %754 = vmatpush1.msra.mxu0 0.0
    %755 = vmatprep.subr.mxu0 0.0
    %756 = vmatpush1.msra.mxu0 0.0
    %757 = vmatprep.subr.mxu0 0.0
    %758 = vmatpush1.msra.mxu0 0.0
    %759 = vmatprep.subr.mxu0 0.0
    %760 = vmatpush1.msra.mxu0 0.0
    %761 = vmatprep.mubr.f32.mxu0 0.0
    %762 = vmatmul.mubr.f32.gmra.mrb[0].mxu0 0.0
    %v763 = vpop.f32.mrb[0].mxu0
    %v764 = vadd.f32 %v507, %v763
    %v765 = vpop.f32.mrb[0].mxu0
    %766 = vdwg.mxu0
    %v767 = vld [vmem:[#allocation2] sm:$0xff]
    %v768 = vadd.f32 %v767, %v592
    %v769 = vxor.u32 %v768, 2147483648
    %v770 = vmul.f32 %v769, 1.442695
    %v771 = vpow.pop %v770
    %v772 = vadd.f32 %v771, 1.0
    %v773 = vrcp.pop %v772
    %v774 = vmul.f32 1.0, %v773
    %v775 = vld [vmem:[#allocation3] sm:$0xff]
    %v776 = vadd.f32 %v775, %v678
    %v777 = vxor.u32 %v776, 2147483648
    %v778 = vmul.f32 %v777, 1.442695
    %v779 = vpow.pop %v778
    %v780 = vadd.f32 %v779, 1.0
    %v781 = vrcp.pop %v780
    %v782 = vmul.f32 1.0, %v781
    %v783 = vld [vmem:[#allocation4] sm:$0xff]
    %v784 = vmul.f32 %v774, %v764
    %v785 = vadd.f32 %v783, %v784
    %v786 = vtanh.pop %v785
    %v787 = vsub.f32 1.0, %v782
    %v788 = vmul.f32 %v787, %v786
    %v789 = vmul.f32 %v782, 0.0
    %v790 = vadd.f32 %v788, %v789
    %791 = vst [vmem:[#allocation14] sm:$0xff] %v790
    %v792 = vld [vmem:[#allocation5] sm:$0xff]
    %v793 = vld [vmem:[#allocation5 + $0x8] sm:$0xff]
    %v794 = vld [vmem:[#allocation5 + $0x10] sm:$0xff]
    %v795 = vld [vmem:[#allocation5 + $0x18] sm:$0xff]
    %v796 = vld [vmem:[#allocation5 + $0x20] sm:$0xff]
    %v797 = vld [vmem:[#allocation5 + $0x28] sm:$0xff]
    %v798 = vld [vmem:[#allocation5 + $0x30] sm:$0xff]
    %v799 = vld [vmem:[#allocation5 + $0x38] sm:$0xff]
    %v800 = vld [vmem:[#allocation5 + $0x40] sm:$0xff]
    %v801 = vld [vmem:[#allocation5 + $0x48] sm:$0xff]
    %v802 = vld [vmem:[#allocation5 + $0x50] sm:$0xff]
    %v803 = vld [vmem:[#allocation5 + $0x58] sm:$0xff]
    %v804 = vld [vmem:[#allocation5 + $0x60] sm:$0xff]
    %v805 = vld [vmem:[#allocation5 + $0x68] sm:$0xff]
    %v806 = vld [vmem:[#allocation5 + $0x70] sm:$0xff]
    %v807 = vld [vmem:[#allocation5 + $0x78] sm:$0xff]
    %808 = vmatprep.subr.mxu0 0.0
    %809 = vmatpush1.msra.mxu0 %v792
    %810 = vmatprep.subr.mxu0 0.0
    %811 = vmatpush1.msra.mxu0 %v793
    %812 = vmatprep.subr.mxu0 0.0
    %813 = vmatpush1.msra.mxu0 %v794
    %814 = vmatprep.subr.mxu0 0.0
    %815 = vmatpush1.msra.mxu0 %v795
    %816 = vmatprep.subr.mxu0 0.0
    %817 = vmatpush1.msra.mxu0 %v796
    %818 = vmatprep.subr.mxu0 0.0
    %819 = vmatpush1.msra.mxu0 %v797
    %820 = vmatprep.subr.mxu0 0.0
    %821 = vmatpush1.msra.mxu0 %v798
    %822 = vmatprep.subr.mxu0 0.0
    %823 = vmatpush1.msra.mxu0 %v799
    %824 = vmatprep.subr.mxu0 0.0
    %825 = vmatpush1.msra.mxu0 %v800
    %826 = vmatprep.subr.mxu0 0.0
    %827 = vmatpush1.msra.mxu0 %v801
    %828 = vmatprep.subr.mxu0 0.0
    %829 = vmatpush1.msra.mxu0 %v802
    %830 = vmatprep.subr.mxu0 0.0
    %831 = vmatpush1.msra.mxu0 %v803
    %832 = vmatprep.subr.mxu0 0.0
    %833 = vmatpush1.msra.mxu0 %v804
    %834 = vmatprep.subr.mxu0 0.0
    %835 = vmatpush1.msra.mxu0 %v805
    %836 = vmatprep.subr.mxu0 0.0
    %837 = vmatpush1.msra.mxu0 %v806
    %838 = vmatprep.subr.mxu0 0.0
    %839 = vmatpush1.msra.mxu0 %v807
    %840 = vmatprep.subr.mxu0 0.0
    %841 = vmatpush1.msra.mxu0 0.0
    %842 = vmatprep.subr.mxu0 0.0
    %843 = vmatpush1.msra.mxu0 0.0
    %844 = vmatprep.subr.mxu0 0.0
    %845 = vmatpush1.msra.mxu0 0.0
    %846 = vmatprep.subr.mxu0 0.0
    %847 = vmatpush1.msra.mxu0 0.0
    %848 = vmatprep.subr.mxu0 0.0
    %849 = vmatpush1.msra.mxu0 0.0
    %850 = vmatprep.subr.mxu0 0.0
    %851 = vmatpush1.msra.mxu0 0.0
    %852 = vmatprep.subr.mxu0 0.0
    %853 = vmatpush1.msra.mxu0 0.0
    %854 = vmatprep.subr.mxu0 0.0
    %855 = vmatpush1.msra.mxu0 0.0
    %856 = vmatprep.subr.mxu0 0.0
    %857 = vmatpush1.msra.mxu0 0.0
    %858 = vmatprep.subr.mxu0 0.0
    %859 = vmatpush1.msra.mxu0 0.0
    %860 = vmatprep.subr.mxu0 0.0
    %861 = vmatpush1.msra.mxu0 0.0
    %862 = vmatprep.subr.mxu0 0.0
    %863 = vmatpush1.msra.mxu0 0.0
    %864 = vmatprep.subr.mxu0 0.0
    %865 = vmatpush1.msra.mxu0 0.0
    %866 = vmatprep.subr.mxu0 0.0
    %867 = vmatpush1.msra.mxu0 0.0
    %868 = vmatprep.subr.mxu0 0.0
    %869 = vmatpush1.msra.mxu0 0.0
    %870 = vmatprep.subr.mxu0 0.0
    %871 = vmatpush1.msra.mxu0 0.0
    %872 = vmatprep.mubr.f32.mxu0 0.0
    %873 = vmatmul.mubr.f32.gmra.mrb[0].mxu0 %v790
    %v874 = vpop.f32.mrb[0].mxu0
    %v875 = vadd.f32 0.0, %v874
    %v876 = vpop.f32.mrb[0].mxu0
    %877 = vdwg.mxu0
    %v878 = vld [vmem:[#allocation8] sm:$0xff]
    %v879 = vld [vmem:[#allocation8 + $0x8] sm:$0xff]
    %v880 = vld [vmem:[#allocation8 + $0x10] sm:$0xff]
    %v881 = vld [vmem:[#allocation8 + $0x18] sm:$0xff]
    %v882 = vld [vmem:[#allocation8 + $0x20] sm:$0xff]
    %v883 = vld [vmem:[#allocation8 + $0x28] sm:$0xff]
    %v884 = vld [vmem:[#allocation8 + $0x30] sm:$0xff]
    %v885 = vld [vmem:[#allocation8 + $0x38] sm:$0xff]
    %v886 = vld [vmem:[#allocation8 + $0x40] sm:$0xff]
    %v887 = vld [vmem:[#allocation8 + $0x48] sm:$0xff]
    %v888 = vld [vmem:[#allocation8 + $0x50] sm:$0xff]
    %v889 = vld [vmem:[#allocation8 + $0x58] sm:$0xff]
    %v890 = vld [vmem:[#allocation8 + $0x60] sm:$0xff]
    %v891 = vld [vmem:[#allocation8 + $0x68] sm:$0xff]
    %v892 = vld [vmem:[#allocation8 + $0x70] sm:$0xff]
    %v893 = vld [vmem:[#allocation8 + $0x78] sm:$0xff]
    %894 = vmatprep.subr.mxu0 0.0
    %895 = vmatpush1.msra.mxu0 %v878
    %896 = vmatprep.subr.mxu0 0.0
    %897 = vmatpush1.msra.mxu0 %v879
    %898 = vmatprep.subr.mxu0 0.0
    %899 = vmatpush1.msra.mxu0 %v880
    %900 = vmatprep.subr.mxu0 0.0
    %901 = vmatpush1.msra.mxu0 %v881
    %902 = vmatprep.subr.mxu0 0.0
    %903 = vmatpush1.msra.mxu0 %v882
    %904 = vmatprep.subr.mxu0 0.0
    %905 = vmatpush1.msra.mxu0 %v883
    %906 = vmatprep.subr.mxu0 0.0
    %907 = vmatpush1.msra.mxu0 %v884
    %908 = vmatprep.subr.mxu0 0.0
    %909 = vmatpush1.msra.mxu0 %v885
    %910 = vmatprep.subr.mxu0 0.0
    %911 = vmatpush1.msra.mxu0 %v886
    %912 = vmatprep.subr.mxu0 0.0
    %913 = vmatpush1.msra.mxu0 %v887
    %914 = vmatprep.subr.mxu0 0.0
    %915 = vmatpush1.msra.mxu0 %v888
    %916 = vmatprep.subr.mxu0 0.0
    %917 = vmatpush1.msra.mxu0 %v889
    %918 = vmatprep.subr.mxu0 0.0
    %919 = vmatpush1.msra.mxu0 %v890
    %920 = vmatprep.subr.mxu0 0.0
    %921 = vmatpush1.msra.mxu0 %v891
    %922 = vmatprep.subr.mxu0 0.0
    %923 = vmatpush1.msra.mxu0 %v892
    %924 = vmatprep.subr.mxu0 0.0
    %925 = vmatpush1.msra.mxu0 %v893
    %926 = vmatprep.subr.mxu0 0.0
    %927 = vmatpush1.msra.mxu0 0.0
    %928 = vmatprep.subr.mxu0 0.0
    %929 = vmatpush1.msra.mxu0 0.0
    %930 = vmatprep.subr.mxu0 0.0
    %931 = vmatpush1.msra.mxu0 0.0
    %932 = vmatprep.subr.mxu0 0.0
    %933 = vmatpush1.msra.mxu0 0.0
    %934 = vmatprep.subr.mxu0 0.0
    %935 = vmatpush1.msra.mxu0 0.0
    %936 = vmatprep.subr.mxu0 0.0
    %937 = vmatpush1.msra.mxu0 0.0
    %938 = vmatprep.subr.mxu0 0.0
    %939 = vmatpush1.msra.mxu0 0.0
    %940 = vmatprep.subr.mxu0 0.0
    %941 = vmatpush1.msra.mxu0 0.0
    %942 = vmatprep.subr.mxu0 0.0
    %943 = vmatpush1.msra.mxu0 0.0
    %944 = vmatprep.subr.mxu0 0.0
    %945 = vmatpush1.msra.mxu0 0.0
    %946 = vmatprep.subr.mxu0 0.0
    %947 = vmatpush1.msra.mxu0 0.0
    %948 = vmatprep.subr.mxu0 0.0
    %949 = vmatpush1.msra.mxu0 0.0
    %950 = vmatprep.subr.mxu0 0.0
    %951 = vmatpush1.msra.mxu0 0.0
    %952 = vmatprep.subr.mxu0 0.0
    %953 = vmatpush1.msra.mxu0 0.0
    %954 = vmatprep.subr.mxu0 0.0
    %955 = vmatpush1.msra.mxu0 0.0
    %956 = vmatprep.subr.mxu0 0.0
    %957 = vmatpush1.msra.mxu0 0.0
    %958 = vmatprep.mubr.f32.mxu0 0.0
    %959 = vmatmul.mubr.f32.gmra.mrb[0].mxu0 %v790
    %v960 = vpop.f32.mrb[0].mxu0
    %v961 = vadd.f32 0.0, %v960
    %v962 = vpop.f32.mrb[0].mxu0
    %963 = vdwg.mxu0
    %v964 = vld [vmem:[#allocation10] sm:$0xff]
    %v965 = vld [vmem:[#allocation10 + $0x8] sm:$0xff]
    %v966 = vld [vmem:[#allocation10 + $0x10] sm:$0xff]
    %v967 = vld [vmem:[#allocation10 + $0x18] sm:$0xff]
    %v968 = vld [vmem:[#allocation10 + $0x20] sm:$0xff]
    %v969 = vld [vmem:[#allocation10 + $0x28] sm:$0xff]
    %v970 = vld [vmem:[#allocation10 + $0x30] sm:$0xff]
    %v971 = vld [vmem:[#allocation10 + $0x38] sm:$0xff]
    %v972 = vld [vmem:[#allocation10 + $0x40] sm:$0xff]
    %v973 = vld [vmem:[#allocation10 + $0x48] sm:$0xff]
    %v974 = vld [vmem:[#allocation10 + $0x50] sm:$0xff]
    %v975 = vld [vmem:[#allocation10 + $0x58] sm:$0xff]
    %v976 = vld [vmem:[#allocation10 + $0x60] sm:$0xff]
    %v977 = vld [vmem:[#allocation10 + $0x68] sm:$0xff]
    %v978 = vld [vmem:[#allocation10 + $0x70] sm:$0xff]
    %v979 = vld [vmem:[#allocation10 + $0x78] sm:$0xff]
    %980 = vmatprep.subr.mxu0 0.0
    %981 = vmatpush1.msra.mxu0 %v964
    %982 = vmatprep.subr.mxu0 0.0
    %983 = vmatpush1.msra.mxu0 %v965
    %984 = vmatprep.subr.mxu0 0.0
    %985 = vmatpush1.msra.mxu0 %v966
    %986 = vmatprep.subr.mxu0 0.0
    %987 = vmatpush1.msra.mxu0 %v967
    %988 = vmatprep.subr.mxu0 0.0
    %989 = vmatpush1.msra.mxu0 %v968
    %990 = vmatprep.subr.mxu0 0.0
    %991 = vmatpush1.msra.mxu0 %v969
    %992 = vmatprep.subr.mxu0 0.0
    %993 = vmatpush1.msra.mxu0 %v970
    %994 = vmatprep.subr.mxu0 0.0
    %995 = vmatpush1.msra.mxu0 %v971
    %996 = vmatprep.subr.mxu0 0.0
    %997 = vmatpush1.msra.mxu0 %v972
    %998 = vmatprep.subr.mxu0 0.0
    %999 = vmatpush1.msra.mxu0 %v973
    %1000 = vmatprep.subr.mxu0 0.0
    %1001 = vmatpush1.msra.mxu0 %v974
    %1002 = vmatprep.subr.mxu0 0.0
    %1003 = vmatpush1.msra.mxu0 %v975
    %1004 = vmatprep.subr.mxu0 0.0
    %1005 = vmatpush1.msra.mxu0 %v976
    %1006 = vmatprep.subr.mxu0 0.0
    %1007 = vmatpush1.msra.mxu0 %v977
    %1008 = vmatprep.subr.mxu0 0.0
    %1009 = vmatpush1.msra.mxu0 %v978
    %1010 = vmatprep.subr.mxu0 0.0
    %1011 = vmatpush1.msra.mxu0 %v979
    %1012 = vmatprep.subr.mxu0 0.0
    %1013 = vmatpush1.msra.mxu0 0.0
    %1014 = vmatprep.subr.mxu0 0.0
    %1015 = vmatpush1.msra.mxu0 0.0
    %1016 = vmatprep.subr.mxu0 0.0
    %1017 = vmatpush1.msra.mxu0 0.0
    %1018 = vmatprep.subr.mxu0 0.0
    %1019 = vmatpush1.msra.mxu0 0.0
    %1020 = vmatprep.subr.mxu0 0.0
    %1021 = vmatpush1.msra.mxu0 0.0
    %1022 = vmatprep.subr.mxu0 0.0
    %1023 = vmatpush1.msra.mxu0 0.0
    %1024 = vmatprep.subr.mxu0 0.0
    %1025 = vmatpush1.msra.mxu0 0.0
    %1026 = vmatprep.subr.mxu0 0.0
    %1027 = vmatpush1.msra.mxu0 0.0
    %1028 = vmatprep.subr.mxu0 0.0
    %1029 = vmatpush1.msra.mxu0 0.0
    %1030 = vmatprep.subr.mxu0 0.0
    %1031 = vmatpush1.msra.mxu0 0.0
    %1032 = vmatprep.subr.mxu0 0.0
    %1033 = vmatpush1.msra.mxu0 0.0
    %1034 = vmatprep.subr.mxu0 0.0
    %1035 = vmatpush1.msra.mxu0 0.0
    %1036 = vmatprep.subr.mxu0 0.0
    %1037 = vmatpush1.msra.mxu0 0.0
    %1038 = vmatprep.subr.mxu0 0.0
    %1039 = vmatpush1.msra.mxu0 0.0
    %1040 = vmatprep.subr.mxu0 0.0
    %1041 = vmatpush1.msra.mxu0 0.0
    %1042 = vmatprep.subr.mxu0 0.0
    %1043 = vmatpush1.msra.mxu0 0.0
    %1044 = vmatprep.mubr.f32.mxu0 0.0
    %1045 = vmatmul.mubr.f32.gmra.mrb[0].mxu0 %v790
    %v1046 = vpop.f32.mrb[0].mxu0
    %v1047 = vadd.f32 %v507, %v1046
    %v1048 = vpop.f32.mrb[0].mxu0
    %1049 = vdwg.mxu0
    %s1050 = scalar_lea.vmem [#allocation2], 8
    %v1051 = vld [vmem:[%s1050] sm:$0xff]
    %v1052 = vadd.f32 %v1051, %v875
    %v1053 = vxor.u32 %v1052, 2147483648
    %v1054 = vmul.f32 %v1053, 1.442695
    %v1055 = vpow.pop %v1054
    %v1056 = vadd.f32 %v1055, 1.0
    %v1057 = vrcp.pop %v1056
    %v1058 = vmul.f32 1.0, %v1057
    %s1059 = scalar_lea.vmem [#allocation3], 8
    %v1060 = vld [vmem:[%s1059] sm:$0xff]
    %v1061 = vadd.f32 %v1060, %v961
    %v1062 = vxor.u32 %v1061, 2147483648
    %v1063 = vmul.f32 %v1062, 1.442695
    %v1064 = vpow.pop %v1063
    %v1065 = vadd.f32 %v1064, 1.0
    %v1066 = vrcp.pop %v1065
    %v1067 = vmul.f32 1.0, %v1066
    %s1068 = scalar_lea.vmem [#allocation4], 8
    %v1069 = vld [vmem:[%s1068] sm:$0xff]
    %v1070 = vmul.f32 %v1058, %v1047
    %v1071 = vadd.f32 %v1069, %v1070
    %v1072 = vtanh.pop %v1071
    %v1073 = vsub.f32 1.0, %v1067
    %v1074 = vmul.f32 %v1073, %v1072
    %v1075 = vmul.f32 %v1067, %v790
    %v1076 = vadd.f32 %v1074, %v1075
    %s1077 = scalar_lea.vmem [#allocation14], 8
    %1078 = vst [vmem:[%s1077] sm:$0xff] %v1076
    %v1079 = vld [vmem:[#allocation5] sm:$0xff]
    %v1080 = vld [vmem:[#allocation5 + $0x8] sm:$0xff]
    %v1081 = vld [vmem:[#allocation5 + $0x10] sm:$0xff]
    %v1082 = vld [vmem:[#allocation5 + $0x18] sm:$0xff]
    %v1083 = vld [vmem:[#allocation5 + $0x20] sm:$0xff]
    %v1084 = vld [vmem:[#allocation5 + $0x28] sm:$0xff]
    %v1085 = vld [vmem:[#allocation5 + $0x30] sm:$0xff]
    %v1086 = vld [vmem:[#allocation5 + $0x38] sm:$0xff]
    %v1087 = vld [vmem:[#allocation5 + $0x40] sm:$0xff]
    %v1088 = vld [vmem:[#allocation5 + $0x48] sm:$0xff]
    %v1089 = vld [vmem:[#allocation5 + $0x50] sm:$0xff]
    %v1090 = vld [vmem:[#allocation5 + $0x58] sm:$0xff]
    %v1091 = vld [vmem:[#allocation5 + $0x60] sm:$0xff]
    %v1092 = vld [vmem:[#allocation5 + $0x68] sm:$0xff]
    %v1093 = vld [vmem:[#allocation5 + $0x70] sm:$0xff]
    %v1094 = vld [vmem:[#allocation5 + $0x78] sm:$0xff]
    %1095 = vmatprep.subr.mxu0 0.0
    %1096 = vmatpush1.msra.mxu0 %v1079
    %1097 = vmatprep.subr.mxu0 0.0
    %1098 = vmatpush1.msra.mxu0 %v1080
    %1099 = vmatprep.subr.mxu0 0.0
    %1100 = vmatpush1.msra.mxu0 %v1081
    %1101 = vmatprep.subr.mxu0 0.0
    %1102 = vmatpush1.msra.mxu0 %v1082
    %1103 = vmatprep.subr.mxu0 0.0
    %1104 = vmatpush1.msra.mxu0 %v1083
    %1105 = vmatprep.subr.mxu0 0.0
    %1106 = vmatpush1.msra.mxu0 %v1084
    %1107 = vmatprep.subr.mxu0 0.0
    %1108 = vmatpush1.msra.mxu0 %v1085
    %1109 = vmatprep.subr.mxu0 0.0
    %1110 = vmatpush1.msra.mxu0 %v1086
    %1111 = vmatprep.subr.mxu0 0.0
    %1112 = vmatpush1.msra.mxu0 %v1087
    %1113 = vmatprep.subr.mxu0 0.0
    %1114 = vmatpush1.msra.mxu0 %v1088
    %1115 = vmatprep.subr.mxu0 0.0
    %1116 = vmatpush1.msra.mxu0 %v1089
    %1117 = vmatprep.subr.mxu0 0.0
    %1118 = vmatpush1.msra.mxu0 %v1090
    %1119 = vmatprep.subr.mxu0 0.0
    %1120 = vmatpush1.msra.mxu0 %v1091
    %1121 = vmatprep.subr.mxu0 0.0
    %1122 = vmatpush1.msra.mxu0 %v1092
    %1123 = vmatprep.subr.mxu0 0.0
    %1124 = vmatpush1.msra.mxu0 %v1093
    %1125 = vmatprep.subr.mxu0 0.0
    %1126 = vmatpush1.msra.mxu0 %v1094
    %1127 = vmatprep.subr.mxu0 0.0
    %1128 = vmatpush1.msra.mxu0 0.0
    %1129 = vmatprep.subr.mxu0 0.0
    %1130 = vmatpush1.msra.mxu0 0.0
    %1131 = vmatprep.subr.mxu0 0.0
    %1132 = vmatpush1.msra.mxu0 0.0
    %1133 = vmatprep.subr.mxu0 0.0
    %1134 = vmatpush1.msra.mxu0 0.0
    %1135 = vmatprep.subr.mxu0 0.0
    %1136 = vmatpush1.msra.mxu0 0.0
    %1137 = vmatprep.subr.mxu0 0.0
    %1138 = vmatpush1.msra.mxu0 0.0
    %1139 = vmatprep.subr.mxu0 0.0
    %1140 = vmatpush1.msra.mxu0 0.0
    %1141 = vmatprep.subr.mxu0 0.0
    %1142 = vmatpush1.msra.mxu0 0.0
    %1143 = vmatprep.subr.mxu0 0.0
    %1144 = vmatpush1.msra.mxu0 0.0
    %1145 = vmatprep.subr.mxu0 0.0
    %1146 = vmatpush1.msra.mxu0 0.0
    %1147 = vmatprep.subr.mxu0 0.0
    %1148 = vmatpush1.msra.mxu0 0.0
    %1149 = vmatprep.subr.mxu0 0.0
    %1150 = vmatpush1.msra.mxu0 0.0
    %1151 = vmatprep.subr.mxu0 0.0
    %1152 = vmatpush1.msra.mxu0 0.0
    %1153 = vmatprep.subr.mxu0 0.0
    %1154 = vmatpush1.msra.mxu0 0.0
    %1155 = vmatprep.subr.mxu0 0.0
    %1156 = vmatpush1.msra.mxu0 0.0
    %1157 = vmatprep.subr.mxu0 0.0
    %1158 = vmatpush1.msra.mxu0 0.0
    %1159 = vmatprep.mubr.f32.mxu0 0.0
    %1160 = vmatmul.mubr.f32.gmra.mrb[0].mxu0 %v1076
    %v1161 = vpop.f32.mrb[0].mxu0
    %v1162 = vadd.f32 0.0, %v1161
    %v1163 = vpop.f32.mrb[0].mxu0
    %1164 = vdwg.mxu0
    %v1165 = vld [vmem:[#allocation8] sm:$0xff]
    %v1166 = vld [vmem:[#allocation8 + $0x8] sm:$0xff]
    %v1167 = vld [vmem:[#allocation8 + $0x10] sm:$0xff]
    %v1168 = vld [vmem:[#allocation8 + $0x18] sm:$0xff]
    %v1169 = vld [vmem:[#allocation8 + $0x20] sm:$0xff]
    %v1170 = vld [vmem:[#allocation8 + $0x28] sm:$0xff]
    %v1171 = vld [vmem:[#allocation8 + $0x30] sm:$0xff]
    %v1172 = vld [vmem:[#allocation8 + $0x38] sm:$0xff]
    %v1173 = vld [vmem:[#allocation8 + $0x40] sm:$0xff]
    %v1174 = vld [vmem:[#allocation8 + $0x48] sm:$0xff]
    %v1175 = vld [vmem:[#allocation8 + $0x50] sm:$0xff]
    %v1176 = vld [vmem:[#allocation8 + $0x58] sm:$0xff]
    %v1177 = vld [vmem:[#allocation8 + $0x60] sm:$0xff]
    %v1178 = vld [vmem:[#allocation8 + $0x68] sm:$0xff]
    %v1179 = vld [vmem:[#allocation8 + $0x70] sm:$0xff]
    %v1180 = vld [vmem:[#allocation8 + $0x78] sm:$0xff]
    %1181 = vmatprep.subr.mxu0 0.0
    %1182 = vmatpush1.msra.mxu0 %v1165
    %1183 = vmatprep.subr.mxu0 0.0
    %1184 = vmatpush1.msra.mxu0 %v1166
    %1185 = vmatprep.subr.mxu0 0.0
    %1186 = vmatpush1.msra.mxu0 %v1167
    %1187 = vmatprep.subr.mxu0 0.0
    %1188 = vmatpush1.msra.mxu0 %v1168
    %1189 = vmatprep.subr.mxu0 0.0
    %1190 = vmatpush1.msra.mxu0 %v1169
    %1191 = vmatprep.subr.mxu0 0.0
    %1192 = vmatpush1.msra.mxu0 %v1170
    %1193 = vmatprep.subr.mxu0 0.0
    %1194 = vmatpush1.msra.mxu0 %v1171
    %1195 = vmatprep.subr.mxu0 0.0
    %1196 = vmatpush1.msra.mxu0 %v1172
    %1197 = vmatprep.subr.mxu0 0.0
    %1198 = vmatpush1.msra.mxu0 %v1173
    %1199 = vmatprep.subr.mxu0 0.0
    %1200 = vmatpush1.msra.mxu0 %v1174
    %1201 = vmatprep.subr.mxu0 0.0
    %1202 = vmatpush1.msra.mxu0 %v1175
    %1203 = vmatprep.subr.mxu0 0.0
    %1204 = vmatpush1.msra.mxu0 %v1176
    %1205 = vmatprep.subr.mxu0 0.0
    %1206 = vmatpush1.msra.mxu0 %v1177
    %1207 = vmatprep.subr.mxu0 0.0
    %1208 = vmatpush1.msra.mxu0 %v1178
    %1209 = vmatprep.subr.mxu0 0.0
    %1210 = vmatpush1.msra.mxu0 %v1179
    %1211 = vmatprep.subr.mxu0 0.0
    %1212 = vmatpush1.msra.mxu0 %v1180
    %1213 = vmatprep.subr.mxu0 0.0
    %1214 = vmatpush1.msra.mxu0 0.0
    %1215 = vmatprep.subr.mxu0 0.0
    %1216 = vmatpush1.msra.mxu0 0.0
    %1217 = vmatprep.subr.mxu0 0.0
    %1218 = vmatpush1.msra.mxu0 0.0
    %1219 = vmatprep.subr.mxu0 0.0
    %1220 = vmatpush1.msra.mxu0 0.0
    %1221 = vmatprep.subr.mxu0 0.0
    %1222 = vmatpush1.msra.mxu0 0.0
    %1223 = vmatprep.subr.mxu0 0.0
    %1224 = vmatpush1.msra.mxu0 0.0
    %1225 = vmatprep.subr.mxu0 0.0
    %1226 = vmatpush1.msra.mxu0 0.0
    %1227 = vmatprep.subr.mxu0 0.0
    %1228 = vmatpush1.msra.mxu0 0.0
    %1229 = vmatprep.subr.mxu0 0.0
    %1230 = vmatpush1.msra.mxu0 0.0
    %1231 = vmatprep.subr.mxu0 0.0
    %1232 = vmatpush1.msra.mxu0 0.0
    %1233 = vmatprep.subr.mxu0 0.0
    %1234 = vmatpush1.msra.mxu0 0.0
    %1235 = vmatprep.subr.mxu0 0.0
    %1236 = vmatpush1.msra.mxu0 0.0
    %1237 = vmatprep.subr.mxu0 0.0
    %1238 = vmatpush1.msra.mxu0 0.0
    %1239 = vmatprep.subr.mxu0 0.0
    %1240 = vmatpush1.msra.mxu0 0.0
    %1241 = vmatprep.subr.mxu0 0.0
    %1242 = vmatpush1.msra.mxu0 0.0
    %1243 = vmatprep.subr.mxu0 0.0
    %1244 = vmatpush1.msra.mxu0 0.0
    %1245 = vmatprep.mubr.f32.mxu0 0.0
    %1246 = vmatmul.mubr.f32.gmra.mrb[0].mxu0 %v1076
    %v1247 = vpop.f32.mrb[0].mxu0
    %v1248 = vadd.f32 0.0, %v1247
    %v1249 = vpop.f32.mrb[0].mxu0
    %1250 = vdwg.mxu0
    %v1251 = vld [vmem:[#allocation10] sm:$0xff]
    %v1252 = vld [vmem:[#allocation10 + $0x8] sm:$0xff]
    %v1253 = vld [vmem:[#allocation10 + $0x10] sm:$0xff]
    %v1254 = vld [vmem:[#allocation10 + $0x18] sm:$0xff]
    %v1255 = vld [vmem:[#allocation10 + $0x20] sm:$0xff]
    %v1256 = vld [vmem:[#allocation10 + $0x28] sm:$0xff]
    %v1257 = vld [vmem:[#allocation10 + $0x30] sm:$0xff]
    %v1258 = vld [vmem:[#allocation10 + $0x38] sm:$0xff]
    %v1259 = vld [vmem:[#allocation10 + $0x40] sm:$0xff]
    %v1260 = vld [vmem:[#allocation10 + $0x48] sm:$0xff]
    %v1261 = vld [vmem:[#allocation10 + $0x50] sm:$0xff]
    %v1262 = vld [vmem:[#allocation10 + $0x58] sm:$0xff]
    %v1263 = vld [vmem:[#allocation10 + $0x60] sm:$0xff]
    %v1264 = vld [vmem:[#allocation10 + $0x68] sm:$0xff]
    %v1265 = vld [vmem:[#allocation10 + $0x70] sm:$0xff]
    %v1266 = vld [vmem:[#allocation10 + $0x78] sm:$0xff]
    %1267 = vmatprep.subr.mxu0 0.0
    %1268 = vmatpush1.msra.mxu0 %v1251
    %1269 = vmatprep.subr.mxu0 0.0
    %1270 = vmatpush1.msra.mxu0 %v1252
    %1271 = vmatprep.subr.mxu0 0.0
    %1272 = vmatpush1.msra.mxu0 %v1253
    %1273 = vmatprep.subr.mxu0 0.0
    %1274 = vmatpush1.msra.mxu0 %v1254
    %1275 = vmatprep.subr.mxu0 0.0
    %1276 = vmatpush1.msra.mxu0 %v1255
    %1277 = vmatprep.subr.mxu0 0.0
    %1278 = vmatpush1.msra.mxu0 %v1256
    %1279 = vmatprep.subr.mxu0 0.0
    %1280 = vmatpush1.msra.mxu0 %v1257
    %1281 = vmatprep.subr.mxu0 0.0
    %1282 = vmatpush1.msra.mxu0 %v1258
    %1283 = vmatprep.subr.mxu0 0.0
    %1284 = vmatpush1.msra.mxu0 %v1259
    %1285 = vmatprep.subr.mxu0 0.0
    %1286 = vmatpush1.msra.mxu0 %v1260
    %1287 = vmatprep.subr.mxu0 0.0
    %1288 = vmatpush1.msra.mxu0 %v1261
    %1289 = vmatprep.subr.mxu0 0.0
    %1290 = vmatpush1.msra.mxu0 %v1262
    %1291 = vmatprep.subr.mxu0 0.0
    %1292 = vmatpush1.msra.mxu0 %v1263
    %1293 = vmatprep.subr.mxu0 0.0
    %1294 = vmatpush1.msra.mxu0 %v1264
    %1295 = vmatprep.subr.mxu0 0.0
    %1296 = vmatpush1.msra.mxu0 %v1265
    %1297 = vmatprep.subr.mxu0 0.0
    %1298 = vmatpush1.msra.mxu0 %v1266
    %1299 = vmatprep.subr.mxu0 0.0
    %1300 = vmatpush1.msra.mxu0 0.0
    %1301 = vmatprep.subr.mxu0 0.0
    %1302 = vmatpush1.msra.mxu0 0.0
    %1303 = vmatprep.subr.mxu0 0.0
    %1304 = vmatpush1.msra.mxu0 0.0
    %1305 = vmatprep.subr.mxu0 0.0
    %1306 = vmatpush1.msra.mxu0 0.0
    %1307 = vmatprep.subr.mxu0 0.0
    %1308 = vmatpush1.msra.mxu0 0.0
    %1309 = vmatprep.subr.mxu0 0.0
    %1310 = vmatpush1.msra.mxu0 0.0
    %1311 = vmatprep.subr.mxu0 0.0
    %1312 = vmatpush1.msra.mxu0 0.0
    %1313 = vmatprep.subr.mxu0 0.0
    %1314 = vmatpush1.msra.mxu0 0.0
    %1315 = vmatprep.subr.mxu0 0.0
    %1316 = vmatpush1.msra.mxu0 0.0
    %1317 = vmatprep.subr.mxu0 0.0
    %1318 = vmatpush1.msra.mxu0 0.0
    %1319 = vmatprep.subr.mxu0 0.0
    %1320 = vmatpush1.msra.mxu0 0.0
    %1321 = vmatprep.subr.mxu0 0.0
    %1322 = vmatpush1.msra.mxu0 0.0
    %1323 = vmatprep.subr.mxu0 0.0
    %1324 = vmatpush1.msra.mxu0 0.0
    %1325 = vmatprep.subr.mxu0 0.0
    %1326 = vmatpush1.msra.mxu0 0.0
    %1327 = vmatprep.subr.mxu0 0.0
    %1328 = vmatpush1.msra.mxu0 0.0
    %1329 = vmatprep.subr.mxu0 0.0
    %1330 = vmatpush1.msra.mxu0 0.0
    %1331 = vmatprep.mubr.f32.mxu0 0.0
    %1332 = vmatmul.mubr.f32.gmra.mrb[0].mxu0 %v1076
    %v1333 = vpop.f32.mrb[0].mxu0
    %v1334 = vadd.f32 %v507, %v1333
    %v1335 = vpop.f32.mrb[0].mxu0
    %1336 = vdwg.mxu0
    %s1337 = scalar_lea.vmem [#allocation2], 16
    %v1338 = vld [vmem:[%s1337] sm:$0xff]
    %v1339 = vadd.f32 %v1338, %v1162
    %v1340 = vxor.u32 %v1339, 2147483648
    %v1341 = vmul.f32 %v1340, 1.442695
    %v1342 = vpow.pop %v1341
    %v1343 = vadd.f32 %v1342, 1.0
    %v1344 = vrcp.pop %v1343
    %v1345 = vmul.f32 1.0, %v1344
    %s1346 = scalar_lea.vmem [#allocation3], 16
    %v1347 = vld [vmem:[%s1346] sm:$0xff]
    %v1348 = vadd.f32 %v1347, %v1248
    %v1349 = vxor.u32 %v1348, 2147483648
    %v1350 = vmul.f32 %v1349, 1.442695
    %v1351 = vpow.pop %v1350
    %v1352 = vadd.f32 %v1351, 1.0
    %v1353 = vrcp.pop %v1352
    %v1354 = vmul.f32 1.0, %v1353
    %s1355 = scalar_lea.vmem [#allocation4], 16
    %v1356 = vld [vmem:[%s1355] sm:$0xff]
    %v1357 = vmul.f32 %v1345, %v1334
    %v1358 = vadd.f32 %v1356, %v1357
    %v1359 = vtanh.pop %v1358
    %v1360 = vsub.f32 1.0, %v1354
    %v1361 = vmul.f32 %v1360, %v1359
    %v1362 = vmul.f32 %v1354, %v1076
    %v1363 = vadd.f32 %v1361, %v1362
    %s1364 = scalar_lea.vmem [#allocation14], 16
    %1365 = vst [vmem:[%s1364] sm:$0xff] %v1363
    %v1366 = vld [vmem:[#allocation5] sm:$0xff]
    %v1367 = vld [vmem:[#allocation5 + $0x8] sm:$0xff]
    %v1368 = vld [vmem:[#allocation5 + $0x10] sm:$0xff]
    %v1369 = vld [vmem:[#allocation5 + $0x18] sm:$0xff]
    %v1370 = vld [vmem:[#allocation5 + $0x20] sm:$0xff]
    %v1371 = vld [vmem:[#allocation5 + $0x28] sm:$0xff]
    %v1372 = vld [vmem:[#allocation5 + $0x30] sm:$0xff]
    %v1373 = vld [vmem:[#allocation5 + $0x38] sm:$0xff]
    %v1374 = vld [vmem:[#allocation5 + $0x40] sm:$0xff]
    %v1375 = vld [vmem:[#allocation5 + $0x48] sm:$0xff]
    %v1376 = vld [vmem:[#allocation5 + $0x50] sm:$0xff]
    %v1377 = vld [vmem:[#allocation5 + $0x58] sm:$0xff]
    %v1378 = vld [vmem:[#allocation5 + $0x60] sm:$0xff]
    %v1379 = vld [vmem:[#allocation5 + $0x68] sm:$0xff]
    %v1380 = vld [vmem:[#allocation5 + $0x70] sm:$0xff]
    %v1381 = vld [vmem:[#allocation5 + $0x78] sm:$0xff]
    %1382 = vmatprep.subr.mxu0 0.0
    %1383 = vmatpush1.msra.mxu0 %v1366
    %1384 = vmatprep.subr.mxu0 0.0
    %1385 = vmatpush1.msra.mxu0 %v1367
    %1386 = vmatprep.subr.mxu0 0.0
    %1387 = vmatpush1.msra.mxu0 %v1368
    %1388 = vmatprep.subr.mxu0 0.0
    %1389 = vmatpush1.msra.mxu0 %v1369
    %1390 = vmatprep.subr.mxu0 0.0
    %1391 = vmatpush1.msra.mxu0 %v1370
    %1392 = vmatprep.subr.mxu0 0.0
    %1393 = vmatpush1.msra.mxu0 %v1371
    %1394 = vmatprep.subr.mxu0 0.0
    %1395 = vmatpush1.msra.mxu0 %v1372
    %1396 = vmatprep.subr.mxu0 0.0
    %1397 = vmatpush1.msra.mxu0 %v1373
    %1398 = vmatprep.subr.mxu0 0.0
    %1399 = vmatpush1.msra.mxu0 %v1374
    %1400 = vmatprep.subr.mxu0 0.0
    %1401 = vmatpush1.msra.mxu0 %v1375
    %1402 = vmatprep.subr.mxu0 0.0
    %1403 = vmatpush1.msra.mxu0 %v1376
    %1404 = vmatprep.subr.mxu0 0.0
    %1405 = vmatpush1.msra.mxu0 %v1377
    %1406 = vmatprep.subr.mxu0 0.0
    %1407 = vmatpush1.msra.mxu0 %v1378
    %1408 = vmatprep.subr.mxu0 0.0
    %1409 = vmatpush1.msra.mxu0 %v1379
    %1410 = vmatprep.subr.mxu0 0.0
    %1411 = vmatpush1.msra.mxu0 %v1380
    %1412 = vmatprep.subr.mxu0 0.0
    %1413 = vmatpush1.msra.mxu0 %v1381
    %1414 = vmatprep.subr.mxu0 0.0
    %1415 = vmatpush1.msra.mxu0 0.0
    %1416 = vmatprep.subr.mxu0 0.0
    %1417 = vmatpush1.msra.mxu0 0.0
    %1418 = vmatprep.subr.mxu0 0.0
    %1419 = vmatpush1.msra.mxu0 0.0
    %1420 = vmatprep.subr.mxu0 0.0
    %1421 = vmatpush1.msra.mxu0 0.0
    %1422 = vmatprep.subr.mxu0 0.0
    %1423 = vmatpush1.msra.mxu0 0.0
    %1424 = vmatprep.subr.mxu0 0.0
    %1425 = vmatpush1.msra.mxu0 0.0
    %1426 = vmatprep.subr.mxu0 0.0
    %1427 = vmatpush1.msra.mxu0 0.0
    %1428 = vmatprep.subr.mxu0 0.0
    %1429 = vmatpush1.msra.mxu0 0.0
    %1430 = vmatprep.subr.mxu0 0.0
    %1431 = vmatpush1.msra.mxu0 0.0
    %1432 = vmatprep.subr.mxu0 0.0
    %1433 = vmatpush1.msra.mxu0 0.0
    %1434 = vmatprep.subr.mxu0 0.0
    %1435 = vmatpush1.msra.mxu0 0.0
    %1436 = vmatprep.subr.mxu0 0.0
    %1437 = vmatpush1.msra.mxu0 0.0
    %1438 = vmatprep.subr.mxu0 0.0
    %1439 = vmatpush1.msra.mxu0 0.0
    %1440 = vmatprep.subr.mxu0 0.0
    %1441 = vmatpush1.msra.mxu0 0.0
    %1442 = vmatprep.subr.mxu0 0.0
    %1443 = vmatpush1.msra.mxu0 0.0
    %1444 = vmatprep.subr.mxu0 0.0
    %1445 = vmatpush1.msra.mxu0 0.0
    %1446 = vmatprep.mubr.f32.mxu0 0.0
    %1447 = vmatmul.mubr.f32.gmra.mrb[0].mxu0 %v1363
    %v1448 = vpop.f32.mrb[0].mxu0
    %v1449 = vadd.f32 0.0, %v1448
    %v1450 = vpop.f32.mrb[0].mxu0
    %1451 = vdwg.mxu0
    %v1452 = vld [vmem:[#allocation8] sm:$0xff]
    %v1453 = vld [vmem:[#allocation8 + $0x8] sm:$0xff]
    %v1454 = vld [vmem:[#allocation8 + $0x10] sm:$0xff]
    %v1455 = vld [vmem:[#allocation8 + $0x18] sm:$0xff]
    %v1456 = vld [vmem:[#allocation8 + $0x20] sm:$0xff]
    %v1457 = vld [vmem:[#allocation8 + $0x28] sm:$0xff]
    %v1458 = vld [vmem:[#allocation8 + $0x30] sm:$0xff]
    %v1459 = vld [vmem:[#allocation8 + $0x38] sm:$0xff]
    %v1460 = vld [vmem:[#allocation8 + $0x40] sm:$0xff]
    %v1461 = vld [vmem:[#allocation8 + $0x48] sm:$0xff]
    %v1462 = vld [vmem:[#allocation8 + $0x50] sm:$0xff]
    %v1463 = vld [vmem:[#allocation8 + $0x58] sm:$0xff]
    %v1464 = vld [vmem:[#allocation8 + $0x60] sm:$0xff]
    %v1465 = vld [vmem:[#allocation8 + $0x68] sm:$0xff]
    %v1466 = vld [vmem:[#allocation8 + $0x70] sm:$0xff]
    %v1467 = vld [vmem:[#allocation8 + $0x78] sm:$0xff]
    %1468 = vmatprep.subr.mxu0 0.0
    %1469 = vmatpush1.msra.mxu0 %v1452
    %1470 = vmatprep.subr.mxu0 0.0
    %1471 = vmatpush1.msra.mxu0 %v1453
    %1472 = vmatprep.subr.mxu0 0.0
    %1473 = vmatpush1.msra.mxu0 %v1454
    %1474 = vmatprep.subr.mxu0 0.0
    %1475 = vmatpush1.msra.mxu0 %v1455
    %1476 = vmatprep.subr.mxu0 0.0
    %1477 = vmatpush1.msra.mxu0 %v1456
    %1478 = vmatprep.subr.mxu0 0.0
    %1479 = vmatpush1.msra.mxu0 %v1457
    %1480 = vmatprep.subr.mxu0 0.0
    %1481 = vmatpush1.msra.mxu0 %v1458
    %1482 = vmatprep.subr.mxu0 0.0
    %1483 = vmatpush1.msra.mxu0 %v1459
    %1484 = vmatprep.subr.mxu0 0.0
    %1485 = vmatpush1.msra.mxu0 %v1460
    %1486 = vmatprep.subr.mxu0 0.0
    %1487 = vmatpush1.msra.mxu0 %v1461
    %1488 = vmatprep.subr.mxu0 0.0
    %1489 = vmatpush1.msra.mxu0 %v1462
    %1490 = vmatprep.subr.mxu0 0.0
    %1491 = vmatpush1.msra.mxu0 %v1463
    %1492 = vmatprep.subr.mxu0 0.0
    %1493 = vmatpush1.msra.mxu0 %v1464
    %1494 = vmatprep.subr.mxu0 0.0
    %1495 = vmatpush1.msra.mxu0 %v1465
    %1496 = vmatprep.subr.mxu0 0.0
    %1497 = vmatpush1.msra.mxu0 %v1466
    %1498 = vmatprep.subr.mxu0 0.0
    %1499 = vmatpush1.msra.mxu0 %v1467
    %1500 = vmatprep.subr.mxu0 0.0
    %1501 = vmatpush1.msra.mxu0 0.0
    %1502 = vmatprep.subr.mxu0 0.0
    %1503 = vmatpush1.msra.mxu0 0.0
    %1504 = vmatprep.subr.mxu0 0.0
    %1505 = vmatpush1.msra.mxu0 0.0
    %1506 = vmatprep.subr.mxu0 0.0
    %1507 = vmatpush1.msra.mxu0 0.0
    %1508 = vmatprep.subr.mxu0 0.0
    %1509 = vmatpush1.msra.mxu0 0.0
    %1510 = vmatprep.subr.mxu0 0.0
    %1511 = vmatpush1.msra.mxu0 0.0
    %1512 = vmatprep.subr.mxu0 0.0
    %1513 = vmatpush1.msra.mxu0 0.0
    %1514 = vmatprep.subr.mxu0 0.0
    %1515 = vmatpush1.msra.mxu0 0.0
    %1516 = vmatprep.subr.mxu0 0.0
    %1517 = vmatpush1.msra.mxu0 0.0
    %1518 = vmatprep.subr.mxu0 0.0
    %1519 = vmatpush1.msra.mxu0 0.0
    %1520 = vmatprep.subr.mxu0 0.0
    %1521 = vmatpush1.msra.mxu0 0.0
    %1522 = vmatprep.subr.mxu0 0.0
    %1523 = vmatpush1.msra.mxu0 0.0
    %1524 = vmatprep.subr.mxu0 0.0
    %1525 = vmatpush1.msra.mxu0 0.0
    %1526 = vmatprep.subr.mxu0 0.0
    %1527 = vmatpush1.msra.mxu0 0.0
    %1528 = vmatprep.subr.mxu0 0.0
    %1529 = vmatpush1.msra.mxu0 0.0
    %1530 = vmatprep.subr.mxu0 0.0
    %1531 = vmatpush1.msra.mxu0 0.0
    %1532 = vmatprep.mubr.f32.mxu0 0.0
    %1533 = vmatmul.mubr.f32.gmra.mrb[0].mxu0 %v1363
    %v1534 = vpop.f32.mrb[0].mxu0
    %v1535 = vadd.f32 0.0, %v1534
    %v1536 = vpop.f32.mrb[0].mxu0
    %1537 = vdwg.mxu0
    %v1538 = vld [vmem:[#allocation10] sm:$0xff]
    %v1539 = vld [vmem:[#allocation10 + $0x8] sm:$0xff]
    %v1540 = vld [vmem:[#allocation10 + $0x10] sm:$0xff]
    %v1541 = vld [vmem:[#allocation10 + $0x18] sm:$0xff]
    %v1542 = vld [vmem:[#allocation10 + $0x20] sm:$0xff]
    %v1543 = vld [vmem:[#allocation10 + $0x28] sm:$0xff]
    %v1544 = vld [vmem:[#allocation10 + $0x30] sm:$0xff]
    %v1545 = vld [vmem:[#allocation10 + $0x38] sm:$0xff]
    %v1546 = vld [vmem:[#allocation10 + $0x40] sm:$0xff]
    %v1547 = vld [vmem:[#allocation10 + $0x48] sm:$0xff]
    %v1548 = vld [vmem:[#allocation10 + $0x50] sm:$0xff]
    %v1549 = vld [vmem:[#allocation10 + $0x58] sm:$0xff]
    %v1550 = vld [vmem:[#allocation10 + $0x60] sm:$0xff]
    %v1551 = vld [vmem:[#allocation10 + $0x68] sm:$0xff]
    %v1552 = vld [vmem:[#allocation10 + $0x70] sm:$0xff]
    %v1553 = vld [vmem:[#allocation10 + $0x78] sm:$0xff]
    %1554 = vmatprep.subr.mxu0 0.0
    %1555 = vmatpush1.msra.mxu0 %v1538
    %1556 = vmatprep.subr.mxu0 0.0
    %1557 = vmatpush1.msra.mxu0 %v1539
    %1558 = vmatprep.subr.mxu0 0.0
    %1559 = vmatpush1.msra.mxu0 %v1540
    %1560 = vmatprep.subr.mxu0 0.0
    %1561 = vmatpush1.msra.mxu0 %v1541
    %1562 = vmatprep.subr.mxu0 0.0
    %1563 = vmatpush1.msra.mxu0 %v1542
    %1564 = vmatprep.subr.mxu0 0.0
    %1565 = vmatpush1.msra.mxu0 %v1543
    %1566 = vmatprep.subr.mxu0 0.0
    %1567 = vmatpush1.msra.mxu0 %v1544
    %1568 = vmatprep.subr.mxu0 0.0
    %1569 = vmatpush1.msra.mxu0 %v1545
    %1570 = vmatprep.subr.mxu0 0.0
    %1571 = vmatpush1.msra.mxu0 %v1546
    %1572 = vmatprep.subr.mxu0 0.0
    %1573 = vmatpush1.msra.mxu0 %v1547
    %1574 = vmatprep.subr.mxu0 0.0
    %1575 = vmatpush1.msra.mxu0 %v1548
    %1576 = vmatprep.subr.mxu0 0.0
    %1577 = vmatpush1.msra.mxu0 %v1549
    %1578 = vmatprep.subr.mxu0 0.0
    %1579 = vmatpush1.msra.mxu0 %v1550
    %1580 = vmatprep.subr.mxu0 0.0
    %1581 = vmatpush1.msra.mxu0 %v1551
    %1582 = vmatprep.subr.mxu0 0.0
    %1583 = vmatpush1.msra.mxu0 %v1552
    %1584 = vmatprep.subr.mxu0 0.0
    %1585 = vmatpush1.msra.mxu0 %v1553
    %1586 = vmatprep.subr.mxu0 0.0
    %1587 = vmatpush1.msra.mxu0 0.0
    %1588 = vmatprep.subr.mxu0 0.0
    %1589 = vmatpush1.msra.mxu0 0.0
    %1590 = vmatprep.subr.mxu0 0.0
    %1591 = vmatpush1.msra.mxu0 0.0
    %1592 = vmatprep.subr.mxu0 0.0
    %1593 = vmatpush1.msra.mxu0 0.0
    %1594 = vmatprep.subr.mxu0 0.0
    %1595 = vmatpush1.msra.mxu0 0.0
    %1596 = vmatprep.subr.mxu0 0.0
    %1597 = vmatpush1.msra.mxu0 0.0
    %1598 = vmatprep.subr.mxu0 0.0
    %1599 = vmatpush1.msra.mxu0 0.0
    %1600 = vmatprep.subr.mxu0 0.0
    %1601 = vmatpush1.msra.mxu0 0.0
    %1602 = vmatprep.subr.mxu0 0.0
    %1603 = vmatpush1.msra.mxu0 0.0
    %1604 = vmatprep.subr.mxu0 0.0
    %1605 = vmatpush1.msra.mxu0 0.0
    %1606 = vmatprep.subr.mxu0 0.0
    %1607 = vmatpush1.msra.mxu0 0.0
    %1608 = vmatprep.subr.mxu0 0.0
    %1609 = vmatpush1.msra.mxu0 0.0
    %1610 = vmatprep.subr.mxu0 0.0
    %1611 = vmatpush1.msra.mxu0 0.0
    %1612 = vmatprep.subr.mxu0 0.0
    %1613 = vmatpush1.msra.mxu0 0.0
    %1614 = vmatprep.subr.mxu0 0.0
    %1615 = vmatpush1.msra.mxu0 0.0
    %1616 = vmatprep.subr.mxu0 0.0
    %1617 = vmatpush1.msra.mxu0 0.0
    %1618 = vmatprep.mubr.f32.mxu0 0.0
    %1619 = vmatmul.mubr.f32.gmra.mrb[0].mxu0 %v1363
    %v1620 = vpop.f32.mrb[0].mxu0
    %v1621 = vadd.f32 %v507, %v1620
    %v1622 = vpop.f32.mrb[0].mxu0
    %1623 = vdwg.mxu0
    %s1624 = scalar_lea.vmem [#allocation2], 24
    %v1625 = vld [vmem:[%s1624] sm:$0xff]
    %v1626 = vadd.f32 %v1625, %v1449
    %v1627 = vxor.u32 %v1626, 2147483648
    %v1628 = vmul.f32 %v1627, 1.442695
    %v1629 = vpow.pop %v1628
    %v1630 = vadd.f32 %v1629, 1.0
    %v1631 = vrcp.pop %v1630
    %v1632 = vmul.f32 1.0, %v1631
    %s1633 = scalar_lea.vmem [#allocation3], 24
    %v1634 = vld [vmem:[%s1633] sm:$0xff]
    %v1635 = vadd.f32 %v1634, %v1535
    %v1636 = vxor.u32 %v1635, 2147483648
    %v1637 = vmul.f32 %v1636, 1.442695
    %v1638 = vpow.pop %v1637
    %v1639 = vadd.f32 %v1638, 1.0
    %v1640 = vrcp.pop %v1639
    %v1641 = vmul.f32 1.0, %v1640
    %s1642 = scalar_lea.vmem [#allocation4], 24
    %v1643 = vld [vmem:[%s1642] sm:$0xff]
    %v1644 = vmul.f32 %v1632, %v1621
    %v1645 = vadd.f32 %v1643, %v1644
    %v1646 = vtanh.pop %v1645
    %v1647 = vsub.f32 1.0, %v1641
    %v1648 = vmul.f32 %v1647, %v1646
    %v1649 = vmul.f32 %v1641, %v1363
    %v1650 = vadd.f32 %v1648, %v1649
    %s1651 = scalar_lea.vmem [#allocation14], 24
    %1652 = vst [vmem:[%s1651] sm:$0xff] %v1650
    %v1653 = vld [vmem:[#allocation5] sm:$0xff]
    %v1654 = vld [vmem:[#allocation5 + $0x8] sm:$0xff]
    %v1655 = vld [vmem:[#allocation5 + $0x10] sm:$0xff]
    %v1656 = vld [vmem:[#allocation5 + $0x18] sm:$0xff]
    %v1657 = vld [vmem:[#allocation5 + $0x20] sm:$0xff]
    %v1658 = vld [vmem:[#allocation5 + $0x28] sm:$0xff]
    %v1659 = vld [vmem:[#allocation5 + $0x30] sm:$0xff]
    %v1660 = vld [vmem:[#allocation5 + $0x38] sm:$0xff]
    %v1661 = vld [vmem:[#allocation5 + $0x40] sm:$0xff]
    %v1662 = vld [vmem:[#allocation5 + $0x48] sm:$0xff]
    %v1663 = vld [vmem:[#allocation5 + $0x50] sm:$0xff]
    %v1664 = vld [vmem:[#allocation5 + $0x58] sm:$0xff]
    %v1665 = vld [vmem:[#allocation5 + $0x60] sm:$0xff]
    %v1666 = vld [vmem:[#allocation5 + $0x68] sm:$0xff]
    %v1667 = vld [vmem:[#allocation5 + $0x70] sm:$0xff]
    %v1668 = vld [vmem:[#allocation5 + $0x78] sm:$0xff]
    %1669 = vmatprep.subr.mxu0 0.0
    %1670 = vmatpush1.msra.mxu0 %v1653
    %1671 = vmatprep.subr.mxu0 0.0
    %1672 = vmatpush1.msra.mxu0 %v1654
    %1673 = vmatprep.subr.mxu0 0.0
    %1674 = vmatpush1.msra.mxu0 %v1655
    %1675 = vmatprep.subr.mxu0 0.0
    %1676 = vmatpush1.msra.mxu0 %v1656
    %1677 = vmatprep.subr.mxu0 0.0
    %1678 = vmatpush1.msra.mxu0 %v1657
    %1679 = vmatprep.subr.mxu0 0.0
    %1680 = vmatpush1.msra.mxu0 %v1658
    %1681 = vmatprep.subr.mxu0 0.0
    %1682 = vmatpush1.msra.mxu0 %v1659
    %1683 = vmatprep.subr.mxu0 0.0
    %1684 = vmatpush1.msra.mxu0 %v1660
    %1685 = vmatprep.subr.mxu0 0.0
    %1686 = vmatpush1.msra.mxu0 %v1661
    %1687 = vmatprep.subr.mxu0 0.0
    %1688 = vmatpush1.msra.mxu0 %v1662
    %1689 = vmatprep.subr.mxu0 0.0
    %1690 = vmatpush1.msra.mxu0 %v1663
    %1691 = vmatprep.subr.mxu0 0.0
    %1692 = vmatpush1.msra.mxu0 %v1664
    %1693 = vmatprep.subr.mxu0 0.0
    %1694 = vmatpush1.msra.mxu0 %v1665
    %1695 = vmatprep.subr.mxu0 0.0
    %1696 = vmatpush1.msra.mxu0 %v1666
    %1697 = vmatprep.subr.mxu0 0.0
    %1698 = vmatpush1.msra.mxu0 %v1667
    %1699 = vmatprep.subr.mxu0 0.0
    %1700 = vmatpush1.msra.mxu0 %v1668
    %1701 = vmatprep.subr.mxu0 0.0
    %1702 = vmatpush1.msra.mxu0 0.0
    %1703 = vmatprep.subr.mxu0 0.0
    %1704 = vmatpush1.msra.mxu0 0.0
    %1705 = vmatprep.subr.mxu0 0.0
    %1706 = vmatpush1.msra.mxu0 0.0
    %1707 = vmatprep.subr.mxu0 0.0
    %1708 = vmatpush1.msra.mxu0 0.0
    %1709 = vmatprep.subr.mxu0 0.0
    %1710 = vmatpush1.msra.mxu0 0.0
    %1711 = vmatprep.subr.mxu0 0.0
    %1712 = vmatpush1.msra.mxu0 0.0
    %1713 = vmatprep.subr.mxu0 0.0
    %1714 = vmatpush1.msra.mxu0 0.0
    %1715 = vmatprep.subr.mxu0 0.0
    %1716 = vmatpush1.msra.mxu0 0.0
    %1717 = vmatprep.subr.mxu0 0.0
    %1718 = vmatpush1.msra.mxu0 0.0
    %1719 = vmatprep.subr.mxu0 0.0
    %1720 = vmatpush1.msra.mxu0 0.0
    %1721 = vmatprep.subr.mxu0 0.0
    %1722 = vmatpush1.msra.mxu0 0.0
    %1723 = vmatprep.subr.mxu0 0.0
    %1724 = vmatpush1.msra.mxu0 0.0
    %1725 = vmatprep.subr.mxu0 0.0
    %1726 = vmatpush1.msra.mxu0 0.0
    %1727 = vmatprep.subr.mxu0 0.0
    %1728 = vmatpush1.msra.mxu0 0.0
    %1729 = vmatprep.subr.mxu0 0.0
    %1730 = vmatpush1.msra.mxu0 0.0
    %1731 = vmatprep.subr.mxu0 0.0
    %1732 = vmatpush1.msra.mxu0 0.0
    %1733 = vmatprep.mubr.f32.mxu0 0.0
    %1734 = vmatmul.mubr.f32.gmra.mrb[0].mxu0 %v1650
    %v1735 = vpop.f32.mrb[0].mxu0
    %v1736 = vadd.f32 0.0, %v1735
    %v1737 = vpop.f32.mrb[0].mxu0
    %1738 = vdwg.mxu0
    %v1739 = vld [vmem:[#allocation8] sm:$0xff]
    %v1740 = vld [vmem:[#allocation8 + $0x8] sm:$0xff]
    %v1741 = vld [vmem:[#allocation8 + $0x10] sm:$0xff]
    %v1742 = vld [vmem:[#allocation8 + $0x18] sm:$0xff]
    %v1743 = vld [vmem:[#allocation8 + $0x20] sm:$0xff]
    %v1744 = vld [vmem:[#allocation8 + $0x28] sm:$0xff]
    %v1745 = vld [vmem:[#allocation8 + $0x30] sm:$0xff]
    %v1746 = vld [vmem:[#allocation8 + $0x38] sm:$0xff]
    %v1747 = vld [vmem:[#allocation8 + $0x40] sm:$0xff]
    %v1748 = vld [vmem:[#allocation8 + $0x48] sm:$0xff]
    %v1749 = vld [vmem:[#allocation8 + $0x50] sm:$0xff]
    %v1750 = vld [vmem:[#allocation8 + $0x58] sm:$0xff]
    %v1751 = vld [vmem:[#allocation8 + $0x60] sm:$0xff]
    %v1752 = vld [vmem:[#allocation8 + $0x68] sm:$0xff]
    %v1753 = vld [vmem:[#allocation8 + $0x70] sm:$0xff]
    %v1754 = vld [vmem:[#allocation8 + $0x78] sm:$0xff]
    %1755 = vmatprep.subr.mxu0 0.0
    %1756 = vmatpush1.msra.mxu0 %v1739
    %1757 = vmatprep.subr.mxu0 0.0
    %1758 = vmatpush1.msra.mxu0 %v1740
    %1759 = vmatprep.subr.mxu0 0.0
    %1760 = vmatpush1.msra.mxu0 %v1741
    %1761 = vmatprep.subr.mxu0 0.0
    %1762 = vmatpush1.msra.mxu0 %v1742
    %1763 = vmatprep.subr.mxu0 0.0
    %1764 = vmatpush1.msra.mxu0 %v1743
    %1765 = vmatprep.subr.mxu0 0.0
    %1766 = vmatpush1.msra.mxu0 %v1744
    %1767 = vmatprep.subr.mxu0 0.0
    %1768 = vmatpush1.msra.mxu0 %v1745
    %1769 = vmatprep.subr.mxu0 0.0
    %1770 = vmatpush1.msra.mxu0 %v1746
    %1771 = vmatprep.subr.mxu0 0.0
    %1772 = vmatpush1.msra.mxu0 %v1747
    %1773 = vmatprep.subr.mxu0 0.0
    %1774 = vmatpush1.msra.mxu0 %v1748
    %1775 = vmatprep.subr.mxu0 0.0
    %1776 = vmatpush1.msra.mxu0 %v1749
    %1777 = vmatprep.subr.mxu0 0.0
    %1778 = vmatpush1.msra.mxu0 %v1750
    %1779 = vmatprep.subr.mxu0 0.0
    %1780 = vmatpush1.msra.mxu0 %v1751
    %1781 = vmatprep.subr.mxu0 0.0
    %1782 = vmatpush1.msra.mxu0 %v1752
    %1783 = vmatprep.subr.mxu0 0.0
    %1784 = vmatpush1.msra.mxu0 %v1753
    %1785 = vmatprep.subr.mxu0 0.0
    %1786 = vmatpush1.msra.mxu0 %v1754
    %1787 = vmatprep.subr.mxu0 0.0
    %1788 = vmatpush1.msra.mxu0 0.0
    %1789 = vmatprep.subr.mxu0 0.0
    %1790 = vmatpush1.msra.mxu0 0.0
    %1791 = vmatprep.subr.mxu0 0.0
    %1792 = vmatpush1.msra.mxu0 0.0
    %1793 = vmatprep.subr.mxu0 0.0
    %1794 = vmatpush1.msra.mxu0 0.0
    %1795 = vmatprep.subr.mxu0 0.0
    %1796 = vmatpush1.msra.mxu0 0.0
    %1797 = vmatprep.subr.mxu0 0.0
    %1798 = vmatpush1.msra.mxu0 0.0
    %1799 = vmatprep.subr.mxu0 0.0
    %1800 = vmatpush1.msra.mxu0 0.0
    %1801 = vmatprep.subr.mxu0 0.0
    %1802 = vmatpush1.msra.mxu0 0.0
    %1803 = vmatprep.subr.mxu0 0.0
    %1804 = vmatpush1.msra.mxu0 0.0
    %1805 = vmatprep.subr.mxu0 0.0
    %1806 = vmatpush1.msra.mxu0 0.0
    %1807 = vmatprep.subr.mxu0 0.0
    %1808 = vmatpush1.msra.mxu0 0.0
    %1809 = vmatprep.subr.mxu0 0.0
    %1810 = vmatpush1.msra.mxu0 0.0
    %1811 = vmatprep.subr.mxu0 0.0
    %1812 = vmatpush1.msra.mxu0 0.0
    %1813 = vmatprep.subr.mxu0 0.0
    %1814 = vmatpush1.msra.mxu0 0.0
    %1815 = vmatprep.subr.mxu0 0.0
    %1816 = vmatpush1.msra.mxu0 0.0
    %1817 = vmatprep.subr.mxu0 0.0
    %1818 = vmatpush1.msra.mxu0 0.0
    %1819 = vmatprep.mubr.f32.mxu0 0.0
    %1820 = vmatmul.mubr.f32.gmra.mrb[0].mxu0 %v1650
    %v1821 = vpop.f32.mrb[0].mxu0
    %v1822 = vadd.f32 0.0, %v1821
    %v1823 = vpop.f32.mrb[0].mxu0
    %1824 = vdwg.mxu0
    %v1825 = vld [vmem:[#allocation10] sm:$0xff]
    %v1826 = vld [vmem:[#allocation10 + $0x8] sm:$0xff]
    %v1827 = vld [vmem:[#allocation10 + $0x10] sm:$0xff]
    %v1828 = vld [vmem:[#allocation10 + $0x18] sm:$0xff]
    %v1829 = vld [vmem:[#allocation10 + $0x20] sm:$0xff]
    %v1830 = vld [vmem:[#allocation10 + $0x28] sm:$0xff]
    %v1831 = vld [vmem:[#allocation10 + $0x30] sm:$0xff]
    %v1832 = vld [vmem:[#allocation10 + $0x38] sm:$0xff]
    %v1833 = vld [vmem:[#allocation10 + $0x40] sm:$0xff]
    %v1834 = vld [vmem:[#allocation10 + $0x48] sm:$0xff]
    %v1835 = vld [vmem:[#allocation10 + $0x50] sm:$0xff]
    %v1836 = vld [vmem:[#allocation10 + $0x58] sm:$0xff]
    %v1837 = vld [vmem:[#allocation10 + $0x60] sm:$0xff]
    %v1838 = vld [vmem:[#allocation10 + $0x68] sm:$0xff]
    %v1839 = vld [vmem:[#allocation10 + $0x70] sm:$0xff]
    %v1840 = vld [vmem:[#allocation10 + $0x78] sm:$0xff]
    %1841 = vmatprep.subr.mxu0 0.0
    %1842 = vmatpush1.msra.mxu0 %v1825
    %1843 = vmatprep.subr.mxu0 0.0
    %1844 = vmatpush1.msra.mxu0 %v1826
    %1845 = vmatprep.subr.mxu0 0.0
    %1846 = vmatpush1.msra.mxu0 %v1827
    %1847 = vmatprep.subr.mxu0 0.0
    %1848 = vmatpush1.msra.mxu0 %v1828
    %1849 = vmatprep.subr.mxu0 0.0
    %1850 = vmatpush1.msra.mxu0 %v1829
    %1851 = vmatprep.subr.mxu0 0.0
    %1852 = vmatpush1.msra.mxu0 %v1830
    %1853 = vmatprep.subr.mxu0 0.0
    %1854 = vmatpush1.msra.mxu0 %v1831
    %1855 = vmatprep.subr.mxu0 0.0
    %1856 = vmatpush1.msra.mxu0 %v1832
    %1857 = vmatprep.subr.mxu0 0.0
    %1858 = vmatpush1.msra.mxu0 %v1833
    %1859 = vmatprep.subr.mxu0 0.0
    %1860 = vmatpush1.msra.mxu0 %v1834
    %1861 = vmatprep.subr.mxu0 0.0
    %1862 = vmatpush1.msra.mxu0 %v1835
    %1863 = vmatprep.subr.mxu0 0.0
    %1864 = vmatpush1.msra.mxu0 %v1836
    %1865 = vmatprep.subr.mxu0 0.0
    %1866 = vmatpush1.msra.mxu0 %v1837
    %1867 = vmatprep.subr.mxu0 0.0
    %1868 = vmatpush1.msra.mxu0 %v1838
    %1869 = vmatprep.subr.mxu0 0.0
    %1870 = vmatpush1.msra.mxu0 %v1839
    %1871 = vmatprep.subr.mxu0 0.0
    %1872 = vmatpush1.msra.mxu0 %v1840
    %1873 = vmatprep.subr.mxu0 0.0
    %1874 = vmatpush1.msra.mxu0 0.0
    %1875 = vmatprep.subr.mxu0 0.0
    %1876 = vmatpush1.msra.mxu0 0.0
    %1877 = vmatprep.subr.mxu0 0.0
    %1878 = vmatpush1.msra.mxu0 0.0
    %1879 = vmatprep.subr.mxu0 0.0
    %1880 = vmatpush1.msra.mxu0 0.0
    %1881 = vmatprep.subr.mxu0 0.0
    %1882 = vmatpush1.msra.mxu0 0.0
    %1883 = vmatprep.subr.mxu0 0.0
    %1884 = vmatpush1.msra.mxu0 0.0
    %1885 = vmatprep.subr.mxu0 0.0
    %1886 = vmatpush1.msra.mxu0 0.0
    %1887 = vmatprep.subr.mxu0 0.0
    %1888 = vmatpush1.msra.mxu0 0.0
    %1889 = vmatprep.subr.mxu0 0.0
    %1890 = vmatpush1.msra.mxu0 0.0
    %1891 = vmatprep.subr.mxu0 0.0
    %1892 = vmatpush1.msra.mxu0 0.0
    %1893 = vmatprep.subr.mxu0 0.0
    %1894 = vmatpush1.msra.mxu0 0.0
    %1895 = vmatprep.subr.mxu0 0.0
    %1896 = vmatpush1.msra.mxu0 0.0
    %1897 = vmatprep.subr.mxu0 0.0
    %1898 = vmatpush1.msra.mxu0 0.0
    %1899 = vmatprep.subr.mxu0 0.0
    %1900 = vmatpush1.msra.mxu0 0.0
    %1901 = vmatprep.subr.mxu0 0.0
    %1902 = vmatpush1.msra.mxu0 0.0
    %1903 = vmatprep.subr.mxu0 0.0
    %1904 = vmatpush1.msra.mxu0 0.0
    %1905 = vmatprep.mubr.f32.mxu0 0.0
    %1906 = vmatmul.mubr.f32.gmra.mrb[0].mxu0 %v1650
    %v1907 = vpop.f32.mrb[0].mxu0
    %v1908 = vadd.f32 %v507, %v1907
    %v1909 = vpop.f32.mrb[0].mxu0
    %1910 = vdwg.mxu0
    %s1911 = scalar_lea.vmem [#allocation2], 32
    %v1912 = vld [vmem:[%s1911] sm:$0xff]
    %v1913 = vadd.f32 %v1912, %v1736
    %v1914 = vxor.u32 %v1913, 2147483648
    %v1915 = vmul.f32 %v1914, 1.442695
    %v1916 = vpow.pop %v1915
    %v1917 = vadd.f32 %v1916, 1.0
    %v1918 = vrcp.pop %v1917
    %v1919 = vmul.f32 1.0, %v1918
    %s1920 = scalar_lea.vmem [#allocation3], 32
    %v1921 = vld [vmem:[%s1920] sm:$0xff]
    %v1922 = vadd.f32 %v1921, %v1822
    %v1923 = vxor.u32 %v1922, 2147483648
    %v1924 = vmul.f32 %v1923, 1.442695
    %v1925 = vpow.pop %v1924
    %v1926 = vadd.f32 %v1925, 1.0
    %v1927 = vrcp.pop %v1926
    %v1928 = vmul.f32 1.0, %v1927
    %s1929 = scalar_lea.vmem [#allocation4], 32
    %v1930 = vld [vmem:[%s1929] sm:$0xff]
    %v1931 = vmul.f32 %v1919, %v1908
    %v1932 = vadd.f32 %v1930, %v1931
    %v1933 = vtanh.pop %v1932
    %v1934 = vsub.f32 1.0, %v1928
    %v1935 = vmul.f32 %v1934, %v1933
    %v1936 = vmul.f32 %v1928, %v1650
    %v1937 = vadd.f32 %v1935, %v1936
    %s1938 = scalar_lea.vmem [#allocation14], 32
    %1939 = vst [vmem:[%s1938] sm:$0xff] %v1937
    %v1940 = vld [vmem:[#allocation5] sm:$0xff]
    %v1941 = vld [vmem:[#allocation5 + $0x8] sm:$0xff]
    %v1942 = vld [vmem:[#allocation5 + $0x10] sm:$0xff]
    %v1943 = vld [vmem:[#allocation5 + $0x18] sm:$0xff]
    %v1944 = vld [vmem:[#allocation5 + $0x20] sm:$0xff]
    %v1945 = vld [vmem:[#allocation5 + $0x28] sm:$0xff]
    %v1946 = vld [vmem:[#allocation5 + $0x30] sm:$0xff]
    %v1947 = vld [vmem:[#allocation5 + $0x38] sm:$0xff]
    %v1948 = vld [vmem:[#allocation5 + $0x40] sm:$0xff]
    %v1949 = vld [vmem:[#allocation5 + $0x48] sm:$0xff]
    %v1950 = vld [vmem:[#allocation5 + $0x50] sm:$0xff]
    %v1951 = vld [vmem:[#allocation5 + $0x58] sm:$0xff]
    %v1952 = vld [vmem:[#allocation5 + $0x60] sm:$0xff]
    %v1953 = vld [vmem:[#allocation5 + $0x68] sm:$0xff]
    %v1954 = vld [vmem:[#allocation5 + $0x70] sm:$0xff]
    %v1955 = vld [vmem:[#allocation5 + $0x78] sm:$0xff]
    %1956 = vmatprep.subr.mxu0 0.0
    %1957 = vmatpush1.msra.mxu0 %v1940
    %1958 = vmatprep.subr.mxu0 0.0
    %1959 = vmatpush1.msra.mxu0 %v1941
    %1960 = vmatprep.subr.mxu0 0.0
    %1961 = vmatpush1.msra.mxu0 %v1942
    %1962 = vmatprep.subr.mxu0 0.0
    %1963 = vmatpush1.msra.mxu0 %v1943
    %1964 = vmatprep.subr.mxu0 0.0
    %1965 = vmatpush1.msra.mxu0 %v1944
    %1966 = vmatprep.subr.mxu0 0.0
    %1967 = vmatpush1.msra.mxu0 %v1945
    %1968 = vmatprep.subr.mxu0 0.0
    %1969 = vmatpush1.msra.mxu0 %v1946
    %1970 = vmatprep.subr.mxu0 0.0
    %1971 = vmatpush1.msra.mxu0 %v1947
    %1972 = vmatprep.subr.mxu0 0.0
    %1973 = vmatpush1.msra.mxu0 %v1948
    %1974 = vmatprep.subr.mxu0 0.0
    %1975 = vmatpush1.msra.mxu0 %v1949
    %1976 = vmatprep.subr.mxu0 0.0
    %1977 = vmatpush1.msra.mxu0 %v1950
    %1978 = vmatprep.subr.mxu0 0.0
    %1979 = vmatpush1.msra.mxu0 %v1951
    %1980 = vmatprep.subr.mxu0 0.0
    %1981 = vmatpush1.msra.mxu0 %v1952
    %1982 = vmatprep.subr.mxu0 0.0
    %1983 = vmatpush1.msra.mxu0 %v1953
    %1984 = vmatprep.subr.mxu0 0.0
    %1985 = vmatpush1.msra.mxu0 %v1954
    %1986 = vmatprep.subr.mxu0 0.0
    %1987 = vmatpush1.msra.mxu0 %v1955
    %1988 = vmatprep.subr.mxu0 0.0
    %1989 = vmatpush1.msra.mxu0 0.0
    %1990 = vmatprep.subr.mxu0 0.0
    %1991 = vmatpush1.msra.mxu0 0.0
    %1992 = vmatprep.subr.mxu0 0.0
    %1993 = vmatpush1.msra.mxu0 0.0
    %1994 = vmatprep.subr.mxu0 0.0
    %1995 = vmatpush1.msra.mxu0 0.0
    %1996 = vmatprep.subr.mxu0 0.0
    %1997 = vmatpush1.msra.mxu0 0.0
    %1998 = vmatprep.subr.mxu0 0.0
    %1999 = vmatpush1.msra.mxu0 0.0
    %2000 = vmatprep.subr.mxu0 0.0
    %2001 = vmatpush1.msra.mxu0 0.0
    %2002 = vmatprep.subr.mxu0 0.0
    %2003 = vmatpush1.msra.mxu0 0.0
    %2004 = vmatprep.subr.mxu0 0.0
    %2005 = vmatpush1.msra.mxu0 0.0
    %2006 = vmatprep.subr.mxu0 0.0
    %2007 = vmatpush1.msra.mxu0 0.0
    %2008 = vmatprep.subr.mxu0 0.0
    %2009 = vmatpush1.msra.mxu0 0.0
    %2010 = vmatprep.subr.mxu0 0.0
    %2011 = vmatpush1.msra.mxu0 0.0
    %2012 = vmatprep.subr.mxu0 0.0
    %2013 = vmatpush1.msra.mxu0 0.0
    %2014 = vmatprep.subr.mxu0 0.0
    %2015 = vmatpush1.msra.mxu0 0.0
    %2016 = vmatprep.subr.mxu0 0.0
    %2017 = vmatpush1.msra.mxu0 0.0
    %2018 = vmatprep.subr.mxu0 0.0
    %2019 = vmatpush1.msra.mxu0 0.0
    %2020 = vmatprep.mubr.f32.mxu0 0.0
    %2021 = vmatmul.mubr.f32.gmra.mrb[0].mxu0 %v1937
    %v2022 = vpop.f32.mrb[0].mxu0
    %v2023 = vadd.f32 0.0, %v2022
    %v2024 = vpop.f32.mrb[0].mxu0
    %2025 = vdwg.mxu0
    %v2026 = vld [vmem:[#allocation8] sm:$0xff]
    %v2027 = vld [vmem:[#allocation8 + $0x8] sm:$0xff]
    %v2028 = vld [vmem:[#allocation8 + $0x10] sm:$0xff]
    %v2029 = vld [vmem:[#allocation8 + $0x18] sm:$0xff]
    %v2030 = vld [vmem:[#allocation8 + $0x20] sm:$0xff]
    %v2031 = vld [vmem:[#allocation8 + $0x28] sm:$0xff]
    %v2032 = vld [vmem:[#allocation8 + $0x30] sm:$0xff]
    %v2033 = vld [vmem:[#allocation8 + $0x38] sm:$0xff]
    %v2034 = vld [vmem:[#allocation8 + $0x40] sm:$0xff]
    %v2035 = vld [vmem:[#allocation8 + $0x48] sm:$0xff]
    %v2036 = vld [vmem:[#allocation8 + $0x50] sm:$0xff]
    %v2037 = vld [vmem:[#allocation8 + $0x58] sm:$0xff]
    %v2038 = vld [vmem:[#allocation8 + $0x60] sm:$0xff]
    %v2039 = vld [vmem:[#allocation8 + $0x68] sm:$0xff]
    %v2040 = vld [vmem:[#allocation8 + $0x70] sm:$0xff]
    %v2041 = vld [vmem:[#allocation8 + $0x78] sm:$0xff]
    %2042 = vmatprep.subr.mxu0 0.0
    %2043 = vmatpush1.msra.mxu0 %v2026
    %2044 = vmatprep.subr.mxu0 0.0
    %2045 = vmatpush1.msra.mxu0 %v2027
    %2046 = vmatprep.subr.mxu0 0.0
    %2047 = vmatpush1.msra.mxu0 %v2028
    %2048 = vmatprep.subr.mxu0 0.0
    %2049 = vmatpush1.msra.mxu0 %v2029
    %2050 = vmatprep.subr.mxu0 0.0
    %2051 = vmatpush1.msra.mxu0 %v2030
    %2052 = vmatprep.subr.mxu0 0.0
    %2053 = vmatpush1.msra.mxu0 %v2031
    %2054 = vmatprep.subr.mxu0 0.0
    %2055 = vmatpush1.msra.mxu0 %v2032
    %2056 = vmatprep.subr.mxu0 0.0
    %2057 = vmatpush1.msra.mxu0 %v2033
    %2058 = vmatprep.subr.mxu0 0.0
    %2059 = vmatpush1.msra.mxu0 %v2034
    %2060 = vmatprep.subr.mxu0 0.0
    %2061 = vmatpush1.msra.mxu0 %v2035
    %2062 = vmatprep.subr.mxu0 0.0
    %2063 = vmatpush1.msra.mxu0 %v2036
    %2064 = vmatprep.subr.mxu0 0.0
    %2065 = vmatpush1.msra.mxu0 %v2037
    %2066 = vmatprep.subr.mxu0 0.0
    %2067 = vmatpush1.msra.mxu0 %v2038
    %2068 = vmatprep.subr.mxu0 0.0
    %2069 = vmatpush1.msra.mxu0 %v2039
    %2070 = vmatprep.subr.mxu0 0.0
    %2071 = vmatpush1.msra.mxu0 %v2040
    %2072 = vmatprep.subr.mxu0 0.0
    %2073 = vmatpush1.msra.mxu0 %v2041
    %2074 = vmatprep.subr.mxu0 0.0
    %2075 = vmatpush1.msra.mxu0 0.0
    %2076 = vmatprep.subr.mxu0 0.0
    %2077 = vmatpush1.msra.mxu0 0.0
    %2078 = vmatprep.subr.mxu0 0.0
    %2079 = vmatpush1.msra.mxu0 0.0
    %2080 = vmatprep.subr.mxu0 0.0
    %2081 = vmatpush1.msra.mxu0 0.0
    %2082 = vmatprep.subr.mxu0 0.0
    %2083 = vmatpush1.msra.mxu0 0.0
    %2084 = vmatprep.subr.mxu0 0.0
    %2085 = vmatpush1.msra.mxu0 0.0
    %2086 = vmatprep.subr.mxu0 0.0
    %2087 = vmatpush1.msra.mxu0 0.0
    %2088 = vmatprep.subr.mxu0 0.0
    %2089 = vmatpush1.msra.mxu0 0.0
    %2090 = vmatprep.subr.mxu0 0.0
    %2091 = vmatpush1.msra.mxu0 0.0
    %2092 = vmatprep.subr.mxu0 0.0
    %2093 = vmatpush1.msra.mxu0 0.0
    %2094 = vmatprep.subr.mxu0 0.0
    %2095 = vmatpush1.msra.mxu0 0.0
    %2096 = vmatprep.subr.mxu0 0.0
    %2097 = vmatpush1.msra.mxu0 0.0
    %2098 = vmatprep.subr.mxu0 0.0
    %2099 = vmatpush1.msra.mxu0 0.0
    %2100 = vmatprep.subr.mxu0 0.0
    %2101 = vmatpush1.msra.mxu0 0.0
    %2102 = vmatprep.subr.mxu0 0.0
    %2103 = vmatpush1.msra.mxu0 0.0
    %2104 = vmatprep.subr.mxu0 0.0
    %2105 = vmatpush1.msra.mxu0 0.0
    %2106 = vmatprep.mubr.f32.mxu0 0.0
    %2107 = vmatmul.mubr.f32.gmra.mrb[0].mxu0 %v1937
    %v2108 = vpop.f32.mrb[0].mxu0
    %v2109 = vadd.f32 0.0, %v2108
    %v2110 = vpop.f32.mrb[0].mxu0
    %2111 = vdwg.mxu0
    %v2112 = vld [vmem:[#allocation10] sm:$0xff]
    %v2113 = vld [vmem:[#allocation10 + $0x8] sm:$0xff]
    %v2114 = vld [vmem:[#allocation10 + $0x10] sm:$0xff]
    %v2115 = vld [vmem:[#allocation10 + $0x18] sm:$0xff]
    %v2116 = vld [vmem:[#allocation10 + $0x20] sm:$0xff]
    %v2117 = vld [vmem:[#allocation10 + $0x28] sm:$0xff]
    %v2118 = vld [vmem:[#allocation10 + $0x30] sm:$0xff]
    %v2119 = vld [vmem:[#allocation10 + $0x38] sm:$0xff]
    %v2120 = vld [vmem:[#allocation10 + $0x40] sm:$0xff]
    %v2121 = vld [vmem:[#allocation10 + $0x48] sm:$0xff]
    %v2122 = vld [vmem:[#allocation10 + $0x50] sm:$0xff]
    %v2123 = vld [vmem:[#allocation10 + $0x58] sm:$0xff]
    %v2124 = vld [vmem:[#allocation10 + $0x60] sm:$0xff]
    %v2125 = vld [vmem:[#allocation10 + $0x68] sm:$0xff]
    %v2126 = vld [vmem:[#allocation10 + $0x70] sm:$0xff]
    %v2127 = vld [vmem:[#allocation10 + $0x78] sm:$0xff]
    %2128 = vmatprep.subr.mxu0 0.0
    %2129 = vmatpush1.msra.mxu0 %v2112
    %2130 = vmatprep.subr.mxu0 0.0
    %2131 = vmatpush1.msra.mxu0 %v2113
    %2132 = vmatprep.subr.mxu0 0.0
    %2133 = vmatpush1.msra.mxu0 %v2114
    %2134 = vmatprep.subr.mxu0 0.0
    %2135 = vmatpush1.msra.mxu0 %v2115
    %2136 = vmatprep.subr.mxu0 0.0
    %2137 = vmatpush1.msra.mxu0 %v2116
    %2138 = vmatprep.subr.mxu0 0.0
    %2139 = vmatpush1.msra.mxu0 %v2117
    %2140 = vmatprep.subr.mxu0 0.0
    %2141 = vmatpush1.msra.mxu0 %v2118
    %2142 = vmatprep.subr.mxu0 0.0
    %2143 = vmatpush1.msra.mxu0 %v2119
    %2144 = vmatprep.subr.mxu0 0.0
    %2145 = vmatpush1.msra.mxu0 %v2120
    %2146 = vmatprep.subr.mxu0 0.0
    %2147 = vmatpush1.msra.mxu0 %v2121
    %2148 = vmatprep.subr.mxu0 0.0
    %2149 = vmatpush1.msra.mxu0 %v2122
    %2150 = vmatprep.subr.mxu0 0.0
    %2151 = vmatpush1.msra.mxu0 %v2123
    %2152 = vmatprep.subr.mxu0 0.0
    %2153 = vmatpush1.msra.mxu0 %v2124
    %2154 = vmatprep.subr.mxu0 0.0
    %2155 = vmatpush1.msra.mxu0 %v2125
    %2156 = vmatprep.subr.mxu0 0.0
    %2157 = vmatpush1.msra.mxu0 %v2126
    %2158 = vmatprep.subr.mxu0 0.0
    %2159 = vmatpush1.msra.mxu0 %v2127
    %2160 = vmatprep.subr.mxu0 0.0
    %2161 = vmatpush1.msra.mxu0 0.0
    %2162 = vmatprep.subr.mxu0 0.0
    %2163 = vmatpush1.msra.mxu0 0.0
    %2164 = vmatprep.subr.mxu0 0.0
    %2165 = vmatpush1.msra.mxu0 0.0
    %2166 = vmatprep.subr.mxu0 0.0
    %2167 = vmatpush1.msra.mxu0 0.0
    %2168 = vmatprep.subr.mxu0 0.0
    %2169 = vmatpush1.msra.mxu0 0.0
    %2170 = vmatprep.subr.mxu0 0.0
    %2171 = vmatpush1.msra.mxu0 0.0
    %2172 = vmatprep.subr.mxu0 0.0
    %2173 = vmatpush1.msra.mxu0 0.0
    %2174 = vmatprep.subr.mxu0 0.0
    %2175 = vmatpush1.msra.mxu0 0.0
    %2176 = vmatprep.subr.mxu0 0.0
    %2177 = vmatpush1.msra.mxu0 0.0
    %2178 = vmatprep.subr.mxu0 0.0
    %2179 = vmatpush1.msra.mxu0 0.0
    %2180 = vmatprep.subr.mxu0 0.0
    %2181 = vmatpush1.msra.mxu0 0.0
    %2182 = vmatprep.subr.mxu0 0.0
    %2183 = vmatpush1.msra.mxu0 0.0
    %2184 = vmatprep.subr.mxu0 0.0
    %2185 = vmatpush1.msra.mxu0 0.0
    %2186 = vmatprep.subr.mxu0 0.0
    %2187 = vmatpush1.msra.mxu0 0.0
    %2188 = vmatprep.subr.mxu0 0.0
    %2189 = vmatpush1.msra.mxu0 0.0
    %2190 = vmatprep.subr.mxu0 0.0
    %2191 = vmatpush1.msra.mxu0 0.0
    %2192 = vmatprep.mubr.f32.mxu0 0.0
    %2193 = vmatmul.mubr.f32.gmra.mrb[0].mxu0 %v1937
    %v2194 = vpop.f32.mrb[0].mxu0
    %v2195 = vadd.f32 %v507, %v2194
    %v2196 = vpop.f32.mrb[0].mxu0
    %2197 = vdwg.mxu0
    %s2198 = scalar_lea.vmem [#allocation2], 40
    %v2199 = vld [vmem:[%s2198] sm:$0xff]
    %v2200 = vadd.f32 %v2199, %v2023
    %v2201 = vxor.u32 %v2200, 2147483648
    %v2202 = vmul.f32 %v2201, 1.442695
    %v2203 = vpow.pop %v2202
    %v2204 = vadd.f32 %v2203, 1.0
    %v2205 = vrcp.pop %v2204
    %v2206 = vmul.f32 1.0, %v2205
    %s2207 = scalar_lea.vmem [#allocation3], 40
    %v2208 = vld [vmem:[%s2207] sm:$0xff]
    %v2209 = vadd.f32 %v2208, %v2109
    %v2210 = vxor.u32 %v2209, 2147483648
    %v2211 = vmul.f32 %v2210, 1.442695
    %v2212 = vpow.pop %v2211
    %v2213 = vadd.f32 %v2212, 1.0
    %v2214 = vrcp.pop %v2213
    %v2215 = vmul.f32 1.0, %v2214
    %s2216 = scalar_lea.vmem [#allocation4], 40
    %v2217 = vld [vmem:[%s2216] sm:$0xff]
    %v2218 = vmul.f32 %v2206, %v2195
    %v2219 = vadd.f32 %v2217, %v2218
    %v2220 = vtanh.pop %v2219
    %v2221 = vsub.f32 1.0, %v2215
    %v2222 = vmul.f32 %v2221, %v2220
    %v2223 = vmul.f32 %v2215, %v1937
    %v2224 = vadd.f32 %v2222, %v2223
    %s2225 = scalar_lea.vmem [#allocation14], 40
    %2226 = vst [vmem:[%s2225] sm:$0xff] %v2224
    %v2227 = vld [vmem:[#allocation5] sm:$0xff]
    %v2228 = vld [vmem:[#allocation5 + $0x8] sm:$0xff]
    %v2229 = vld [vmem:[#allocation5 + $0x10] sm:$0xff]
    %v2230 = vld [vmem:[#allocation5 + $0x18] sm:$0xff]
    %v2231 = vld [vmem:[#allocation5 + $0x20] sm:$0xff]
    %v2232 = vld [vmem:[#allocation5 + $0x28] sm:$0xff]
    %v2233 = vld [vmem:[#allocation5 + $0x30] sm:$0xff]
    %v2234 = vld [vmem:[#allocation5 + $0x38] sm:$0xff]
    %v2235 = vld [vmem:[#allocation5 + $0x40] sm:$0xff]
    %v2236 = vld [vmem:[#allocation5 + $0x48] sm:$0xff]
    %v2237 = vld [vmem:[#allocation5 + $0x50] sm:$0xff]
    %v2238 = vld [vmem:[#allocation5 + $0x58] sm:$0xff]
    %v2239 = vld [vmem:[#allocation5 + $0x60] sm:$0xff]
    %v2240 = vld [vmem:[#allocation5 + $0x68] sm:$0xff]
    %v2241 = vld [vmem:[#allocation5 + $0x70] sm:$0xff]
    %v2242 = vld [vmem:[#allocation5 + $0x78] sm:$0xff]
    %2243 = vmatprep.subr.mxu0 0.0
    %2244 = vmatpush1.msra.mxu0 %v2227
    %2245 = vmatprep.subr.mxu0 0.0
    %2246 = vmatpush1.msra.mxu0 %v2228
    %2247 = vmatprep.subr.mxu0 0.0
    %2248 = vmatpush1.msra.mxu0 %v2229
    %2249 = vmatprep.subr.mxu0 0.0
    %2250 = vmatpush1.msra.mxu0 %v2230
    %2251 = vmatprep.subr.mxu0 0.0
    %2252 = vmatpush1.msra.mxu0 %v2231
    %2253 = vmatprep.subr.mxu0 0.0
    %2254 = vmatpush1.msra.mxu0 %v2232
    %2255 = vmatprep.subr.mxu0 0.0
    %2256 = vmatpush1.msra.mxu0 %v2233
    %2257 = vmatprep.subr.mxu0 0.0
    %2258 = vmatpush1.msra.mxu0 %v2234
    %2259 = vmatprep.subr.mxu0 0.0
    %2260 = vmatpush1.msra.mxu0 %v2235
    %2261 = vmatprep.subr.mxu0 0.0
    %2262 = vmatpush1.msra.mxu0 %v2236
    %2263 = vmatprep.subr.mxu0 0.0
    %2264 = vmatpush1.msra.mxu0 %v2237
    %2265 = vmatprep.subr.mxu0 0.0
    %2266 = vmatpush1.msra.mxu0 %v2238
    %2267 = vmatprep.subr.mxu0 0.0
    %2268 = vmatpush1.msra.mxu0 %v2239
    %2269 = vmatprep.subr.mxu0 0.0
    %2270 = vmatpush1.msra.mxu0 %v2240
    %2271 = vmatprep.subr.mxu0 0.0
    %2272 = vmatpush1.msra.mxu0 %v2241
    %2273 = vmatprep.subr.mxu0 0.0
    %2274 = vmatpush1.msra.mxu0 %v2242
    %2275 = vmatprep.subr.mxu0 0.0
    %2276 = vmatpush1.msra.mxu0 0.0
    %2277 = vmatprep.subr.mxu0 0.0
    %2278 = vmatpush1.msra.mxu0 0.0
    %2279 = vmatprep.subr.mxu0 0.0
    %2280 = vmatpush1.msra.mxu0 0.0
    %2281 = vmatprep.subr.mxu0 0.0
    %2282 = vmatpush1.msra.mxu0 0.0
    %2283 = vmatprep.subr.mxu0 0.0
    %2284 = vmatpush1.msra.mxu0 0.0
    %2285 = vmatprep.subr.mxu0 0.0
    %2286 = vmatpush1.msra.mxu0 0.0
    %2287 = vmatprep.subr.mxu0 0.0
    %2288 = vmatpush1.msra.mxu0 0.0
    %2289 = vmatprep.subr.mxu0 0.0
    %2290 = vmatpush1.msra.mxu0 0.0
    %2291 = vmatprep.subr.mxu0 0.0
    %2292 = vmatpush1.msra.mxu0 0.0
    %2293 = vmatprep.subr.mxu0 0.0
    %2294 = vmatpush1.msra.mxu0 0.0
    %2295 = vmatprep.subr.mxu0 0.0
    %2296 = vmatpush1.msra.mxu0 0.0
    %2297 = vmatprep.subr.mxu0 0.0
    %2298 = vmatpush1.msra.mxu0 0.0
    %2299 = vmatprep.subr.mxu0 0.0
    %2300 = vmatpush1.msra.mxu0 0.0
    %2301 = vmatprep.subr.mxu0 0.0
    %2302 = vmatpush1.msra.mxu0 0.0
    %2303 = vmatprep.subr.mxu0 0.0
    %2304 = vmatpush1.msra.mxu0 0.0
    %2305 = vmatprep.subr.mxu0 0.0
    %2306 = vmatpush1.msra.mxu0 0.0
    %2307 = vmatprep.mubr.f32.mxu0 0.0
    %2308 = vmatmul.mubr.f32.gmra.mrb[0].mxu0 %v2224
    %v2309 = vpop.f32.mrb[0].mxu0
    %v2310 = vadd.f32 0.0, %v2309
    %v2311 = vpop.f32.mrb[0].mxu0
    %2312 = vdwg.mxu0
    %v2313 = vld [vmem:[#allocation8] sm:$0xff]
    %v2314 = vld [vmem:[#allocation8 + $0x8] sm:$0xff]
    %v2315 = vld [vmem:[#allocation8 + $0x10] sm:$0xff]
    %v2316 = vld [vmem:[#allocation8 + $0x18] sm:$0xff]
    %v2317 = vld [vmem:[#allocation8 + $0x20] sm:$0xff]
    %v2318 = vld [vmem:[#allocation8 + $0x28] sm:$0xff]
    %v2319 = vld [vmem:[#allocation8 + $0x30] sm:$0xff]
    %v2320 = vld [vmem:[#allocation8 + $0x38] sm:$0xff]
    %v2321 = vld [vmem:[#allocation8 + $0x40] sm:$0xff]
    %v2322 = vld [vmem:[#allocation8 + $0x48] sm:$0xff]
    %v2323 = vld [vmem:[#allocation8 + $0x50] sm:$0xff]
    %v2324 = vld [vmem:[#allocation8 + $0x58] sm:$0xff]
    %v2325 = vld [vmem:[#allocation8 + $0x60] sm:$0xff]
    %v2326 = vld [vmem:[#allocation8 + $0x68] sm:$0xff]
    %v2327 = vld [vmem:[#allocation8 + $0x70] sm:$0xff]
    %v2328 = vld [vmem:[#allocation8 + $0x78] sm:$0xff]
    %2329 = vmatprep.subr.mxu0 0.0
    %2330 = vmatpush1.msra.mxu0 %v2313
    %2331 = vmatprep.subr.mxu0 0.0
    %2332 = vmatpush1.msra.mxu0 %v2314
    %2333 = vmatprep.subr.mxu0 0.0
    %2334 = vmatpush1.msra.mxu0 %v2315
    %2335 = vmatprep.subr.mxu0 0.0
    %2336 = vmatpush1.msra.mxu0 %v2316
    %2337 = vmatprep.subr.mxu0 0.0
    %2338 = vmatpush1.msra.mxu0 %v2317
    %2339 = vmatprep.subr.mxu0 0.0
    %2340 = vmatpush1.msra.mxu0 %v2318
    %2341 = vmatprep.subr.mxu0 0.0
    %2342 = vmatpush1.msra.mxu0 %v2319
    %2343 = vmatprep.subr.mxu0 0.0
    %2344 = vmatpush1.msra.mxu0 %v2320
    %2345 = vmatprep.subr.mxu0 0.0
    %2346 = vmatpush1.msra.mxu0 %v2321
    %2347 = vmatprep.subr.mxu0 0.0
    %2348 = vmatpush1.msra.mxu0 %v2322
    %2349 = vmatprep.subr.mxu0 0.0
    %2350 = vmatpush1.msra.mxu0 %v2323
    %2351 = vmatprep.subr.mxu0 0.0
    %2352 = vmatpush1.msra.mxu0 %v2324
    %2353 = vmatprep.subr.mxu0 0.0
    %2354 = vmatpush1.msra.mxu0 %v2325
    %2355 = vmatprep.subr.mxu0 0.0
    %2356 = vmatpush1.msra.mxu0 %v2326
    %2357 = vmatprep.subr.mxu0 0.0
    %2358 = vmatpush1.msra.mxu0 %v2327
    %2359 = vmatprep.subr.mxu0 0.0
    %2360 = vmatpush1.msra.mxu0 %v2328
    %2361 = vmatprep.subr.mxu0 0.0
    %2362 = vmatpush1.msra.mxu0 0.0
    %2363 = vmatprep.subr.mxu0 0.0
    %2364 = vmatpush1.msra.mxu0 0.0
    %2365 = vmatprep.subr.mxu0 0.0
    %2366 = vmatpush1.msra.mxu0 0.0
    %2367 = vmatprep.subr.mxu0 0.0
    %2368 = vmatpush1.msra.mxu0 0.0
    %2369 = vmatprep.subr.mxu0 0.0
    %2370 = vmatpush1.msra.mxu0 0.0
    %2371 = vmatprep.subr.mxu0 0.0
    %2372 = vmatpush1.msra.mxu0 0.0
    %2373 = vmatprep.subr.mxu0 0.0
    %2374 = vmatpush1.msra.mxu0 0.0
    %2375 = vmatprep.subr.mxu0 0.0
    %2376 = vmatpush1.msra.mxu0 0.0
    %2377 = vmatprep.subr.mxu0 0.0
    %2378 = vmatpush1.msra.mxu0 0.0
    %2379 = vmatprep.subr.mxu0 0.0
    %2380 = vmatpush1.msra.mxu0 0.0
    %2381 = vmatprep.subr.mxu0 0.0
    %2382 = vmatpush1.msra.mxu0 0.0
    %2383 = vmatprep.subr.mxu0 0.0
    %2384 = vmatpush1.msra.mxu0 0.0
    %2385 = vmatprep.subr.mxu0 0.0
    %2386 = vmatpush1.msra.mxu0 0.0
    %2387 = vmatprep.subr.mxu0 0.0
    %2388 = vmatpush1.msra.mxu0 0.0
    %2389 = vmatprep.subr.mxu0 0.0
    %2390 = vmatpush1.msra.mxu0 0.0
    %2391 = vmatprep.subr.mxu0 0.0
    %2392 = vmatpush1.msra.mxu0 0.0
    %2393 = vmatprep.mubr.f32.mxu0 0.0
    %2394 = vmatmul.mubr.f32.gmra.mrb[0].mxu0 %v2224
    %v2395 = vpop.f32.mrb[0].mxu0
    %v2396 = vadd.f32 0.0, %v2395
    %v2397 = vpop.f32.mrb[0].mxu0
    %2398 = vdwg.mxu0
    %v2399 = vld [vmem:[#allocation10] sm:$0xff]
    %v2400 = vld [vmem:[#allocation10 + $0x8] sm:$0xff]
    %v2401 = vld [vmem:[#allocation10 + $0x10] sm:$0xff]
    %v2402 = vld [vmem:[#allocation10 + $0x18] sm:$0xff]
    %v2403 = vld [vmem:[#allocation10 + $0x20] sm:$0xff]
    %v2404 = vld [vmem:[#allocation10 + $0x28] sm:$0xff]
    %v2405 = vld [vmem:[#allocation10 + $0x30] sm:$0xff]
    %v2406 = vld [vmem:[#allocation10 + $0x38] sm:$0xff]
    %v2407 = vld [vmem:[#allocation10 + $0x40] sm:$0xff]
    %v2408 = vld [vmem:[#allocation10 + $0x48] sm:$0xff]
    %v2409 = vld [vmem:[#allocation10 + $0x50] sm:$0xff]
    %v2410 = vld [vmem:[#allocation10 + $0x58] sm:$0xff]
    %v2411 = vld [vmem:[#allocation10 + $0x60] sm:$0xff]
    %v2412 = vld [vmem:[#allocation10 + $0x68] sm:$0xff]
    %v2413 = vld [vmem:[#allocation10 + $0x70] sm:$0xff]
    %v2414 = vld [vmem:[#allocation10 + $0x78] sm:$0xff]
    %2415 = vmatprep.subr.mxu0 0.0
    %2416 = vmatpush1.msra.mxu0 %v2399
    %2417 = vmatprep.subr.mxu0 0.0
    %2418 = vmatpush1.msra.mxu0 %v2400
    %2419 = vmatprep.subr.mxu0 0.0
    %2420 = vmatpush1.msra.mxu0 %v2401
    %2421 = vmatprep.subr.mxu0 0.0
    %2422 = vmatpush1.msra.mxu0 %v2402
    %2423 = vmatprep.subr.mxu0 0.0
    %2424 = vmatpush1.msra.mxu0 %v2403
    %2425 = vmatprep.subr.mxu0 0.0
    %2426 = vmatpush1.msra.mxu0 %v2404
    %2427 = vmatprep.subr.mxu0 0.0
    %2428 = vmatpush1.msra.mxu0 %v2405
    %2429 = vmatprep.subr.mxu0 0.0
    %2430 = vmatpush1.msra.mxu0 %v2406
    %2431 = vmatprep.subr.mxu0 0.0
    %2432 = vmatpush1.msra.mxu0 %v2407
    %2433 = vmatprep.subr.mxu0 0.0
    %2434 = vmatpush1.msra.mxu0 %v2408
    %2435 = vmatprep.subr.mxu0 0.0
    %2436 = vmatpush1.msra.mxu0 %v2409
    %2437 = vmatprep.subr.mxu0 0.0
    %2438 = vmatpush1.msra.mxu0 %v2410
    %2439 = vmatprep.subr.mxu0 0.0
    %2440 = vmatpush1.msra.mxu0 %v2411
    %2441 = vmatprep.subr.mxu0 0.0
    %2442 = vmatpush1.msra.mxu0 %v2412
    %2443 = vmatprep.subr.mxu0 0.0
    %2444 = vmatpush1.msra.mxu0 %v2413
    %2445 = vmatprep.subr.mxu0 0.0
    %2446 = vmatpush1.msra.mxu0 %v2414
    %2447 = vmatprep.subr.mxu0 0.0
    %2448 = vmatpush1.msra.mxu0 0.0
    %2449 = vmatprep.subr.mxu0 0.0
    %2450 = vmatpush1.msra.mxu0 0.0
    %2451 = vmatprep.subr.mxu0 0.0
    %2452 = vmatpush1.msra.mxu0 0.0
    %2453 = vmatprep.subr.mxu0 0.0
    %2454 = vmatpush1.msra.mxu0 0.0
    %2455 = vmatprep.subr.mxu0 0.0
    %2456 = vmatpush1.msra.mxu0 0.0
    %2457 = vmatprep.subr.mxu0 0.0
    %2458 = vmatpush1.msra.mxu0 0.0
    %2459 = vmatprep.subr.mxu0 0.0
    %2460 = vmatpush1.msra.mxu0 0.0
    %2461 = vmatprep.subr.mxu0 0.0
    %2462 = vmatpush1.msra.mxu0 0.0
    %2463 = vmatprep.subr.mxu0 0.0
    %2464 = vmatpush1.msra.mxu0 0.0
    %2465 = vmatprep.subr.mxu0 0.0
    %2466 = vmatpush1.msra.mxu0 0.0
    %2467 = vmatprep.subr.mxu0 0.0
    %2468 = vmatpush1.msra.mxu0 0.0
    %2469 = vmatprep.subr.mxu0 0.0
    %2470 = vmatpush1.msra.mxu0 0.0
    %2471 = vmatprep.subr.mxu0 0.0
    %2472 = vmatpush1.msra.mxu0 0.0
    %2473 = vmatprep.subr.mxu0 0.0
    %2474 = vmatpush1.msra.mxu0 0.0
    %2475 = vmatprep.subr.mxu0 0.0
    %2476 = vmatpush1.msra.mxu0 0.0
    %2477 = vmatprep.subr.mxu0 0.0
    %2478 = vmatpush1.msra.mxu0 0.0
    %2479 = vmatprep.mubr.f32.mxu0 0.0
    %2480 = vmatmul.mubr.f32.gmra.mrb[0].mxu0 %v2224
    %v2481 = vpop.f32.mrb[0].mxu0
    %v2482 = vadd.f32 %v507, %v2481
    %v2483 = vpop.f32.mrb[0].mxu0
    %2484 = vdwg.mxu0
    %s2485 = scalar_lea.vmem [#allocation2], 48
    %v2486 = vld [vmem:[%s2485] sm:$0xff]
    %v2487 = vadd.f32 %v2486, %v2310
    %v2488 = vxor.u32 %v2487, 2147483648
    %v2489 = vmul.f32 %v2488, 1.442695
    %v2490 = vpow.pop %v2489
    %v2491 = vadd.f32 %v2490, 1.0
    %v2492 = vrcp.pop %v2491
    %v2493 = vmul.f32 1.0, %v2492
    %s2494 = scalar_lea.vmem [#allocation3], 48
    %v2495 = vld [vmem:[%s2494] sm:$0xff]
    %v2496 = vadd.f32 %v2495, %v2396
    %v2497 = vxor.u32 %v2496, 2147483648
    %v2498 = vmul.f32 %v2497, 1.442695
    %v2499 = vpow.pop %v2498
    %v2500 = vadd.f32 %v2499, 1.0
    %v2501 = vrcp.pop %v2500
    %v2502 = vmul.f32 1.0, %v2501
    %s2503 = scalar_lea.vmem [#allocation4], 48
    %v2504 = vld [vmem:[%s2503] sm:$0xff]
    %v2505 = vmul.f32 %v2493, %v2482
    %v2506 = vadd.f32 %v2504, %v2505
    %v2507 = vtanh.pop %v2506
    %v2508 = vsub.f32 1.0, %v2502
    %v2509 = vmul.f32 %v2508, %v2507
    %v2510 = vmul.f32 %v2502, %v2224
    %v2511 = vadd.f32 %v2509, %v2510
    %s2512 = scalar_lea.vmem [#allocation14], 48
    %2513 = vst [vmem:[%s2512] sm:$0xff] %v2511
    %v2514 = vld [vmem:[#allocation5] sm:$0xff]
    %v2515 = vld [vmem:[#allocation5 + $0x8] sm:$0xff]
    %v2516 = vld [vmem:[#allocation5 + $0x10] sm:$0xff]
    %v2517 = vld [vmem:[#allocation5 + $0x18] sm:$0xff]
    %v2518 = vld [vmem:[#allocation5 + $0x20] sm:$0xff]
    %v2519 = vld [vmem:[#allocation5 + $0x28] sm:$0xff]
    %v2520 = vld [vmem:[#allocation5 + $0x30] sm:$0xff]
    %v2521 = vld [vmem:[#allocation5 + $0x38] sm:$0xff]
    %v2522 = vld [vmem:[#allocation5 + $0x40] sm:$0xff]
    %v2523 = vld [vmem:[#allocation5 + $0x48] sm:$0xff]
    %v2524 = vld [vmem:[#allocation5 + $0x50] sm:$0xff]
    %v2525 = vld [vmem:[#allocation5 + $0x58] sm:$0xff]
    %v2526 = vld [vmem:[#allocation5 + $0x60] sm:$0xff]
    %v2527 = vld [vmem:[#allocation5 + $0x68] sm:$0xff]
    %v2528 = vld [vmem:[#allocation5 + $0x70] sm:$0xff]
    %v2529 = vld [vmem:[#allocation5 + $0x78] sm:$0xff]
    %2530 = vmatprep.subr.mxu0 0.0
    %2531 = vmatpush1.msra.mxu0 %v2514
    %2532 = vmatprep.subr.mxu0 0.0
    %2533 = vmatpush1.msra.mxu0 %v2515
    %2534 = vmatprep.subr.mxu0 0.0
    %2535 = vmatpush1.msra.mxu0 %v2516
    %2536 = vmatprep.subr.mxu0 0.0
    %2537 = vmatpush1.msra.mxu0 %v2517
    %2538 = vmatprep.subr.mxu0 0.0
    %2539 = vmatpush1.msra.mxu0 %v2518
    %2540 = vmatprep.subr.mxu0 0.0
    %2541 = vmatpush1.msra.mxu0 %v2519
    %2542 = vmatprep.subr.mxu0 0.0
    %2543 = vmatpush1.msra.mxu0 %v2520
    %2544 = vmatprep.subr.mxu0 0.0
    %2545 = vmatpush1.msra.mxu0 %v2521
    %2546 = vmatprep.subr.mxu0 0.0
    %2547 = vmatpush1.msra.mxu0 %v2522
    %2548 = vmatprep.subr.mxu0 0.0
    %2549 = vmatpush1.msra.mxu0 %v2523
    %2550 = vmatprep.subr.mxu0 0.0
    %2551 = vmatpush1.msra.mxu0 %v2524
    %2552 = vmatprep.subr.mxu0 0.0
    %2553 = vmatpush1.msra.mxu0 %v2525
    %2554 = vmatprep.subr.mxu0 0.0
    %2555 = vmatpush1.msra.mxu0 %v2526
    %2556 = vmatprep.subr.mxu0 0.0
    %2557 = vmatpush1.msra.mxu0 %v2527
    %2558 = vmatprep.subr.mxu0 0.0
    %2559 = vmatpush1.msra.mxu0 %v2528
    %2560 = vmatprep.subr.mxu0 0.0
    %2561 = vmatpush1.msra.mxu0 %v2529
    %2562 = vmatprep.subr.mxu0 0.0
    %2563 = vmatpush1.msra.mxu0 0.0
    %2564 = vmatprep.subr.mxu0 0.0
    %2565 = vmatpush1.msra.mxu0 0.0
    %2566 = vmatprep.subr.mxu0 0.0
    %2567 = vmatpush1.msra.mxu0 0.0
    %2568 = vmatprep.subr.mxu0 0.0
    %2569 = vmatpush1.msra.mxu0 0.0
    %2570 = vmatprep.subr.mxu0 0.0
    %2571 = vmatpush1.msra.mxu0 0.0
    %2572 = vmatprep.subr.mxu0 0.0
    %2573 = vmatpush1.msra.mxu0 0.0
    %2574 = vmatprep.subr.mxu0 0.0
    %2575 = vmatpush1.msra.mxu0 0.0
    %2576 = vmatprep.subr.mxu0 0.0
    %2577 = vmatpush1.msra.mxu0 0.0
    %2578 = vmatprep.subr.mxu0 0.0
    %2579 = vmatpush1.msra.mxu0 0.0
    %2580 = vmatprep.subr.mxu0 0.0
    %2581 = vmatpush1.msra.mxu0 0.0
    %2582 = vmatprep.subr.mxu0 0.0
    %2583 = vmatpush1.msra.mxu0 0.0
    %2584 = vmatprep.subr.mxu0 0.0
    %2585 = vmatpush1.msra.mxu0 0.0
    %2586 = vmatprep.subr.mxu0 0.0
    %2587 = vmatpush1.msra.mxu0 0.0
    %2588 = vmatprep.subr.mxu0 0.0
    %2589 = vmatpush1.msra.mxu0 0.0
    %2590 = vmatprep.subr.mxu0 0.0
    %2591 = vmatpush1.msra.mxu0 0.0
    %2592 = vmatprep.subr.mxu0 0.0
    %2593 = vmatpush1.msra.mxu0 0.0
    %2594 = vmatprep.mubr.f32.mxu0 0.0
    %2595 = vmatmul.mubr.f32.gmra.mrb[0].mxu0 %v2511
    %v2596 = vpop.f32.mrb[0].mxu0
    %v2597 = vadd.f32 0.0, %v2596
    %v2598 = vpop.f32.mrb[0].mxu0
    %2599 = vdwg.mxu0
    %v2600 = vld [vmem:[#allocation8] sm:$0xff]
    %v2601 = vld [vmem:[#allocation8 + $0x8] sm:$0xff]
    %v2602 = vld [vmem:[#allocation8 + $0x10] sm:$0xff]
    %v2603 = vld [vmem:[#allocation8 + $0x18] sm:$0xff]
    %v2604 = vld [vmem:[#allocation8 + $0x20] sm:$0xff]
    %v2605 = vld [vmem:[#allocation8 + $0x28] sm:$0xff]
    %v2606 = vld [vmem:[#allocation8 + $0x30] sm:$0xff]
    %v2607 = vld [vmem:[#allocation8 + $0x38] sm:$0xff]
    %v2608 = vld [vmem:[#allocation8 + $0x40] sm:$0xff]
    %v2609 = vld [vmem:[#allocation8 + $0x48] sm:$0xff]
    %v2610 = vld [vmem:[#allocation8 + $0x50] sm:$0xff]
    %v2611 = vld [vmem:[#allocation8 + $0x58] sm:$0xff]
    %v2612 = vld [vmem:[#allocation8 + $0x60] sm:$0xff]
    %v2613 = vld [vmem:[#allocation8 + $0x68] sm:$0xff]
    %v2614 = vld [vmem:[#allocation8 + $0x70] sm:$0xff]
    %v2615 = vld [vmem:[#allocation8 + $0x78] sm:$0xff]
    %2616 = vmatprep.subr.mxu0 0.0
    %2617 = vmatpush1.msra.mxu0 %v2600
    %2618 = vmatprep.subr.mxu0 0.0
    %2619 = vmatpush1.msra.mxu0 %v2601
    %2620 = vmatprep.subr.mxu0 0.0
    %2621 = vmatpush1.msra.mxu0 %v2602
    %2622 = vmatprep.subr.mxu0 0.0
    %2623 = vmatpush1.msra.mxu0 %v2603
    %2624 = vmatprep.subr.mxu0 0.0
    %2625 = vmatpush1.msra.mxu0 %v2604
    %2626 = vmatprep.subr.mxu0 0.0
    %2627 = vmatpush1.msra.mxu0 %v2605
    %2628 = vmatprep.subr.mxu0 0.0
    %2629 = vmatpush1.msra.mxu0 %v2606
    %2630 = vmatprep.subr.mxu0 0.0
    %2631 = vmatpush1.msra.mxu0 %v2607
    %2632 = vmatprep.subr.mxu0 0.0
    %2633 = vmatpush1.msra.mxu0 %v2608
    %2634 = vmatprep.subr.mxu0 0.0
    %2635 = vmatpush1.msra.mxu0 %v2609
    %2636 = vmatprep.subr.mxu0 0.0
    %2637 = vmatpush1.msra.mxu0 %v2610
    %2638 = vmatprep.subr.mxu0 0.0
    %2639 = vmatpush1.msra.mxu0 %v2611
    %2640 = vmatprep.subr.mxu0 0.0
    %2641 = vmatpush1.msra.mxu0 %v2612
    %2642 = vmatprep.subr.mxu0 0.0
    %2643 = vmatpush1.msra.mxu0 %v2613
    %2644 = vmatprep.subr.mxu0 0.0
    %2645 = vmatpush1.msra.mxu0 %v2614
    %2646 = vmatprep.subr.mxu0 0.0
    %2647 = vmatpush1.msra.mxu0 %v2615
    %2648 = vmatprep.subr.mxu0 0.0
    %2649 = vmatpush1.msra.mxu0 0.0
    %2650 = vmatprep.subr.mxu0 0.0
    %2651 = vmatpush1.msra.mxu0 0.0
    %2652 = vmatprep.subr.mxu0 0.0
    %2653 = vmatpush1.msra.mxu0 0.0
    %2654 = vmatprep.subr.mxu0 0.0
    %2655 = vmatpush1.msra.mxu0 0.0
    %2656 = vmatprep.subr.mxu0 0.0
    %2657 = vmatpush1.msra.mxu0 0.0
    %2658 = vmatprep.subr.mxu0 0.0
    %2659 = vmatpush1.msra.mxu0 0.0
    %2660 = vmatprep.subr.mxu0 0.0
    %2661 = vmatpush1.msra.mxu0 0.0
    %2662 = vmatprep.subr.mxu0 0.0
    %2663 = vmatpush1.msra.mxu0 0.0
    %2664 = vmatprep.subr.mxu0 0.0
    %2665 = vmatpush1.msra.mxu0 0.0
    %2666 = vmatprep.subr.mxu0 0.0
    %2667 = vmatpush1.msra.mxu0 0.0
    %2668 = vmatprep.subr.mxu0 0.0
    %2669 = vmatpush1.msra.mxu0 0.0
    %2670 = vmatprep.subr.mxu0 0.0
    %2671 = vmatpush1.msra.mxu0 0.0
    %2672 = vmatprep.subr.mxu0 0.0
    %2673 = vmatpush1.msra.mxu0 0.0
    %2674 = vmatprep.subr.mxu0 0.0
    %2675 = vmatpush1.msra.mxu0 0.0
    %2676 = vmatprep.subr.mxu0 0.0
    %2677 = vmatpush1.msra.mxu0 0.0
    %2678 = vmatprep.subr.mxu0 0.0
    %2679 = vmatpush1.msra.mxu0 0.0
    %2680 = vmatprep.mubr.f32.mxu0 0.0
    %2681 = vmatmul.mubr.f32.gmra.mrb[0].mxu0 %v2511
    %v2682 = vpop.f32.mrb[0].mxu0
    %v2683 = vadd.f32 0.0, %v2682
    %v2684 = vpop.f32.mrb[0].mxu0
    %2685 = vdwg.mxu0
    %v2686 = vld [vmem:[#allocation10] sm:$0xff]
    %v2687 = vld [vmem:[#allocation10 + $0x8] sm:$0xff]
    %v2688 = vld [vmem:[#allocation10 + $0x10] sm:$0xff]
    %v2689 = vld [vmem:[#allocation10 + $0x18] sm:$0xff]
    %v2690 = vld [vmem:[#allocation10 + $0x20] sm:$0xff]
    %v2691 = vld [vmem:[#allocation10 + $0x28] sm:$0xff]
    %v2692 = vld [vmem:[#allocation10 + $0x30] sm:$0xff]
    %v2693 = vld [vmem:[#allocation10 + $0x38] sm:$0xff]
    %v2694 = vld [vmem:[#allocation10 + $0x40] sm:$0xff]
    %v2695 = vld [vmem:[#allocation10 + $0x48] sm:$0xff]
    %v2696 = vld [vmem:[#allocation10 + $0x50] sm:$0xff]
    %v2697 = vld [vmem:[#allocation10 + $0x58] sm:$0xff]
    %v2698 = vld [vmem:[#allocation10 + $0x60] sm:$0xff]
    %v2699 = vld [vmem:[#allocation10 + $0x68] sm:$0xff]
    %v2700 = vld [vmem:[#allocation10 + $0x70] sm:$0xff]
    %v2701 = vld [vmem:[#allocation10 + $0x78] sm:$0xff]
    %2702 = vmatprep.subr.mxu0 0.0
    %2703 = vmatpush1.msra.mxu0 %v2686
    %2704 = vmatprep.subr.mxu0 0.0
    %2705 = vmatpush1.msra.mxu0 %v2687
    %2706 = vmatprep.subr.mxu0 0.0
    %2707 = vmatpush1.msra.mxu0 %v2688
    %2708 = vmatprep.subr.mxu0 0.0
    %2709 = vmatpush1.msra.mxu0 %v2689
    %2710 = vmatprep.subr.mxu0 0.0
    %2711 = vmatpush1.msra.mxu0 %v2690
    %2712 = vmatprep.subr.mxu0 0.0
    %2713 = vmatpush1.msra.mxu0 %v2691
    %2714 = vmatprep.subr.mxu0 0.0
    %2715 = vmatpush1.msra.mxu0 %v2692
    %2716 = vmatprep.subr.mxu0 0.0
    %2717 = vmatpush1.msra.mxu0 %v2693
    %2718 = vmatprep.subr.mxu0 0.0
    %2719 = vmatpush1.msra.mxu0 %v2694
    %2720 = vmatprep.subr.mxu0 0.0
    %2721 = vmatpush1.msra.mxu0 %v2695
    %2722 = vmatprep.subr.mxu0 0.0
    %2723 = vmatpush1.msra.mxu0 %v2696
    %2724 = vmatprep.subr.mxu0 0.0
    %2725 = vmatpush1.msra.mxu0 %v2697
    %2726 = vmatprep.subr.mxu0 0.0
    %2727 = vmatpush1.msra.mxu0 %v2698
    %2728 = vmatprep.subr.mxu0 0.0
    %2729 = vmatpush1.msra.mxu0 %v2699
    %2730 = vmatprep.subr.mxu0 0.0
    %2731 = vmatpush1.msra.mxu0 %v2700
    %2732 = vmatprep.subr.mxu0 0.0
    %2733 = vmatpush1.msra.mxu0 %v2701
    %2734 = vmatprep.subr.mxu0 0.0
    %2735 = vmatpush1.msra.mxu0 0.0
    %2736 = vmatprep.subr.mxu0 0.0
    %2737 = vmatpush1.msra.mxu0 0.0
    %2738 = vmatprep.subr.mxu0 0.0
    %2739 = vmatpush1.msra.mxu0 0.0
    %2740 = vmatprep.subr.mxu0 0.0
    %2741 = vmatpush1.msra.mxu0 0.0
    %2742 = vmatprep.subr.mxu0 0.0
    %2743 = vmatpush1.msra.mxu0 0.0
    %2744 = vmatprep.subr.mxu0 0.0
    %2745 = vmatpush1.msra.mxu0 0.0
    %2746 = vmatprep.subr.mxu0 0.0
    %2747 = vmatpush1.msra.mxu0 0.0
    %2748 = vmatprep.subr.mxu0 0.0
    %2749 = vmatpush1.msra.mxu0 0.0
    %2750 = vmatprep.subr.mxu0 0.0
    %2751 = vmatpush1.msra.mxu0 0.0
    %2752 = vmatprep.subr.mxu0 0.0
    %2753 = vmatpush1.msra.mxu0 0.0
    %2754 = vmatprep.subr.mxu0 0.0
    %2755 = vmatpush1.msra.mxu0 0.0
    %2756 = vmatprep.subr.mxu0 0.0
    %2757 = vmatpush1.msra.mxu0 0.0
    %2758 = vmatprep.subr.mxu0 0.0
    %2759 = vmatpush1.msra.mxu0 0.0
    %2760 = vmatprep.subr.mxu0 0.0
    %2761 = vmatpush1.msra.mxu0 0.0
    %2762 = vmatprep.subr.mxu0 0.0
    %2763 = vmatpush1.msra.mxu0 0.0
    %2764 = vmatprep.subr.mxu0 0.0
    %2765 = vmatpush1.msra.mxu0 0.0
    %2766 = vmatprep.mubr.f32.mxu0 0.0
    %2767 = vmatmul.mubr.f32.gmra.mrb[0].mxu0 %v2511
    %v2768 = vpop.f32.mrb[0].mxu0
    %v2769 = vadd.f32 %v507, %v2768
    %v2770 = vpop.f32.mrb[0].mxu0
    %2771 = vdwg.mxu0
    %s2772 = scalar_lea.vmem [#allocation2], 56
    %v2773 = vld [vmem:[%s2772] sm:$0xff]
    %v2774 = vadd.f32 %v2773, %v2597
    %v2775 = vxor.u32 %v2774, 2147483648
    %v2776 = vmul.f32 %v2775, 1.442695
    %v2777 = vpow.pop %v2776
    %v2778 = vadd.f32 %v2777, 1.0
    %v2779 = vrcp.pop %v2778
    %v2780 = vmul.f32 1.0, %v2779
    %s2781 = scalar_lea.vmem [#allocation3], 56
    %v2782 = vld [vmem:[%s2781] sm:$0xff]
    %v2783 = vadd.f32 %v2782, %v2683
    %v2784 = vxor.u32 %v2783, 2147483648
    %v2785 = vmul.f32 %v2784, 1.442695
    %v2786 = vpow.pop %v2785
    %v2787 = vadd.f32 %v2786, 1.0
    %v2788 = vrcp.pop %v2787
    %v2789 = vmul.f32 1.0, %v2788
    %s2790 = scalar_lea.vmem [#allocation4], 56
    %v2791 = vld [vmem:[%s2790] sm:$0xff]
    %v2792 = vmul.f32 %v2780, %v2769
    %v2793 = vadd.f32 %v2791, %v2792
    %v2794 = vtanh.pop %v2793
    %v2795 = vsub.f32 1.0, %v2789
    %v2796 = vmul.f32 %v2795, %v2794
    %v2797 = vmul.f32 %v2789, %v2511
    %v2798 = vadd.f32 %v2796, %v2797
    %s2799 = scalar_lea.vmem [#allocation14], 56
    %2800 = vst [vmem:[%s2799] sm:$0xff] %v2798
    %v2801 = vld [vmem:[#allocation14] sm:$0xff]
    %v2802 = vld [vmem:[#allocation14 + $0x8] sm:$0xff]
    %v2803 = vld [vmem:[#allocation14 + $0x10] sm:$0xff]
    %v2804 = vld [vmem:[#allocation14 + $0x18] sm:$0xff]
    %v2805 = vld [vmem:[#allocation14 + $0x20] sm:$0xff]
    %v2806 = vld [vmem:[#allocation14 + $0x28] sm:$0xff]
    %v2807 = vld [vmem:[#allocation14 + $0x30] sm:$0xff]
    %v2808 = vld [vmem:[#allocation14 + $0x38] sm:$0xff]
    %v2809 = vld [vmem:[#allocation11] sm:$0xff]
    %v2810 = vld [vmem:[#allocation11 + $0x8] sm:$0xff]
    %v2811 = vld [vmem:[#allocation11 + $0x10] sm:$0xff]
    %v2812 = vld [vmem:[#allocation11 + $0x18] sm:$0xff]
    %v2813 = vld [vmem:[#allocation11 + $0x20] sm:$0xff]
    %v2814 = vld [vmem:[#allocation11 + $0x28] sm:$0xff]
    %v2815 = vld [vmem:[#allocation11 + $0x30] sm:$0xff]
    %v2816 = vld [vmem:[#allocation11 + $0x38] sm:$0xff]
    %v2817 = vld [vmem:[#allocation11 + $0x40] sm:$0xff]
    %v2818 = vld [vmem:[#allocation11 + $0x48] sm:$0xff]
    %v2819 = vld [vmem:[#allocation11 + $0x50] sm:$0xff]
    %v2820 = vld [vmem:[#allocation11 + $0x58] sm:$0xff]
    %v2821 = vld [vmem:[#allocation11 + $0x60] sm:$0xff]
    %v2822 = vld [vmem:[#allocation11 + $0x68] sm:$0xff]
    %v2823 = vld [vmem:[#allocation11 + $0x70] sm:$0xff]
    %v2824 = vld [vmem:[#allocation11 + $0x78] sm:$0xff]
    %v2825 = vld [vmem:[%s12] sm:$0x1]
    %v2827 = vlaneseq
    %v2828 = vshrl.u32 %v2827, 7
    %v2829 = vsub.s32 0, %v2828
    %v2830 = vrot.slane %v2825, %v2829
    %2832 = vmatprep.subr.mxu0 0.0
    %2833 = vmatpush1.msra.mxu0 %v2809
    %2834 = vmatprep.subr.mxu0 0.0
    %2835 = vmatpush1.msra.mxu0 %v2810
    %2836 = vmatprep.subr.mxu0 0.0
    %2837 = vmatpush1.msra.mxu0 %v2811
    %2838 = vmatprep.subr.mxu0 0.0
    %2839 = vmatpush1.msra.mxu0 %v2812
    %2840 = vmatprep.subr.mxu0 0.0
    %2841 = vmatpush1.msra.mxu0 %v2813
    %2842 = vmatprep.subr.mxu0 0.0
    %2843 = vmatpush1.msra.mxu0 %v2814
    %2844 = vmatprep.subr.mxu0 0.0
    %2845 = vmatpush1.msra.mxu0 %v2815
    %2846 = vmatprep.subr.mxu0 0.0
    %2847 = vmatpush1.msra.mxu0 %v2816
    %2848 = vmatprep.subr.mxu0 0.0
    %2849 = vmatpush1.msra.mxu0 %v2817
    %2850 = vmatprep.subr.mxu0 0.0
    %2851 = vmatpush1.msra.mxu0 %v2818
    %2852 = vmatprep.subr.mxu0 0.0
    %2853 = vmatpush1.msra.mxu0 %v2819
    %2854 = vmatprep.subr.mxu0 0.0
    %2855 = vmatpush1.msra.mxu0 %v2820
    %2856 = vmatprep.subr.mxu0 0.0
    %2857 = vmatpush1.msra.mxu0 %v2821
    %2858 = vmatprep.subr.mxu0 0.0
    %2859 = vmatpush1.msra.mxu0 %v2822
    %2860 = vmatprep.subr.mxu0 0.0
    %2861 = vmatpush1.msra.mxu0 %v2823
    %2862 = vmatprep.subr.mxu0 0.0
    %2863 = vmatpush1.msra.mxu0 %v2824
    %2864 = vmatprep.subr.mxu0 0.0
    %2865 = vmatpush1.msra.mxu0 0.0
    %2866 = vmatprep.subr.mxu0 0.0
    %2867 = vmatpush1.msra.mxu0 0.0
    %2868 = vmatprep.subr.mxu0 0.0
    %2869 = vmatpush1.msra.mxu0 0.0
    %2870 = vmatprep.subr.mxu0 0.0
    %2871 = vmatpush1.msra.mxu0 0.0
    %2872 = vmatprep.subr.mxu0 0.0
    %2873 = vmatpush1.msra.mxu0 0.0
    %2874 = vmatprep.subr.mxu0 0.0
    %2875 = vmatpush1.msra.mxu0 0.0
    %2876 = vmatprep.subr.mxu0 0.0
    %2877 = vmatpush1.msra.mxu0 0.0
    %2878 = vmatprep.subr.mxu0 0.0
    %2879 = vmatpush1.msra.mxu0 0.0
    %2880 = vmatprep.subr.mxu0 0.0
    %2881 = vmatpush1.msra.mxu0 0.0
    %2882 = vmatprep.subr.mxu0 0.0
    %2883 = vmatpush1.msra.mxu0 0.0
    %2884 = vmatprep.subr.mxu0 0.0
    %2885 = vmatpush1.msra.mxu0 0.0
    %2886 = vmatprep.subr.mxu0 0.0
    %2887 = vmatpush1.msra.mxu0 0.0
    %2888 = vmatprep.subr.mxu0 0.0
    %2889 = vmatpush1.msra.mxu0 0.0
    %2890 = vmatprep.subr.mxu0 0.0
    %2891 = vmatpush1.msra.mxu0 0.0
    %2892 = vmatprep.subr.mxu0 0.0
    %2893 = vmatpush1.msra.mxu0 0.0
    %2894 = vmatprep.subr.mxu0 0.0
    %2895 = vmatpush1.msra.mxu0 0.0
    %2896 = vmatprep.mubr.f32.mxu0 0.0
    %2897 = vmatmul.mubr.f32.gmra.mrb[0].mxu0 %v2801
    %v2898 = vpop.f32.mrb[0].mxu0
    %v2899 = vadd.f32 %v2830, %v2898
    %v2900 = vpop.f32.mrb[0].mxu0
    %2901 = vmatprep.mubr.f32.mxu0 0.0
    %2902 = vmatmul.mubr.f32.gmra.mrb[0].mxu0 %v2802
    %v2903 = vpop.f32.mrb[0].mxu0
    %v2904 = vadd.f32 %v2830, %v2903
    %v2905 = vpop.f32.mrb[0].mxu0
    %2906 = vmatprep.mubr.f32.mxu0 0.0
    %2907 = vmatmul.mubr.f32.gmra.mrb[0].mxu0 %v2803
    %v2908 = vpop.f32.mrb[0].mxu0
    %v2909 = vadd.f32 %v2830, %v2908
    %v2910 = vpop.f32.mrb[0].mxu0
    %2911 = vmatprep.mubr.f32.mxu0 0.0
    %2912 = vmatmul.mubr.f32.gmra.mrb[0].mxu0 %v2804
    %v2913 = vpop.f32.mrb[0].mxu0
    %v2914 = vadd.f32 %v2830, %v2913
    %v2915 = vpop.f32.mrb[0].mxu0
    %2916 = vmatprep.mubr.f32.mxu0 0.0
    %2917 = vmatmul.mubr.f32.gmra.mrb[0].mxu0 %v2805
    %v2918 = vpop.f32.mrb[0].mxu0
    %v2919 = vadd.f32 %v2830, %v2918
    %v2920 = vpop.f32.mrb[0].mxu0
    %2921 = vmatprep.mubr.f32.mxu0 0.0
    %2922 = vmatmul.mubr.f32.gmra.mrb[0].mxu0 %v2806
    %v2923 = vpop.f32.mrb[0].mxu0
    %v2924 = vadd.f32 %v2830, %v2923
    %v2925 = vpop.f32.mrb[0].mxu0
    %2926 = vmatprep.mubr.f32.mxu0 0.0
    %2927 = vmatmul.mubr.f32.gmra.mrb[0].mxu0 %v2807
    %v2928 = vpop.f32.mrb[0].mxu0
    %v2929 = vadd.f32 %v2830, %v2928
    %v2930 = vpop.f32.mrb[0].mxu0
    %2931 = vmatprep.mubr.f32.mxu0 0.0
    %2932 = vmatmul.mubr.f32.gmra.mrb[0].mxu0 %v2808
    %v2933 = vpop.f32.mrb[0].mxu0
    %v2934 = vadd.f32 %v2830, %v2933
    %v2935 = vpop.f32.mrb[0].mxu0
    %2936 = vdwg.mxu0
    %2937 = vst [vmem:[#allocation13] sm:$0xff] %v2899
    %2938 = vst [vmem:[#allocation13 + $0x8] sm:$0xff] %v2904
    %2939 = vst [vmem:[#allocation13 + $0x10] sm:$0xff] %v2909
    %2940 = vst [vmem:[#allocation13 + $0x18] sm:$0xff] %v2914
    %2941 = vst [vmem:[#allocation13 + $0x20] sm:$0xff] %v2919
    %2942 = vst [vmem:[#allocation13 + $0x28] sm:$0xff] %v2924
    %2943 = vst [vmem:[#allocation13 + $0x30] sm:$0xff] %v2929
    %2944 = vst [vmem:[#allocation13 + $0x38] sm:$0xff] %v2934
    // Predicated region
    $region70: #{tpu_custom_call.1} parent=1 // pred_check
      _
    $region71: #{tpu_custom_call.1} parent=1 // pred_check_branch
      %2946 = sbr.rel (0) target = $region73
    $region72: #{tpu_custom_call.1} parent=1 // pred_region
      %s2948 = ssub.s32 1024, 1024
      %2949 = vsyncadd [#allocation7], %s2948
      %s2950 = sshll.u32 [#allocation13], 4
      %s2951 = int_to_ptr.vmem [resolvable:$true] %s2950
      %2956 = dma.vmem_to_hbm [thread:$0]  %s2951, 1024, %s13, [#allocation7], 128, 128, 8
    $region73: #{tpu_custom_call.1} parent=1 // pred_fallthru
      _
    // Predicated region
    $region74: #{tpu_custom_call.1} parent=1 // pred_check
      _
    $region75: #{tpu_custom_call.1} parent=1 // pred_check_branch
      %2958 = sbr.rel (0) target = $region77
    $region76: #{tpu_custom_call.1} parent=1 // pred_region
      %s2960 = ssub.s32 1024, 1024
      %2961 = vsyncadd [#allocation15], %s2960
      %s2962 = sshll.u32 [#allocation14], 4
      %s2963 = int_to_ptr.vmem [resolvable:$true] %s2962
      %2968 = dma.vmem_to_hbm [thread:$0]  %s2963, 1024, %s14, [#allocation15], 128, 128, 8
    $region77: #{tpu_custom_call.1} parent=1 // pred_fallthru
      _
    // Predicated region
    $region78: #{tpu_custom_call.1} parent=1 // pred_check
      _
    $region79: #{tpu_custom_call.1} parent=1 // pred_check_branch
      %2970 = sbr.rel (0) target = $region81
    $region80: #{tpu_custom_call.1} parent=1 // pred_region
      %2971 = dma.done [#allocation7], 1024
    $region81: #{tpu_custom_call.1} parent=1 // pred_fallthru
      _
    // Predicated region
    $region82: #{tpu_custom_call.1} parent=1 // pred_check
      _
    $region83: #{tpu_custom_call.1} parent=1 // pred_check_branch
      %2973 = sbr.rel (0) target = $region85
    $region84: #{tpu_custom_call.1} parent=1 // pred_region
      %2974 = dma.done [#allocation15], 1024
    $region85: #{tpu_custom_call.1} parent=1 // pred_fallthru
      _
    %2975 = vsyncpa [#allocation6], 1
    %2976 = vsyncpa [#allocation9], 1
    %2977 = vsyncpa [#allocation12], 1
    %2978 = vsyncpa [#allocation7], 1
    %2979 = vsyncpa [#allocation15], 1

</llo_original>
